<compile_context>
chip_gen: v6e
topology: v6e:2x2x1
jax: 0.10.0
libtpu: 0.0.40
codegen_flags: <defaults>
</compile_context>

<pallas_src>
import numpy as np

import jax
import jax.numpy as jnp
from jax.experimental import pallas as pl
from jax.experimental.pallas import tpu as pltpu


# ----------------------------- static geometry -----------------------------
_H = _W = 32                       # input spatial
_C_IN, _C1, _C2 = 3, 6, 16         # channels
_K = 5                             # conv kernel size
_H1, _W1 = _H - _K + 1, _W - _K + 1          # 28, 28  (conv1 out)
_HP1, _WP1 = _H1 // 2, _W1 // 2              # 14, 14  (pool1 out)
_H2, _W2 = _HP1 - _K + 1, _WP1 - _K + 1      # 10, 10  (conv2 out)
_HP2, _WP2 = _H2 // 2, _W2 // 2              # 5, 5    (pool2 out)
_F1, _F2, _F3 = 120, 84, 10                  # fc sizes


# ------------------------------ fused kernel -------------------------------

def _convnet_kernel(x_ref, a1_ref, b1_ref, s1_ref, t1_ref,
                    a2_ref, b2_ref, s2_ref, t2_ref,
                    g1_ref, fb1_ref, w2_ref, fb2_ref, w3_ref, fb3_ref,
                    o_ref, p1_ref, p2_ref):
    """One sample per grid step; everything stays in VMEM."""
    f32 = jnp.float32

    def mm(a, b):
        return jnp.dot(a, b, preferred_element_type=f32)

    # ---- conv1 + bias + ReLU : (3, 32, 32) -> (28, 28*6); cols = (ow, co)
    c1 = jnp.zeros((_H1, _W1 * _C1), f32)
    for ci in range(_C_IN):
        for kh in range(_K):
            c1 = c1 + mm(x_ref[0, ci, kh:kh + _H1, :], a1_ref[ci, kh])
    c1 = jnp.maximum(c1 + b1_ref[...], 0.0)

    # ---- pool1 2x2 : (28, 168) -> (14, 84) via 0/1 selection matmuls + max
    r1 = jnp.maximum(mm(s1_ref[0], c1), mm(s1_ref[1], c1))            # (14, 168)
    p1_ref[...] = jnp.maximum(mm(r1, t1_ref[0]), mm(r1, t1_ref[1]))   # (14, 84)

    # ---- conv2 + bias + ReLU : (14, 84) -> (10, 10*16); cols = (ow, co)
    c2 = jnp.zeros((_H2, _W2 * _C2), f32)
    for kh in range(_K):
        c2 = c2 + mm(p1_ref[kh:kh + _H2, :], a2_ref[kh])
    c2 = jnp.maximum(c2 + b2_ref[...], 0.0)

    # ---- pool2 2x2 : (10, 160) -> (5, 80)
    r2 = jnp.maximum(mm(s2_ref[0], c2), mm(s2_ref[1], c2))            # (5, 160)
    p2_ref[...] = jnp.maximum(mm(r2, t2_ref[0]), mm(r2, t2_ref[1]))   # (5, 80)

    # ---- fc1 + ReLU : contract (h, w*c) with the permuted fc1 weight
    f1 = jnp.zeros((1, _F1), f32)
    for h in range(_HP2):
        f1 = f1 + mm(p2_ref[h:h + 1, :], g1_ref[h])                   # (1, 120)
    f1 = jnp.maximum(f1 + fb1_ref[...], 0.0)

    # ---- fc2 + ReLU, fc3
    f2 = jnp.maximum(mm(f1, w2_ref[...]) + fb2_ref[...], 0.0)         # (1, 84)
    o_ref[0] = (mm(f2, w3_ref[...]) + fb3_ref[...]).astype(o_ref.dtype)


# -------------------- one-time host-side weight repacking ------------------

def _conv1_toeplitz(w):
    """w: (C1, C_IN, K, K) -> (C_IN, K, W, W1*C1) slabs; input rows are raw
    NCHW image rows, output cols are (ow, co) with co fastest."""
    A = np.zeros((_C_IN, _K, _W, _W1 * _C1), np.float32)
    for ci in range(_C_IN):
        for kh in range(_K):
            for kw in range(_K):
                for ow in range(_W1):
                    A[ci, kh, ow + kw, ow * _C1:(ow + 1) * _C1] = w[:, ci, kh, kw]
    return A


def _conv2_toeplitz(w):
    """w: (C2, C1, K, K) -> (K, WP1*C1, W2*C2); input cols (w, ci) ci-fastest,
    output cols (ow, co) co-fastest."""
    A = np.zeros((_K, _WP1 * _C1, _W2 * _C2), np.float32)
    for kh in range(_K):
        for kw in range(_K):
            for ow in range(_W2):
                wi = ow + kw
                A[kh, wi * _C1:(wi + 1) * _C1, ow * _C2:(ow + 1) * _C2] = \
                    w[:, :, kh, kw].T           # (CI, CO)
    return A


def _row_pool_select(h):
    """(2, h//2, h) 0/1 matrices picking even / odd rows."""
    S = np.zeros((2, h // 2, h), np.float32)
    for i in range(h // 2):
        S[0, i, 2 * i] = 1.0
        S[1, i, 2 * i + 1] = 1.0
    return S


def _col_pool_select(w, c):
    """(2, w*c, (w//2)*c) 0/1 matrices picking even / odd width positions in a
    (w, c) c-fastest column layout (and keeping that layout on the output)."""
    T = np.zeros((2, w * c, (w // 2) * c), np.float32)
    for j in range(w // 2):
        for ch in range(c):
            T[0, (2 * j) * c + ch, j * c + ch] = 1.0
            T[1, (2 * j + 1) * c + ch, j * c + ch] = 1.0
    return T


def _fc1_permuted(fw1):
    """fw1: (120, 400) with torch (c, h, w) flatten -> (HP2, WP2*C2, 120) so
    fc1 = sum_h p2[h:h+1, :] @ G[h] on our (h, (w, c)) layout."""
    G = np.zeros((_HP2, _WP2 * _C2, _F1), np.float32)
    for h in range(_HP2):
        for w in range(_WP2):
            for c in range(_C2):
                G[h, w * _C2 + c, :] = fw1[:, c * (_HP2 * _WP2) + h * _WP2 + w]
    return G


def prepare_params(params):
    """Host-side, one-time repack of PyTorch-layout params into kernel operands."""
    (w1, b1, w2, b2, fw1, fb1, fw2, fb2, fw3, fb3) = [
        np.asarray(p, np.float32) for p in params]
    A1 = jnp.asarray(_conv1_toeplitz(w1))                       # (3, 5, 32, 168)
    b1r = jnp.asarray(np.tile(b1, _W1).reshape(1, _W1 * _C1))   # (1, 168)
    S1 = jnp.asarray(_row_pool_select(_H1))                     # (2, 14, 28)
    T1 = jnp.asarray(_col_pool_select(_W1, _C1))                # (2, 168, 84)
    A2 = jnp.asarray(_conv2_toeplitz(w2))                       # (5, 84, 160)
    b2r = jnp.asarray(np.tile(b2, _W2).reshape(1, _W2 * _C2))   # (1, 160)
    S2 = jnp.asarray(_row_pool_select(_H2))                     # (2, 5, 10)
    T2 = jnp.asarray(_col_pool_select(_W2, _C2))                # (2, 160, 80)
    G1 = jnp.asarray(_fc1_permuted(fw1))                        # (5, 80, 120)
    fb1r = jnp.asarray(fb1.reshape(1, _F1))
    W2p = jnp.asarray(np.ascontiguousarray(fw2.T))              # (120, 84)
    fb2r = jnp.asarray(fb2.reshape(1, _F2))
    W3p = jnp.asarray(np.ascontiguousarray(fw3.T))              # (84, 10)
    fb3r = jnp.asarray(fb3.reshape(1, _F3))
    return (A1, b1r, S1, T1, A2, b2r, S2, T2, G1, fb1r, W2p, fb2r, W3p, fb3r)


# ------------------------------ forward wrapper -----------------------------

def convnet_forward(x, prepped):
    """x: (N, 3, 32, 32) f32 NCHW -> (N, 10) f32.  Single fused pallas_call."""
    (A1, b1r, S1, T1, A2, b2r, S2, T2, G1, fb1r, W2p, fb2r, W3p, fb3r) = prepped
    N = x.shape[0]

    def full(a):
        return pl.BlockSpec(a.shape, lambda n, _nd=a.ndim: (0,) * _nd)

    out = pl.pallas_call(
        _convnet_kernel,
        out_shape=jax.ShapeDtypeStruct((N, 1, _F3), jnp.float32),
        grid=(N,),
        in_specs=[
            pl.BlockSpec((1, _C_IN, _H, _W), lambda n: (n, 0, 0, 0)),   # x
            full(A1), full(b1r), full(S1), full(T1),
            full(A2), full(b2r), full(S2), full(T2),
            full(G1), full(fb1r), full(W2p), full(fb2r),
            full(W3p), full(fb3r),
        ],
        out_specs=pl.BlockSpec((1, 1, _F3), lambda n: (n, 0, 0)),
        scratch_shapes=[pltpu.VMEM((_HP1, _WP1 * _C1), jnp.float32),    # p1
                        pltpu.VMEM((_HP2, _WP2 * _C2), jnp.float32)],   # p2
        compiler_params=pltpu.CompilerParams(
            dimension_semantics=("parallel",),
            vmem_limit_bytes=32 * 1024 * 1024,
        ),
    )(x, A1, b1r, S1, T1, A2, b2r, S2, T2, G1, fb1r, W2p, fb2r, W3p, fb3r)
    return out.reshape(N, _F3)


# ------------------------- pure-JAX reference (check) -----------------------

def _reference_forward(x, params):
    (w1, b1, w2, b2, fw1, fb1, fw2, fb2, fw3, fb3) = params

    def conv(y, w, b):
        y = jax.lax.conv_general_dilated(
            y, w, (1, 1), 'VALID', dimension_numbers=('NCHW', 'OIHW', 'NCHW'))
        return jax.nn.relu(y + b[None, :, None, None])

    def pool(y):
        n, c, h, wd = y.shape
        return jnp.max(y.reshape(n, c, h // 2, 2, wd // 2, 2), axis=(3, 5))

    y = pool(conv(x, w1, b1))
    y = pool(conv(y, w2, b2))
    y = y.reshape(y.shape[0], -1)                      # torch .view(-1, 400)
    y = jax.nn.relu(y @ fw1.T + fb1)
    y = jax.nn.relu(y @ fw2.T + fb2)
    return y @ fw3.T + fb3


# ------------------------------ params / main --------------------------------

def init_params(key):
    """Deterministic PyTorch-style uniform(-1/sqrt(fan_in), 1/sqrt(fan_in)) init."""
    ks = jax.random.split(key, 10)

    def u(k, shape, fan_in):
        bound = 1.0 / float(fan_in) ** 0.5
        return jax.random.uniform(k, shape, jnp.float32, -bound, bound)

    w1 = u(ks[0], (6, 3, 5, 5), 3 * 25);   b1 = u(ks[1], (6,), 3 * 25)
    w2 = u(ks[2], (16, 6, 5, 5), 6 * 25);  b2 = u(ks[3], (16,), 6 * 25)
    fw1 = u(ks[4], (120, 400), 400);       fb1 = u(ks[5], (120,), 400)
    fw2 = u(ks[6], (84, 120), 120);        fb2 = u(ks[7], (84,), 120)
    fw3 = u(ks[8], (10, 84), 84);          fb3 = u(ks[9], (10,), 84)
    return (w1, b1, w2, b2, fw1, fb1, fw2, fb2, fw3, fb3)


if __name__ == "__main__":
    key = jax.random.PRNGKey(0)
    kx, kp = jax.random.split(key)
    # The module's 16*5*5 flatten requires 3x32x32 inputs; batch kept small.
    x = jax.random.normal(kx, (2, 3, 32, 32), jnp.float32)
    params = init_params(kp)

    prepped = prepare_params(params)            # one-time host-side repack

    fwd = jax.jit(convnet_forward)
    out = jax.block_until_ready(fwd(x, prepped))
    assert out.shape == (2, 10) and out.dtype == jnp.float32

    ref = jax.block_until_ready(jax.jit(_reference_forward)(x, params))
    np.testing.assert_allclose(np.asarray(out), np.asarray(ref),
                               rtol=5e-2, atol=5e-2)
    print("KERNEL_OK")
</pallas_src>

<mosaic_0001>
module attributes {stable_mosaic.version = 11 : i64} {
  func.func @_convnet_kernel(%arg0: i32, %arg1: memref<1x3x32x32xf32, #tpu.memory_space<vmem>>, %arg2: memref<3x5x32x168xf32, #tpu.memory_space<vmem>>, %arg3: memref<1x168xf32, #tpu.memory_space<vmem>>, %arg4: memref<2x14x28xf32, #tpu.memory_space<vmem>>, %arg5: memref<2x168x84xf32, #tpu.memory_space<vmem>>, %arg6: memref<5x84x160xf32, #tpu.memory_space<vmem>>, %arg7: memref<1x160xf32, #tpu.memory_space<vmem>>, %arg8: memref<2x5x10xf32, #tpu.memory_space<vmem>>, %arg9: memref<2x160x80xf32, #tpu.memory_space<vmem>>, %arg10: memref<5x80x120xf32, #tpu.memory_space<vmem>>, %arg11: memref<1x120xf32, #tpu.memory_space<vmem>>, %arg12: memref<120x84xf32, #tpu.memory_space<vmem>>, %arg13: memref<1x84xf32, #tpu.memory_space<vmem>>, %arg14: memref<84x10xf32, #tpu.memory_space<vmem>>, %arg15: memref<1x10xf32, #tpu.memory_space<vmem>>, %arg16: memref<1x1x10xf32, #tpu.memory_space<vmem>>, %arg17: memref<14x84xf32, #tpu.memory_space<vmem>>, %arg18: memref<5x80xf32, #tpu.memory_space<vmem>>) attributes {dimension_semantics = [#tpu.dimension_semantics<parallel>], iteration_bounds = array<i64: 2>, scalar_prefetch = 0 : i64, scratch_operands = 2 : i64, tpu.core_type = #tpu.core_type<tc>, window_params = [{transform_indices = @transform_0, window_bounds = array<i64: 1, 3, 32, 32>}, {pipeline_mode = #tpu.pipeline_mode<synchronous>, transform_indices = @transform_1, window_bounds = array<i64: 3, 5, 32, 168>}, {pipeline_mode = #tpu.pipeline_mode<synchronous>, transform_indices = @transform_2, window_bounds = array<i64: 1, 168>}, {pipeline_mode = #tpu.pipeline_mode<synchronous>, transform_indices = @transform_3, window_bounds = array<i64: 2, 14, 28>}, {pipeline_mode = #tpu.pipeline_mode<synchronous>, transform_indices = @transform_4, window_bounds = array<i64: 2, 168, 84>}, {pipeline_mode = #tpu.pipeline_mode<synchronous>, transform_indices = @transform_5, window_bounds = array<i64: 5, 84, 160>}, {pipeline_mode = #tpu.pipeline_mode<synchronous>, transform_indices = @transform_6, window_bounds = array<i64: 1, 160>}, {pipeline_mode = #tpu.pipeline_mode<synchronous>, transform_indices = @transform_7, window_bounds = array<i64: 2, 5, 10>}, {pipeline_mode = #tpu.pipeline_mode<synchronous>, transform_indices = @transform_8, window_bounds = array<i64: 2, 160, 80>}, {pipeline_mode = #tpu.pipeline_mode<synchronous>, transform_indices = @transform_9, window_bounds = array<i64: 5, 80, 120>}, {pipeline_mode = #tpu.pipeline_mode<synchronous>, transform_indices = @transform_10, window_bounds = array<i64: 1, 120>}, {pipeline_mode = #tpu.pipeline_mode<synchronous>, transform_indices = @transform_11, window_bounds = array<i64: 120, 84>}, {pipeline_mode = #tpu.pipeline_mode<synchronous>, transform_indices = @transform_12, window_bounds = array<i64: 1, 84>}, {pipeline_mode = #tpu.pipeline_mode<synchronous>, transform_indices = @transform_13, window_bounds = array<i64: 84, 10>}, {pipeline_mode = #tpu.pipeline_mode<synchronous>, transform_indices = @transform_14, window_bounds = array<i64: 1, 10>}, {transform_indices = @transform_15, window_bounds = array<i64: 1, 1, 10>}]} {
    %cst = arith.constant 0.000000e+00 : f32
    %0 = vector.broadcast %cst : f32 to vector<28x168xf32>
    %c0 = arith.constant 0 : index
    %c0_0 = arith.constant 0 : index
    %c0_1 = arith.constant 0 : index
    %c0_2 = arith.constant 0 : index
    %1 = vector.load %arg1[%c0, %c0_0, %c0_1, %c0_2] : memref<1x3x32x32xf32, #tpu.memory_space<vmem>>, vector<1x1x28x32xf32>
    %2 = vector.shape_cast %1 : vector<1x1x28x32xf32> to vector<28x32xf32>
    %c0_3 = arith.constant 0 : index
    %c0_4 = arith.constant 0 : index
    %c0_5 = arith.constant 0 : index
    %c0_6 = arith.constant 0 : index
    %3 = vector.load %arg2[%c0_3, %c0_4, %c0_5, %c0_6] : memref<3x5x32x168xf32, #tpu.memory_space<vmem>>, vector<1x1x32x168xf32>
    %4 = vector.shape_cast %3 : vector<1x1x32x168xf32> to vector<32x168xf32>
    %cst_7 = arith.constant dense<0.000000e+00> : vector<28x168xf32>
    %5 = tpu.matmul %2, %4, %cst_7 {dimension_numbers = #tpu.dot_dimension_numbers<[1], [0], [0], [1], [0, 0, 1, 1], [], []>} : vector<28x32xf32>, vector<32x168xf32>, vector<28x168xf32> -> vector<28x168xf32>
    %6 = arith.addf %0, %5 : vector<28x168xf32>
    %c0_8 = arith.constant 0 : index
    %c0_9 = arith.constant 0 : index
    %c1 = arith.constant 1 : index
    %c0_10 = arith.constant 0 : index
    %7 = vector.load %arg1[%c0_8, %c0_9, %c1, %c0_10] : memref<1x3x32x32xf32, #tpu.memory_space<vmem>>, vector<1x1x28x32xf32>
    %8 = vector.shape_cast %7 : vector<1x1x28x32xf32> to vector<28x32xf32>
    %c0_11 = arith.constant 0 : index
    %c1_12 = arith.constant 1 : index
    %c0_13 = arith.constant 0 : index
    %c0_14 = arith.constant 0 : index
    %9 = vector.load %arg2[%c0_11, %c1_12, %c0_13, %c0_14] : memref<3x5x32x168xf32, #tpu.memory_space<vmem>>, vector<1x1x32x168xf32>
    %10 = vector.shape_cast %9 : vector<1x1x32x168xf32> to vector<32x168xf32>
    %cst_15 = arith.constant dense<0.000000e+00> : vector<28x168xf32>
    %11 = tpu.matmul %8, %10, %cst_15 {dimension_numbers = #tpu.dot_dimension_numbers<[1], [0], [0], [1], [0, 0, 1, 1], [], []>} : vector<28x32xf32>, vector<32x168xf32>, vector<28x168xf32> -> vector<28x168xf32>
    %12 = arith.addf %6, %11 : vector<28x168xf32>
    %c0_16 = arith.constant 0 : index
    %c0_17 = arith.constant 0 : index
    %c2 = arith.constant 2 : index
    %c0_18 = arith.constant 0 : index
    %13 = vector.load %arg1[%c0_16, %c0_17, %c2, %c0_18] : memref<1x3x32x32xf32, #tpu.memory_space<vmem>>, vector<1x1x28x32xf32>
    %14 = vector.shape_cast %13 : vector<1x1x28x32xf32> to vector<28x32xf32>
    %c0_19 = arith.constant 0 : index
    %c2_20 = arith.constant 2 : index
    %c0_21 = arith.constant 0 : index
    %c0_22 = arith.constant 0 : index
    %15 = vector.load %arg2[%c0_19, %c2_20, %c0_21, %c0_22] : memref<3x5x32x168xf32, #tpu.memory_space<vmem>>, vector<1x1x32x168xf32>
    %16 = vector.shape_cast %15 : vector<1x1x32x168xf32> to vector<32x168xf32>
    %cst_23 = arith.constant dense<0.000000e+00> : vector<28x168xf32>
    %17 = tpu.matmul %14, %16, %cst_23 {dimension_numbers = #tpu.dot_dimension_numbers<[1], [0], [0], [1], [0, 0, 1, 1], [], []>} : vector<28x32xf32>, vector<32x168xf32>, vector<28x168xf32> -> vector<28x168xf32>
    %18 = arith.addf %12, %17 : vector<28x168xf32>
    %c0_24 = arith.constant 0 : index
    %c0_25 = arith.constant 0 : index
    %c3 = arith.constant 3 : index
    %c0_26 = arith.constant 0 : index
    %19 = vector.load %arg1[%c0_24, %c0_25, %c3, %c0_26] : memref<1x3x32x32xf32, #tpu.memory_space<vmem>>, vector<1x1x28x32xf32>
    %20 = vector.shape_cast %19 : vector<1x1x28x32xf32> to vector<28x32xf32>
    %c0_27 = arith.constant 0 : index
    %c3_28 = arith.constant 3 : index
    %c0_29 = arith.constant 0 : index
    %c0_30 = arith.constant 0 : index
    %21 = vector.load %arg2[%c0_27, %c3_28, %c0_29, %c0_30] : memref<3x5x32x168xf32, #tpu.memory_space<vmem>>, vector<1x1x32x168xf32>
    %22 = vector.shape_cast %21 : vector<1x1x32x168xf32> to vector<32x168xf32>
    %cst_31 = arith.constant dense<0.000000e+00> : vector<28x168xf32>
    %23 = tpu.matmul %20, %22, %cst_31 {dimension_numbers = #tpu.dot_dimension_numbers<[1], [0], [0], [1], [0, 0, 1, 1], [], []>} : vector<28x32xf32>, vector<32x168xf32>, vector<28x168xf32> -> vector<28x168xf32>
    %24 = arith.addf %18, %23 : vector<28x168xf32>
    %c0_32 = arith.constant 0 : index
    %c0_33 = arith.constant 0 : index
    %c4 = arith.constant 4 : index
    %c0_34 = arith.constant 0 : index
    %25 = vector.load %arg1[%c0_32, %c0_33, %c4, %c0_34] : memref<1x3x32x32xf32, #tpu.memory_space<vmem>>, vector<1x1x28x32xf32>
    %26 = vector.shape_cast %25 : vector<1x1x28x32xf32> to vector<28x32xf32>
    %c0_35 = arith.constant 0 : index
    %c4_36 = arith.constant 4 : index
    %c0_37 = arith.constant 0 : index
    %c0_38 = arith.constant 0 : index
    %27 = vector.load %arg2[%c0_35, %c4_36, %c0_37, %c0_38] : memref<3x5x32x168xf32, #tpu.memory_space<vmem>>, vector<1x1x32x168xf32>
    %28 = vector.shape_cast %27 : vector<1x1x32x168xf32> to vector<32x168xf32>
    %cst_39 = arith.constant dense<0.000000e+00> : vector<28x168xf32>
    %29 = tpu.matmul %26, %28, %cst_39 {dimension_numbers = #tpu.dot_dimension_numbers<[1], [0], [0], [1], [0, 0, 1, 1], [], []>} : vector<28x32xf32>, vector<32x168xf32>, vector<28x168xf32> -> vector<28x168xf32>
    %30 = arith.addf %24, %29 : vector<28x168xf32>
    %c0_40 = arith.constant 0 : index
    %c1_41 = arith.constant 1 : index
    %c0_42 = arith.constant 0 : index
    %c0_43 = arith.constant 0 : index
    %31 = vector.load %arg1[%c0_40, %c1_41, %c0_42, %c0_43] : memref<1x3x32x32xf32, #tpu.memory_space<vmem>>, vector<1x1x28x32xf32>
    %32 = vector.shape_cast %31 : vector<1x1x28x32xf32> to vector<28x32xf32>
    %c1_44 = arith.constant 1 : index
    %c0_45 = arith.constant 0 : index
    %c0_46 = arith.constant 0 : index
    %c0_47 = arith.constant 0 : index
    %33 = vector.load %arg2[%c1_44, %c0_45, %c0_46, %c0_47] : memref<3x5x32x168xf32, #tpu.memory_space<vmem>>, vector<1x1x32x168xf32>
    %34 = vector.shape_cast %33 : vector<1x1x32x168xf32> to vector<32x168xf32>
    %cst_48 = arith.constant dense<0.000000e+00> : vector<28x168xf32>
    %35 = tpu.matmul %32, %34, %cst_48 {dimension_numbers = #tpu.dot_dimension_numbers<[1], [0], [0], [1], [0, 0, 1, 1], [], []>} : vector<28x32xf32>, vector<32x168xf32>, vector<28x168xf32> -> vector<28x168xf32>
    %36 = arith.addf %30, %35 : vector<28x168xf32>
    %c0_49 = arith.constant 0 : index
    %c1_50 = arith.constant 1 : index
    %c1_51 = arith.constant 1 : index
    %c0_52 = arith.constant 0 : index
    %37 = vector.load %arg1[%c0_49, %c1_50, %c1_51, %c0_52] : memref<1x3x32x32xf32, #tpu.memory_space<vmem>>, vector<1x1x28x32xf32>
    %38 = vector.shape_cast %37 : vector<1x1x28x32xf32> to vector<28x32xf32>
    %c1_53 = arith.constant 1 : index
    %c1_54 = arith.constant 1 : index
    %c0_55 = arith.constant 0 : index
    %c0_56 = arith.constant 0 : index
    %39 = vector.load %arg2[%c1_53, %c1_54, %c0_55, %c0_56] : memref<3x5x32x168xf32, #tpu.memory_space<vmem>>, vector<1x1x32x168xf32>
    %40 = vector.shape_cast %39 : vector<1x1x32x168xf32> to vector<32x168xf32>
    %cst_57 = arith.constant dense<0.000000e+00> : vector<28x168xf32>
    %41 = tpu.matmul %38, %40, %cst_57 {dimension_numbers = #tpu.dot_dimension_numbers<[1], [0], [0], [1], [0, 0, 1, 1], [], []>} : vector<28x32xf32>, vector<32x168xf32>, vector<28x168xf32> -> vector<28x168xf32>
    %42 = arith.addf %36, %41 : vector<28x168xf32>
    %c0_58 = arith.constant 0 : index
    %c1_59 = arith.constant 1 : index
    %c2_60 = arith.constant 2 : index
    %c0_61 = arith.constant 0 : index
    %43 = vector.load %arg1[%c0_58, %c1_59, %c2_60, %c0_61] : memref<1x3x32x32xf32, #tpu.memory_space<vmem>>, vector<1x1x28x32xf32>
    %44 = vector.shape_cast %43 : vector<1x1x28x32xf32> to vector<28x32xf32>
    %c1_62 = arith.constant 1 : index
    %c2_63 = arith.constant 2 : index
    %c0_64 = arith.constant 0 : index
    %c0_65 = arith.constant 0 : index
    %45 = vector.load %arg2[%c1_62, %c2_63, %c0_64, %c0_65] : memref<3x5x32x168xf32, #tpu.memory_space<vmem>>, vector<1x1x32x168xf32>
    %46 = vector.shape_cast %45 : vector<1x1x32x168xf32> to vector<32x168xf32>
    %cst_66 = arith.constant dense<0.000000e+00> : vector<28x168xf32>
    %47 = tpu.matmul %44, %46, %cst_66 {dimension_numbers = #tpu.dot_dimension_numbers<[1], [0], [0], [1], [0, 0, 1, 1], [], []>} : vector<28x32xf32>, vector<32x168xf32>, vector<28x168xf32> -> vector<28x168xf32>
    %48 = arith.addf %42, %47 : vector<28x168xf32>
    %c0_67 = arith.constant 0 : index
    %c1_68 = arith.constant 1 : index
    %c3_69 = arith.constant 3 : index
    %c0_70 = arith.constant 0 : index
    %49 = vector.load %arg1[%c0_67, %c1_68, %c3_69, %c0_70] : memref<1x3x32x32xf32, #tpu.memory_space<vmem>>, vector<1x1x28x32xf32>
    %50 = vector.shape_cast %49 : vector<1x1x28x32xf32> to vector<28x32xf32>
    %c1_71 = arith.constant 1 : index
    %c3_72 = arith.constant 3 : index
    %c0_73 = arith.constant 0 : index
    %c0_74 = arith.constant 0 : index
    %51 = vector.load %arg2[%c1_71, %c3_72, %c0_73, %c0_74] : memref<3x5x32x168xf32, #tpu.memory_space<vmem>>, vector<1x1x32x168xf32>
    %52 = vector.shape_cast %51 : vector<1x1x32x168xf32> to vector<32x168xf32>
    %cst_75 = arith.constant dense<0.000000e+00> : vector<28x168xf32>
    %53 = tpu.matmul %50, %52, %cst_75 {dimension_numbers = #tpu.dot_dimension_numbers<[1], [0], [0], [1], [0, 0, 1, 1], [], []>} : vector<28x32xf32>, vector<32x168xf32>, vector<28x168xf32> -> vector<28x168xf32>
    %54 = arith.addf %48, %53 : vector<28x168xf32>
    %c0_76 = arith.constant 0 : index
    %c1_77 = arith.constant 1 : index
    %c4_78 = arith.constant 4 : index
    %c0_79 = arith.constant 0 : index
    %55 = vector.load %arg1[%c0_76, %c1_77, %c4_78, %c0_79] : memref<1x3x32x32xf32, #tpu.memory_space<vmem>>, vector<1x1x28x32xf32>
    %56 = vector.shape_cast %55 : vector<1x1x28x32xf32> to vector<28x32xf32>
    %c1_80 = arith.constant 1 : index
    %c4_81 = arith.constant 4 : index
    %c0_82 = arith.constant 0 : index
    %c0_83 = arith.constant 0 : index
    %57 = vector.load %arg2[%c1_80, %c4_81, %c0_82, %c0_83] : memref<3x5x32x168xf32, #tpu.memory_space<vmem>>, vector<1x1x32x168xf32>
    %58 = vector.shape_cast %57 : vector<1x1x32x168xf32> to vector<32x168xf32>
    %cst_84 = arith.constant dense<0.000000e+00> : vector<28x168xf32>
    %59 = tpu.matmul %56, %58, %cst_84 {dimension_numbers = #tpu.dot_dimension_numbers<[1], [0], [0], [1], [0, 0, 1, 1], [], []>} : vector<28x32xf32>, vector<32x168xf32>, vector<28x168xf32> -> vector<28x168xf32>
    %60 = arith.addf %54, %59 : vector<28x168xf32>
    %c0_85 = arith.constant 0 : index
    %c2_86 = arith.constant 2 : index
    %c0_87 = arith.constant 0 : index
    %c0_88 = arith.constant 0 : index
    %61 = vector.load %arg1[%c0_85, %c2_86, %c0_87, %c0_88] : memref<1x3x32x32xf32, #tpu.memory_space<vmem>>, vector<1x1x28x32xf32>
    %62 = vector.shape_cast %61 : vector<1x1x28x32xf32> to vector<28x32xf32>
    %c2_89 = arith.constant 2 : index
    %c0_90 = arith.constant 0 : index
    %c0_91 = arith.constant 0 : index
    %c0_92 = arith.constant 0 : index
    %63 = vector.load %arg2[%c2_89, %c0_90, %c0_91, %c0_92] : memref<3x5x32x168xf32, #tpu.memory_space<vmem>>, vector<1x1x32x168xf32>
    %64 = vector.shape_cast %63 : vector<1x1x32x168xf32> to vector<32x168xf32>
    %cst_93 = arith.constant dense<0.000000e+00> : vector<28x168xf32>
    %65 = tpu.matmul %62, %64, %cst_93 {dimension_numbers = #tpu.dot_dimension_numbers<[1], [0], [0], [1], [0, 0, 1, 1], [], []>} : vector<28x32xf32>, vector<32x168xf32>, vector<28x168xf32> -> vector<28x168xf32>
    %66 = arith.addf %60, %65 : vector<28x168xf32>
    %c0_94 = arith.constant 0 : index
    %c2_95 = arith.constant 2 : index
    %c1_96 = arith.constant 1 : index
    %c0_97 = arith.constant 0 : index
    %67 = vector.load %arg1[%c0_94, %c2_95, %c1_96, %c0_97] : memref<1x3x32x32xf32, #tpu.memory_space<vmem>>, vector<1x1x28x32xf32>
    %68 = vector.shape_cast %67 : vector<1x1x28x32xf32> to vector<28x32xf32>
    %c2_98 = arith.constant 2 : index
    %c1_99 = arith.constant 1 : index
    %c0_100 = arith.constant 0 : index
    %c0_101 = arith.constant 0 : index
    %69 = vector.load %arg2[%c2_98, %c1_99, %c0_100, %c0_101] : memref<3x5x32x168xf32, #tpu.memory_space<vmem>>, vector<1x1x32x168xf32>
    %70 = vector.shape_cast %69 : vector<1x1x32x168xf32> to vector<32x168xf32>
    %cst_102 = arith.constant dense<0.000000e+00> : vector<28x168xf32>
    %71 = tpu.matmul %68, %70, %cst_102 {dimension_numbers = #tpu.dot_dimension_numbers<[1], [0], [0], [1], [0, 0, 1, 1], [], []>} : vector<28x32xf32>, vector<32x168xf32>, vector<28x168xf32> -> vector<28x168xf32>
    %72 = arith.addf %66, %71 : vector<28x168xf32>
    %c0_103 = arith.constant 0 : index
    %c2_104 = arith.constant 2 : index
    %c2_105 = arith.constant 2 : index
    %c0_106 = arith.constant 0 : index
    %73 = vector.load %arg1[%c0_103, %c2_104, %c2_105, %c0_106] : memref<1x3x32x32xf32, #tpu.memory_space<vmem>>, vector<1x1x28x32xf32>
    %74 = vector.shape_cast %73 : vector<1x1x28x32xf32> to vector<28x32xf32>
    %c2_107 = arith.constant 2 : index
    %c2_108 = arith.constant 2 : index
    %c0_109 = arith.constant 0 : index
    %c0_110 = arith.constant 0 : index
    %75 = vector.load %arg2[%c2_107, %c2_108, %c0_109, %c0_110] : memref<3x5x32x168xf32, #tpu.memory_space<vmem>>, vector<1x1x32x168xf32>
    %76 = vector.shape_cast %75 : vector<1x1x32x168xf32> to vector<32x168xf32>
    %cst_111 = arith.constant dense<0.000000e+00> : vector<28x168xf32>
    %77 = tpu.matmul %74, %76, %cst_111 {dimension_numbers = #tpu.dot_dimension_numbers<[1], [0], [0], [1], [0, 0, 1, 1], [], []>} : vector<28x32xf32>, vector<32x168xf32>, vector<28x168xf32> -> vector<28x168xf32>
    %78 = arith.addf %72, %77 : vector<28x168xf32>
    %c0_112 = arith.constant 0 : index
    %c2_113 = arith.constant 2 : index
    %c3_114 = arith.constant 3 : index
    %c0_115 = arith.constant 0 : index
    %79 = vector.load %arg1[%c0_112, %c2_113, %c3_114, %c0_115] : memref<1x3x32x32xf32, #tpu.memory_space<vmem>>, vector<1x1x28x32xf32>
    %80 = vector.shape_cast %79 : vector<1x1x28x32xf32> to vector<28x32xf32>
    %c2_116 = arith.constant 2 : index
    %c3_117 = arith.constant 3 : index
    %c0_118 = arith.constant 0 : index
    %c0_119 = arith.constant 0 : index
    %81 = vector.load %arg2[%c2_116, %c3_117, %c0_118, %c0_119] : memref<3x5x32x168xf32, #tpu.memory_space<vmem>>, vector<1x1x32x168xf32>
    %82 = vector.shape_cast %81 : vector<1x1x32x168xf32> to vector<32x168xf32>
    %cst_120 = arith.constant dense<0.000000e+00> : vector<28x168xf32>
    %83 = tpu.matmul %80, %82, %cst_120 {dimension_numbers = #tpu.dot_dimension_numbers<[1], [0], [0], [1], [0, 0, 1, 1], [], []>} : vector<28x32xf32>, vector<32x168xf32>, vector<28x168xf32> -> vector<28x168xf32>
    %84 = arith.addf %78, %83 : vector<28x168xf32>
    %c0_121 = arith.constant 0 : index
    %c2_122 = arith.constant 2 : index
    %c4_123 = arith.constant 4 : index
    %c0_124 = arith.constant 0 : index
    %85 = vector.load %arg1[%c0_121, %c2_122, %c4_123, %c0_124] : memref<1x3x32x32xf32, #tpu.memory_space<vmem>>, vector<1x1x28x32xf32>
    %86 = vector.shape_cast %85 : vector<1x1x28x32xf32> to vector<28x32xf32>
    %c2_125 = arith.constant 2 : index
    %c4_126 = arith.constant 4 : index
    %c0_127 = arith.constant 0 : index
    %c0_128 = arith.constant 0 : index
    %87 = vector.load %arg2[%c2_125, %c4_126, %c0_127, %c0_128] : memref<3x5x32x168xf32, #tpu.memory_space<vmem>>, vector<1x1x32x168xf32>
    %88 = vector.shape_cast %87 : vector<1x1x32x168xf32> to vector<32x168xf32>
    %cst_129 = arith.constant dense<0.000000e+00> : vector<28x168xf32>
    %89 = tpu.matmul %86, %88, %cst_129 {dimension_numbers = #tpu.dot_dimension_numbers<[1], [0], [0], [1], [0, 0, 1, 1], [], []>} : vector<28x32xf32>, vector<32x168xf32>, vector<28x168xf32> -> vector<28x168xf32>
    %90 = arith.addf %84, %89 : vector<28x168xf32>
    %c0_130 = arith.constant 0 : index
    %c0_131 = arith.constant 0 : index
    %91 = vector.load %arg3[%c0_130, %c0_131] : memref<1x168xf32, #tpu.memory_space<vmem>>, vector<1x168xf32>
    %92 = vector.broadcast %91 : vector<1x168xf32> to vector<28x168xf32>
    %93 = arith.addf %90, %92 : vector<28x168xf32>
    %cst_132 = arith.constant 0.000000e+00 : f32
    %94 = vector.broadcast %cst_132 : f32 to vector<28x168xf32>
    %95 = arith.maximumf %93, %94 : vector<28x168xf32>
    %c0_133 = arith.constant 0 : index
    %c0_134 = arith.constant 0 : index
    %c0_135 = arith.constant 0 : index
    %96 = vector.load %arg4[%c0_133, %c0_134, %c0_135] : memref<2x14x28xf32, #tpu.memory_space<vmem>>, vector<1x14x28xf32>
    %97 = vector.shape_cast %96 : vector<1x14x28xf32> to vector<14x28xf32>
    %cst_136 = arith.constant dense<0.000000e+00> : vector<14x168xf32>
    %98 = tpu.matmul %97, %95, %cst_136 {dimension_numbers = #tpu.dot_dimension_numbers<[1], [0], [0], [1], [0, 0, 1, 1], [], []>} : vector<14x28xf32>, vector<28x168xf32>, vector<14x168xf32> -> vector<14x168xf32>
    %c1_137 = arith.constant 1 : index
    %c0_138 = arith.constant 0 : index
    %c0_139 = arith.constant 0 : index
    %99 = vector.load %arg4[%c1_137, %c0_138, %c0_139] : memref<2x14x28xf32, #tpu.memory_space<vmem>>, vector<1x14x28xf32>
    %100 = vector.shape_cast %99 : vector<1x14x28xf32> to vector<14x28xf32>
    %cst_140 = arith.constant dense<0.000000e+00> : vector<14x168xf32>
    %101 = tpu.matmul %100, %95, %cst_140 {dimension_numbers = #tpu.dot_dimension_numbers<[1], [0], [0], [1], [0, 0, 1, 1], [], []>} : vector<14x28xf32>, vector<28x168xf32>, vector<14x168xf32> -> vector<14x168xf32>
    %102 = arith.maximumf %98, %101 : vector<14x168xf32>
    %c0_141 = arith.constant 0 : index
    %c0_142 = arith.constant 0 : index
    %c0_143 = arith.constant 0 : index
    %103 = vector.load %arg5[%c0_141, %c0_142, %c0_143] : memref<2x168x84xf32, #tpu.memory_space<vmem>>, vector<1x168x84xf32>
    %104 = vector.shape_cast %103 : vector<1x168x84xf32> to vector<168x84xf32>
    %cst_144 = arith.constant dense<0.000000e+00> : vector<14x84xf32>
    %105 = tpu.matmul %102, %104, %cst_144 {dimension_numbers = #tpu.dot_dimension_numbers<[1], [0], [0], [1], [0, 0, 1, 1], [], []>} : vector<14x168xf32>, vector<168x84xf32>, vector<14x84xf32> -> vector<14x84xf32>
    %c1_145 = arith.constant 1 : index
    %c0_146 = arith.constant 0 : index
    %c0_147 = arith.constant 0 : index
    %106 = vector.load %arg5[%c1_145, %c0_146, %c0_147] : memref<2x168x84xf32, #tpu.memory_space<vmem>>, vector<1x168x84xf32>
    %107 = vector.shape_cast %106 : vector<1x168x84xf32> to vector<168x84xf32>
    %cst_148 = arith.constant dense<0.000000e+00> : vector<14x84xf32>
    %108 = tpu.matmul %102, %107, %cst_148 {dimension_numbers = #tpu.dot_dimension_numbers<[1], [0], [0], [1], [0, 0, 1, 1], [], []>} : vector<14x168xf32>, vector<168x84xf32>, vector<14x84xf32> -> vector<14x84xf32>
    %109 = arith.maximumf %105, %108 : vector<14x84xf32>
    %c0_149 = arith.constant 0 : index
    %c0_150 = arith.constant 0 : index
    %110 = vector.load %arg17[%c0_149, %c0_150] : memref<14x84xf32, #tpu.memory_space<vmem>>, vector<14x84xf32>
    tpu.vector_store %arg17[%c0_149, %c0_150], %109 {strides = array<i32>} : memref<14x84xf32, #tpu.memory_space<vmem>>, vector<14x84xf32>,
    %cst_151 = arith.constant 0.000000e+00 : f32
    %111 = vector.broadcast %cst_151 : f32 to vector<10x160xf32>
    %c0_152 = arith.constant 0 : index
    %c0_153 = arith.constant 0 : index
    %112 = vector.load %arg17[%c0_152, %c0_153] : memref<14x84xf32, #tpu.memory_space<vmem>>, vector<10x84xf32>
    %c0_154 = arith.constant 0 : index
    %c0_155 = arith.constant 0 : index
    %c0_156 = arith.constant 0 : index
    %113 = vector.load %arg6[%c0_154, %c0_155, %c0_156] : memref<5x84x160xf32, #tpu.memory_space<vmem>>, vector<1x84x160xf32>
    %114 = vector.shape_cast %113 : vector<1x84x160xf32> to vector<84x160xf32>
    %cst_157 = arith.constant dense<0.000000e+00> : vector<10x160xf32>
    %115 = tpu.matmul %112, %114, %cst_157 {dimension_numbers = #tpu.dot_dimension_numbers<[1], [0], [0], [1], [0, 0, 1, 1], [], []>} : vector<10x84xf32>, vector<84x160xf32>, vector<10x160xf32> -> vector<10x160xf32>
    %116 = arith.addf %111, %115 : vector<10x160xf32>
    %c1_158 = arith.constant 1 : index
    %c0_159 = arith.constant 0 : index
    %117 = vector.load %arg17[%c1_158, %c0_159] : memref<14x84xf32, #tpu.memory_space<vmem>>, vector<10x84xf32>
    %c1_160 = arith.constant 1 : index
    %c0_161 = arith.constant 0 : index
    %c0_162 = arith.constant 0 : index
    %118 = vector.load %arg6[%c1_160, %c0_161, %c0_162] : memref<5x84x160xf32, #tpu.memory_space<vmem>>, vector<1x84x160xf32>
    %119 = vector.shape_cast %118 : vector<1x84x160xf32> to vector<84x160xf32>
    %cst_163 = arith.constant dense<0.000000e+00> : vector<10x160xf32>
    %120 = tpu.matmul %117, %119, %cst_163 {dimension_numbers = #tpu.dot_dimension_numbers<[1], [0], [0], [1], [0, 0, 1, 1], [], []>} : vector<10x84xf32>, vector<84x160xf32>, vector<10x160xf32> -> vector<10x160xf32>
    %121 = arith.addf %116, %120 : vector<10x160xf32>
    %c2_164 = arith.constant 2 : index
    %c0_165 = arith.constant 0 : index
    %122 = vector.load %arg17[%c2_164, %c0_165] : memref<14x84xf32, #tpu.memory_space<vmem>>, vector<10x84xf32>
    %c2_166 = arith.constant 2 : index
    %c0_167 = arith.constant 0 : index
    %c0_168 = arith.constant 0 : index
    %123 = vector.load %arg6[%c2_166, %c0_167, %c0_168] : memref<5x84x160xf32, #tpu.memory_space<vmem>>, vector<1x84x160xf32>
    %124 = vector.shape_cast %123 : vector<1x84x160xf32> to vector<84x160xf32>
    %cst_169 = arith.constant dense<0.000000e+00> : vector<10x160xf32>
    %125 = tpu.matmul %122, %124, %cst_169 {dimension_numbers = #tpu.dot_dimension_numbers<[1], [0], [0], [1], [0, 0, 1, 1], [], []>} : vector<10x84xf32>, vector<84x160xf32>, vector<10x160xf32> -> vector<10x160xf32>
    %126 = arith.addf %121, %125 : vector<10x160xf32>
    %c3_170 = arith.constant 3 : index
    %c0_171 = arith.constant 0 : index
    %127 = vector.load %arg17[%c3_170, %c0_171] : memref<14x84xf32, #tpu.memory_space<vmem>>, vector<10x84xf32>
    %c3_172 = arith.constant 3 : index
    %c0_173 = arith.constant 0 : index
    %c0_174 = arith.constant 0 : index
    %128 = vector.load %arg6[%c3_172, %c0_173, %c0_174] : memref<5x84x160xf32, #tpu.memory_space<vmem>>, vector<1x84x160xf32>
    %129 = vector.shape_cast %128 : vector<1x84x160xf32> to vector<84x160xf32>
    %cst_175 = arith.constant dense<0.000000e+00> : vector<10x160xf32>
    %130 = tpu.matmul %127, %129, %cst_175 {dimension_numbers = #tpu.dot_dimension_numbers<[1], [0], [0], [1], [0, 0, 1, 1], [], []>} : vector<10x84xf32>, vector<84x160xf32>, vector<10x160xf32> -> vector<10x160xf32>
    %131 = arith.addf %126, %130 : vector<10x160xf32>
    %c4_176 = arith.constant 4 : index
    %c0_177 = arith.constant 0 : index
    %132 = vector.load %arg17[%c4_176, %c0_177] : memref<14x84xf32, #tpu.memory_space<vmem>>, vector<10x84xf32>
    %c4_178 = arith.constant 4 : index
    %c0_179 = arith.constant 0 : index
    %c0_180 = arith.constant 0 : index
    %133 = vector.load %arg6[%c4_178, %c0_179, %c0_180] : memref<5x84x160xf32, #tpu.memory_space<vmem>>, vector<1x84x160xf32>
    %134 = vector.shape_cast %133 : vector<1x84x160xf32> to vector<84x160xf32>
    %cst_181 = arith.constant dense<0.000000e+00> : vector<10x160xf32>
    %135 = tpu.matmul %132, %134, %cst_181 {dimension_numbers = #tpu.dot_dimension_numbers<[1], [0], [0], [1], [0, 0, 1, 1], [], []>} : vector<10x84xf32>, vector<84x160xf32>, vector<10x160xf32> -> vector<10x160xf32>
    %136 = arith.addf %131, %135 : vector<10x160xf32>
    %c0_182 = arith.constant 0 : index
    %c0_183 = arith.constant 0 : index
    %137 = vector.load %arg7[%c0_182, %c0_183] : memref<1x160xf32, #tpu.memory_space<vmem>>, vector<1x160xf32>
    %138 = vector.broadcast %137 : vector<1x160xf32> to vector<10x160xf32>
    %139 = arith.addf %136, %138 : vector<10x160xf32>
    %cst_184 = arith.constant 0.000000e+00 : f32
    %140 = vector.broadcast %cst_184 : f32 to vector<10x160xf32>
    %141 = arith.maximumf %139, %140 : vector<10x160xf32>
    %c0_185 = arith.constant 0 : index
    %c0_186 = arith.constant 0 : index
    %c0_187 = arith.constant 0 : index
    %142 = vector.load %arg8[%c0_185, %c0_186, %c0_187] : memref<2x5x10xf32, #tpu.memory_space<vmem>>, vector<1x5x10xf32>
    %143 = vector.shape_cast %142 : vector<1x5x10xf32> to vector<5x10xf32>
    %cst_188 = arith.constant dense<0.000000e+00> : vector<5x160xf32>
    %144 = tpu.matmul %143, %141, %cst_188 {dimension_numbers = #tpu.dot_dimension_numbers<[1], [0], [0], [1], [0, 0, 1, 1], [], []>} : vector<5x10xf32>, vector<10x160xf32>, vector<5x160xf32> -> vector<5x160xf32>
    %c1_189 = arith.constant 1 : index
    %c0_190 = arith.constant 0 : index
    %c0_191 = arith.constant 0 : index
    %145 = vector.load %arg8[%c1_189, %c0_190, %c0_191] : memref<2x5x10xf32, #tpu.memory_space<vmem>>, vector<1x5x10xf32>
    %146 = vector.shape_cast %145 : vector<1x5x10xf32> to vector<5x10xf32>
    %cst_192 = arith.constant dense<0.000000e+00> : vector<5x160xf32>
    %147 = tpu.matmul %146, %141, %cst_192 {dimension_numbers = #tpu.dot_dimension_numbers<[1], [0], [0], [1], [0, 0, 1, 1], [], []>} : vector<5x10xf32>, vector<10x160xf32>, vector<5x160xf32> -> vector<5x160xf32>
    %148 = arith.maximumf %144, %147 : vector<5x160xf32>
    %c0_193 = arith.constant 0 : index
    %c0_194 = arith.constant 0 : index
    %c0_195 = arith.constant 0 : index
    %149 = vector.load %arg9[%c0_193, %c0_194, %c0_195] : memref<2x160x80xf32, #tpu.memory_space<vmem>>, vector<1x160x80xf32>
    %150 = vector.shape_cast %149 : vector<1x160x80xf32> to vector<160x80xf32>
    %cst_196 = arith.constant dense<0.000000e+00> : vector<5x80xf32>
    %151 = tpu.matmul %148, %150, %cst_196 {dimension_numbers = #tpu.dot_dimension_numbers<[1], [0], [0], [1], [0, 0, 1, 1], [], []>} : vector<5x160xf32>, vector<160x80xf32>, vector<5x80xf32> -> vector<5x80xf32>
    %c1_197 = arith.constant 1 : index
    %c0_198 = arith.constant 0 : index
    %c0_199 = arith.constant 0 : index
    %152 = vector.load %arg9[%c1_197, %c0_198, %c0_199] : memref<2x160x80xf32, #tpu.memory_space<vmem>>, vector<1x160x80xf32>
    %153 = vector.shape_cast %152 : vector<1x160x80xf32> to vector<160x80xf32>
    %cst_200 = arith.constant dense<0.000000e+00> : vector<5x80xf32>
    %154 = tpu.matmul %148, %153, %cst_200 {dimension_numbers = #tpu.dot_dimension_numbers<[1], [0], [0], [1], [0, 0, 1, 1], [], []>} : vector<5x160xf32>, vector<160x80xf32>, vector<5x80xf32> -> vector<5x80xf32>
    %155 = arith.maximumf %151, %154 : vector<5x80xf32>
    %c0_201 = arith.constant 0 : index
    %c0_202 = arith.constant 0 : index
    %156 = vector.load %arg18[%c0_201, %c0_202] : memref<5x80xf32, #tpu.memory_space<vmem>>, vector<5x80xf32>
    tpu.vector_store %arg18[%c0_201, %c0_202], %155 {strides = array<i32>} : memref<5x80xf32, #tpu.memory_space<vmem>>, vector<5x80xf32>,
    %cst_203 = arith.constant 0.000000e+00 : f32
    %157 = vector.broadcast %cst_203 : f32 to vector<1x120xf32>
    %c0_204 = arith.constant 0 : index
    %c0_205 = arith.constant 0 : index
    %158 = vector.load %arg18[%c0_204, %c0_205] : memref<5x80xf32, #tpu.memory_space<vmem>>, vector<1x80xf32>
    %c0_206 = arith.constant 0 : index
    %c0_207 = arith.constant 0 : index
    %c0_208 = arith.constant 0 : index
    %159 = vector.load %arg10[%c0_206, %c0_207, %c0_208] : memref<5x80x120xf32, #tpu.memory_space<vmem>>, vector<1x80x120xf32>
    %160 = vector.shape_cast %159 : vector<1x80x120xf32> to vector<80x120xf32>
    %cst_209 = arith.constant dense<0.000000e+00> : vector<1x120xf32>
    %161 = tpu.matmul %158, %160, %cst_209 {dimension_numbers = #tpu.dot_dimension_numbers<[1], [0], [0], [1], [0, 0, 1, 1], [], []>} : vector<1x80xf32>, vector<80x120xf32>, vector<1x120xf32> -> vector<1x120xf32>
    %162 = arith.addf %157, %161 : vector<1x120xf32>
    %c1_210 = arith.constant 1 : index
    %c0_211 = arith.constant 0 : index
    %163 = vector.load %arg18[%c1_210, %c0_211] : memref<5x80xf32, #tpu.memory_space<vmem>>, vector<1x80xf32>
    %c1_212 = arith.constant 1 : index
    %c0_213 = arith.constant 0 : index
    %c0_214 = arith.constant 0 : index
    %164 = vector.load %arg10[%c1_212, %c0_213, %c0_214] : memref<5x80x120xf32, #tpu.memory_space<vmem>>, vector<1x80x120xf32>
    %165 = vector.shape_cast %164 : vector<1x80x120xf32> to vector<80x120xf32>
    %cst_215 = arith.constant dense<0.000000e+00> : vector<1x120xf32>
    %166 = tpu.matmul %163, %165, %cst_215 {dimension_numbers = #tpu.dot_dimension_numbers<[1], [0], [0], [1], [0, 0, 1, 1], [], []>} : vector<1x80xf32>, vector<80x120xf32>, vector<1x120xf32> -> vector<1x120xf32>
    %167 = arith.addf %162, %166 : vector<1x120xf32>
    %c2_216 = arith.constant 2 : index
    %c0_217 = arith.constant 0 : index
    %168 = vector.load %arg18[%c2_216, %c0_217] : memref<5x80xf32, #tpu.memory_space<vmem>>, vector<1x80xf32>
    %c2_218 = arith.constant 2 : index
    %c0_219 = arith.constant 0 : index
    %c0_220 = arith.constant 0 : index
    %169 = vector.load %arg10[%c2_218, %c0_219, %c0_220] : memref<5x80x120xf32, #tpu.memory_space<vmem>>, vector<1x80x120xf32>
    %170 = vector.shape_cast %169 : vector<1x80x120xf32> to vector<80x120xf32>
    %cst_221 = arith.constant dense<0.000000e+00> : vector<1x120xf32>
    %171 = tpu.matmul %168, %170, %cst_221 {dimension_numbers = #tpu.dot_dimension_numbers<[1], [0], [0], [1], [0, 0, 1, 1], [], []>} : vector<1x80xf32>, vector<80x120xf32>, vector<1x120xf32> -> vector<1x120xf32>
    %172 = arith.addf %167, %171 : vector<1x120xf32>
    %c3_222 = arith.constant 3 : index
    %c0_223 = arith.constant 0 : index
    %173 = vector.load %arg18[%c3_222, %c0_223] : memref<5x80xf32, #tpu.memory_space<vmem>>, vector<1x80xf32>
    %c3_224 = arith.constant 3 : index
    %c0_225 = arith.constant 0 : index
    %c0_226 = arith.constant 0 : index
    %174 = vector.load %arg10[%c3_224, %c0_225, %c0_226] : memref<5x80x120xf32, #tpu.memory_space<vmem>>, vector<1x80x120xf32>
    %175 = vector.shape_cast %174 : vector<1x80x120xf32> to vector<80x120xf32>
    %cst_227 = arith.constant dense<0.000000e+00> : vector<1x120xf32>
    %176 = tpu.matmul %173, %175, %cst_227 {dimension_numbers = #tpu.dot_dimension_numbers<[1], [0], [0], [1], [0, 0, 1, 1], [], []>} : vector<1x80xf32>, vector<80x120xf32>, vector<1x120xf32> -> vector<1x120xf32>
    %177 = arith.addf %172, %176 : vector<1x120xf32>
    %c4_228 = arith.constant 4 : index
    %c0_229 = arith.constant 0 : index
    %178 = vector.load %arg18[%c4_228, %c0_229] : memref<5x80xf32, #tpu.memory_space<vmem>>, vector<1x80xf32>
    %c4_230 = arith.constant 4 : index
    %c0_231 = arith.constant 0 : index
    %c0_232 = arith.constant 0 : index
    %179 = vector.load %arg10[%c4_230, %c0_231, %c0_232] : memref<5x80x120xf32, #tpu.memory_space<vmem>>, vector<1x80x120xf32>
    %180 = vector.shape_cast %179 : vector<1x80x120xf32> to vector<80x120xf32>
    %cst_233 = arith.constant dense<0.000000e+00> : vector<1x120xf32>
    %181 = tpu.matmul %178, %180, %cst_233 {dimension_numbers = #tpu.dot_dimension_numbers<[1], [0], [0], [1], [0, 0, 1, 1], [], []>} : vector<1x80xf32>, vector<80x120xf32>, vector<1x120xf32> -> vector<1x120xf32>
    %182 = arith.addf %177, %181 : vector<1x120xf32>
    %c0_234 = arith.constant 0 : index
    %c0_235 = arith.constant 0 : index
    %183 = vector.load %arg11[%c0_234, %c0_235] : memref<1x120xf32, #tpu.memory_space<vmem>>, vector<1x120xf32>
    %184 = arith.addf %182, %183 : vector<1x120xf32>
    %cst_236 = arith.constant 0.000000e+00 : f32
    %185 = vector.broadcast %cst_236 : f32 to vector<1x120xf32>
    %186 = arith.maximumf %184, %185 : vector<1x120xf32>
    %c0_237 = arith.constant 0 : index
    %c0_238 = arith.constant 0 : index
    %187 = vector.load %arg12[%c0_237, %c0_238] : memref<120x84xf32, #tpu.memory_space<vmem>>, vector<120x84xf32>
    %cst_239 = arith.constant dense<0.000000e+00> : vector<1x84xf32>
    %188 = tpu.matmul %186, %187, %cst_239 {dimension_numbers = #tpu.dot_dimension_numbers<[1], [0], [0], [1], [0, 0, 1, 1], [], []>} : vector<1x120xf32>, vector<120x84xf32>, vector<1x84xf32> -> vector<1x84xf32>
    %c0_240 = arith.constant 0 : index
    %c0_241 = arith.constant 0 : index
    %189 = vector.load %arg13[%c0_240, %c0_241] : memref<1x84xf32, #tpu.memory_space<vmem>>, vector<1x84xf32>
    %190 = arith.addf %188, %189 : vector<1x84xf32>
    %cst_242 = arith.constant 0.000000e+00 : f32
    %191 = vector.broadcast %cst_242 : f32 to vector<1x84xf32>
    %192 = arith.maximumf %190, %191 : vector<1x84xf32>
    %c0_243 = arith.constant 0 : index
    %c0_244 = arith.constant 0 : index
    %193 = vector.load %arg14[%c0_243, %c0_244] : memref<84x10xf32, #tpu.memory_space<vmem>>, vector<84x10xf32>
    %cst_245 = arith.constant dense<0.000000e+00> : vector<1x10xf32>
    %194 = tpu.matmul %192, %193, %cst_245 {dimension_numbers = #tpu.dot_dimension_numbers<[1], [0], [0], [1], [0, 0, 1, 1], [], []>} : vector<1x84xf32>, vector<84x10xf32>, vector<1x10xf32> -> vector<1x10xf32>
    %c0_246 = arith.constant 0 : index
    %c0_247 = arith.constant 0 : index
    %195 = vector.load %arg15[%c0_246, %c0_247] : memref<1x10xf32, #tpu.memory_space<vmem>>, vector<1x10xf32>
    %196 = arith.addf %194, %195 : vector<1x10xf32>
    %c0_248 = arith.constant 0 : index
    %c0_249 = arith.constant 0 : index
    %c0_250 = arith.constant 0 : index
    %197 = vector.load %arg16[%c0_248, %c0_249, %c0_250] : memref<1x1x10xf32, #tpu.memory_space<vmem>>, vector<1x1x10xf32>
    %198 = vector.shape_cast %197 : vector<1x1x10xf32> to vector<1x10xf32>
    %199 = vector.shape_cast %196 : vector<1x10xf32> to vector<1x1x10xf32>
    tpu.vector_store %arg16[%c0_248, %c0_249, %c0_250], %199 {strides = array<i32>} : memref<1x1x10xf32, #tpu.memory_space<vmem>>, vector<1x1x10xf32>,
    return
  }
  func.func @transform_0(%arg0: i32) -> (i32, i32, i32, i32) {
    %c0_i32 = arith.constant 0 : i32
    %c0_i32_0 = arith.constant 0 : i32
    %c0_i32_1 = arith.constant 0 : i32
    %c0_i32_2 = arith.constant 0 : i32
    return %arg0, %c0_i32, %c0_i32_0, %c0_i32_1 : i32, i32, i32, i32
  }
  func.func @transform_1(%arg0: i32) -> (i32, i32, i32, i32) {
    %c0_i32 = arith.constant 0 : i32
    %c0_i32_0 = arith.constant 0 : i32
    %c0_i32_1 = arith.constant 0 : i32
    %c0_i32_2 = arith.constant 0 : i32
    %c0_i32_3 = arith.constant 0 : i32
    return %c0_i32, %c0_i32_0, %c0_i32_1, %c0_i32_2 : i32, i32, i32, i32
  }
  func.func @transform_2(%arg0: i32) -> (i32, i32) {
    %c0_i32 = arith.constant 0 : i32
    %c0_i32_0 = arith.constant 0 : i32
    %c0_i32_1 = arith.constant 0 : i32
    return %c0_i32, %c0_i32_0 : i32, i32
  }
  func.func @transform_3(%arg0: i32) -> (i32, i32, i32) {
    %c0_i32 = arith.constant 0 : i32
    %c0_i32_0 = arith.constant 0 : i32
    %c0_i32_1 = arith.constant 0 : i32
    %c0_i32_2 = arith.constant 0 : i32
    return %c0_i32, %c0_i32_0, %c0_i32_1 : i32, i32, i32
  }
  func.func @transform_4(%arg0: i32) -> (i32, i32, i32) {
    %c0_i32 = arith.constant 0 : i32
    %c0_i32_0 = arith.constant 0 : i32
    %c0_i32_1 = arith.constant 0 : i32
    %c0_i32_2 = arith.constant 0 : i32
    return %c0_i32, %c0_i32_0, %c0_i32_1 : i32, i32, i32
  }
  func.func @transform_5(%arg0: i32) -> (i32, i32, i32) {
    %c0_i32 = arith.constant 0 : i32
    %c0_i32_0 = arith.constant 0 : i32
    %c0_i32_1 = arith.constant 0 : i32
    %c0_i32_2 = arith.constant 0 : i32
    return %c0_i32, %c0_i32_0, %c0_i32_1 : i32, i32, i32
  }
  func.func @transform_6(%arg0: i32) -> (i32, i32) {
    %c0_i32 = arith.constant 0 : i32
    %c0_i32_0 = arith.constant 0 : i32
    %c0_i32_1 = arith.constant 0 : i32
    return %c0_i32, %c0_i32_0 : i32, i32
  }
  func.func @transform_7(%arg0: i32) -> (i32, i32, i32) {
    %c0_i32 = arith.constant 0 : i32
    %c0_i32_0 = arith.constant 0 : i32
    %c0_i32_1 = arith.constant 0 : i32
    %c0_i32_2 = arith.constant 0 : i32
    return %c0_i32, %c0_i32_0, %c0_i32_1 : i32, i32, i32
  }
  func.func @transform_8(%arg0: i32) -> (i32, i32, i32) {
    %c0_i32 = arith.constant 0 : i32
    %c0_i32_0 = arith.constant 0 : i32
    %c0_i32_1 = arith.constant 0 : i32
    %c0_i32_2 = arith.constant 0 : i32
    return %c0_i32, %c0_i32_0, %c0_i32_1 : i32, i32, i32
  }
  func.func @transform_9(%arg0: i32) -> (i32, i32, i32) {
    %c0_i32 = arith.constant 0 : i32
    %c0_i32_0 = arith.constant 0 : i32
    %c0_i32_1 = arith.constant 0 : i32
    %c0_i32_2 = arith.constant 0 : i32
    return %c0_i32, %c0_i32_0, %c0_i32_1 : i32, i32, i32
  }
  func.func @transform_10(%arg0: i32) -> (i32, i32) {
    %c0_i32 = arith.constant 0 : i32
    %c0_i32_0 = arith.constant 0 : i32
    %c0_i32_1 = arith.constant 0 : i32
    return %c0_i32, %c0_i32_0 : i32, i32
  }
  func.func @transform_11(%arg0: i32) -> (i32, i32) {
    %c0_i32 = arith.constant 0 : i32
    %c0_i32_0 = arith.constant 0 : i32
    %c0_i32_1 = arith.constant 0 : i32
    return %c0_i32, %c0_i32_0 : i32, i32
  }
  func.func @transform_12(%arg0: i32) -> (i32, i32) {
    %c0_i32 = arith.constant 0 : i32
    %c0_i32_0 = arith.constant 0 : i32
    %c0_i32_1 = arith.constant 0 : i32
    return %c0_i32, %c0_i32_0 : i32, i32
  }
  func.func @transform_13(%arg0: i32) -> (i32, i32) {
    %c0_i32 = arith.constant 0 : i32
    %c0_i32_0 = arith.constant 0 : i32
    %c0_i32_1 = arith.constant 0 : i32
    return %c0_i32, %c0_i32_0 : i32, i32
  }
  func.func @transform_14(%arg0: i32) -> (i32, i32) {
    %c0_i32 = arith.constant 0 : i32
    %c0_i32_0 = arith.constant 0 : i32
    %c0_i32_1 = arith.constant 0 : i32
    return %c0_i32, %c0_i32_0 : i32, i32
  }
  func.func @transform_15(%arg0: i32) -> (i32, i32, i32) {
    %c0_i32 = arith.constant 0 : i32
    %c0_i32_0 = arith.constant 0 : i32
    %c0_i32_1 = arith.constant 0 : i32
    return %arg0, %c0_i32, %c0_i32_0 : i32, i32, i32
  }
}

</mosaic_0001>

<llo_original>
// kernel: convnet_forward.1
$region0: #{convnet_forward.1}
  #allocation0 [shape = 'u32[]', space=smem, size = 0x4, offset = 0x4, fixed_abs, tag = 'smem constant byte address 0x4 - core index']
  #allocation1 [shape = 'u32[144,128]{1,0:T(1,128)}', space=vmem, size = 0x12000, scoped, tag = 'internal scratch']
  #allocation2 [shape = 'f32[14,84]{1,0:T(8,128)}', space=vmem, size = 0x2000, scoped, tag = 'scratch operand']
  #allocation3 [shape = 'f32[5,80]{1,0:T(8,128)}', space=vmem, size = 0x1000, scoped, tag = 'scratch operand']
  %s0 = inlined_call_operand.hbm [shape: f32[2,3,32,32], index: 0, kind: input, shape index: {}]
  %s1 = inlined_call_operand.vmem [shape: f32[3,5,32,168], index: 1, kind: input, shape index: {}]
  %s2 = inlined_call_operand.vmem [shape: f32[1,168], index: 2, kind: input, shape index: {}]
  %s3 = inlined_call_operand.vmem [shape: f32[2,14,28], index: 3, kind: input, shape index: {}]
  %s4 = inlined_call_operand.vmem [shape: f32[2,168,84], index: 4, kind: input, shape index: {}]
  %s5 = inlined_call_operand.vmem [shape: f32[5,84,160], index: 5, kind: input, shape index: {}]
  %s6 = inlined_call_operand.vmem [shape: f32[1,160], index: 6, kind: input, shape index: {}]
  %s7 = inlined_call_operand.vmem [shape: f32[2,5,10], index: 7, kind: input, shape index: {}]
  %s8 = inlined_call_operand.vmem [shape: f32[2,160,80], index: 8, kind: input, shape index: {}]
  %s9 = inlined_call_operand.vmem [shape: f32[5,80,120], index: 9, kind: input, shape index: {}]
  %s10 = inlined_call_operand.vmem [shape: f32[1,120], index: 10, kind: input, shape index: {}]
  %s11 = inlined_call_operand.vmem [shape: f32[120,84], index: 11, kind: input, shape index: {}]
  %s12 = inlined_call_operand.vmem [shape: f32[1,84], index: 12, kind: input, shape index: {}]
  %s13 = inlined_call_operand.vmem [shape: f32[84,10], index: 13, kind: input, shape index: {}]
  %s14 = inlined_call_operand.vmem [shape: f32[1,10], index: 14, kind: input, shape index: {}]
  %s15 = inlined_call_operand.hbm [shape: f32[2,1,10], index: 15, kind: output, shape index: {}]
  %s16 = sld [smem:[#allocation0]]
  $region97: #{convnet_forward.1} parent=0
    _
  %s18 = ssub.s32 1, %s16
  %s19 = scalar_select 0, %s18, %s16
  $region1: #{convnet_forward.1} parent=0
    #allocation4 [shape = 'u8[98304]{0}', space=vmem, size = 0x18000, scoped, tag = 'input window, operand 0']
    #allocation5 [shape = 's32[2]{0}', space=sflag, size = 0x8, scoped, tag = 'scoped memory for convnet_forward.1']
    #allocation6 [shape = 's32[2]{0}', space=sflag, size = 0x8, scoped, tag = 'scoped memory for convnet_forward.1']
    #allocation7 [shape = 'u8[1024]{0}', space=vmem, size = 0x400, scoped, tag = 'output window, operand 0']
    %20 = vsyncpa [#allocation5], 0
    %s21 = scalar_lea.sflag [#allocation5], 1
    %22 = vsyncpa %s21, 0
    %23 = vsyncpa [#allocation6], 0
    %s24 = scalar_lea.sflag [#allocation6], 1
    %25 = vsyncpa %s24, 0
    loop: start=0, step=1, limit=4
    $region2: #{convnet_forward.1} parent=1 // loop_pre_header
      _
    $region3: #{convnet_forward.1} parent=1 // loop_header
      %s27 = sphi 0, %s31
      %p28 = scmp.ge.s32.totalorder %s27, 4
      %s37 = sphi 0, %s39
      %s40 = sphi 0, %s37
      %s41 = sphi 0, %s40
      %s57 = sphi 0, %s41
      %s61 = sphi 0, %s61
      %s63 = sphi 0, %s61
      %s64 = sphi 0, %s63
      %s78 = sphi 0, %s64
      %s82 = sphi 0, %s82
      %s84 = sphi 0, %s82
      %s85 = sphi 0, %s84
      %s99 = sphi 0, %s85
      %s103 = sphi 0, %s103
      %s105 = sphi 0, %s103
      %s106 = sphi 0, %s105
      %s120 = sphi 0, %s106
      %s124 = sphi 0, %s124
      %s126 = sphi 0, %s124
      %s127 = sphi 0, %s126
      %s141 = sphi 0, %s127
      %s145 = sphi 0, %s145
      %s147 = sphi 0, %s145
      %s148 = sphi 0, %s147
      %s162 = sphi 0, %s148
      %s166 = sphi 0, %s166
      %s168 = sphi 0, %s166
      %s169 = sphi 0, %s168
      %s183 = sphi 0, %s169
      %s187 = sphi 0, %s187
      %s189 = sphi 0, %s187
      %s190 = sphi 0, %s189
      %s204 = sphi 0, %s190
      %s208 = sphi 0, %s208
      %s210 = sphi 0, %s208
      %s211 = sphi 0, %s210
      %s225 = sphi 0, %s211
      %s229 = sphi 0, %s229
      %s231 = sphi 0, %s229
      %s232 = sphi 0, %s231
      %s246 = sphi 0, %s232
      %s250 = sphi 0, %s250
      %s252 = sphi 0, %s250
      %s253 = sphi 0, %s252
      %s267 = sphi 0, %s253
      %s271 = sphi 0, %s271
      %s273 = sphi 0, %s271
      %s274 = sphi 0, %s273
      %s288 = sphi 0, %s274
      %s292 = sphi 0, %s292
      %s294 = sphi 0, %s292
      %s295 = sphi 0, %s294
      %s309 = sphi 0, %s295
      %s313 = sphi 0, %s313
      %s315 = sphi 0, %s313
      %s316 = sphi 0, %s315
      %s330 = sphi 0, %s316
      %s334 = sphi 0, %s334
      %s336 = sphi 0, %s334
      %s337 = sphi 0, %s336
      %s351 = sphi 0, %s337
      %s357 = sphi 0, %s359
      %s360 = sphi 0, %s357
      %s361 = sphi 0, %s360
      %s377 = sphi 0, %s361
    $region4: #{convnet_forward.1} parent=1 // loop_header_branch
      %30 = sbr.rel (%p28) target = $region8
    $region5: #{convnet_forward.1} parent=1 // loop_body
      %s32 = ssub.s32 %s27, 1
      %s33 = ssub.s32 %s27, 2
      %s34 = sadd.s32 %s27, 1
      %s35 = ssub.s32 %s27, %s34
      %p36 = scmp.eq.s32.totalorder %s35, 0
      %s38 = sadd.s32 %s37, 1
      %s39 = scalar_select %p36, %s37, %s38
      %p42 = pneg %p36
      %p43 = scmp.eq.s32.totalorder %s27, 1
      %p44 = por %p42, %p43
      %p45 = scmp.ne.s32.totalorder %s37, %s40
      %p46 = scmp.eq.s32.totalorder %s27, 0
      %p47 = por %p45, %p46
      %p48 = scmp.ne.s32.totalorder %s37, %s40
      %p49 = scmp.eq.s32.totalorder %s32, 1
      %p50 = por %p48, %p49
      %p51 = scmp.ne.s32.totalorder %s40, %s41
      %p52 = scmp.eq.s32.totalorder %s32, 0
      %p53 = por %p51, %p52
      %p54 = scmp.ne.s32.totalorder %s40, %s41
      %p55 = scmp.eq.s32.totalorder %s33, 1
      %p56 = por %p54, %p55
      %p58 = scmp.ne.s32.totalorder %s41, %s57
      %p59 = scmp.eq.s32.totalorder %s33, 0
      %p60 = por %p58, %p59
      %s62 = sadd.s32 %s61, 1
      %p65 = scmp.eq.s32.totalorder %s27, 1
      %p66 = scmp.ne.s32.totalorder %s61, %s63
      %p67 = scmp.eq.s32.totalorder %s27, 0
      %p68 = por %p66, %p67
      %p69 = scmp.ne.s32.totalorder %s61, %s63
      %p70 = scmp.eq.s32.totalorder %s32, 1
      %p71 = por %p69, %p70
      %p72 = scmp.ne.s32.totalorder %s63, %s64
      %p73 = scmp.eq.s32.totalorder %s32, 0
      %p74 = por %p72, %p73
      %p75 = scmp.ne.s32.totalorder %s63, %s64
      %p76 = scmp.eq.s32.totalorder %s33, 1
      %p77 = por %p75, %p76
      %p79 = scmp.ne.s32.totalorder %s64, %s78
      %p80 = scmp.eq.s32.totalorder %s33, 0
      %p81 = por %p79, %p80
      %s83 = sadd.s32 %s82, 1
      %p86 = scmp.eq.s32.totalorder %s27, 1
      %p87 = scmp.ne.s32.totalorder %s82, %s84
      %p88 = scmp.eq.s32.totalorder %s27, 0
      %p89 = por %p87, %p88
      %p90 = scmp.ne.s32.totalorder %s82, %s84
      %p91 = scmp.eq.s32.totalorder %s32, 1
      %p92 = por %p90, %p91
      %p93 = scmp.ne.s32.totalorder %s84, %s85
      %p94 = scmp.eq.s32.totalorder %s32, 0
      %p95 = por %p93, %p94
      %p96 = scmp.ne.s32.totalorder %s84, %s85
      %p97 = scmp.eq.s32.totalorder %s33, 1
      %p98 = por %p96, %p97
      %p100 = scmp.ne.s32.totalorder %s85, %s99
      %p101 = scmp.eq.s32.totalorder %s33, 0
      %p102 = por %p100, %p101
      %s104 = sadd.s32 %s103, 1
      %p107 = scmp.eq.s32.totalorder %s27, 1
      %p108 = scmp.ne.s32.totalorder %s103, %s105
      %p109 = scmp.eq.s32.totalorder %s27, 0
      %p110 = por %p108, %p109
      %p111 = scmp.ne.s32.totalorder %s103, %s105
      %p112 = scmp.eq.s32.totalorder %s32, 1
      %p113 = por %p111, %p112
      %p114 = scmp.ne.s32.totalorder %s105, %s106
      %p115 = scmp.eq.s32.totalorder %s32, 0
      %p116 = por %p114, %p115
      %p117 = scmp.ne.s32.totalorder %s105, %s106
      %p118 = scmp.eq.s32.totalorder %s33, 1
      %p119 = por %p117, %p118
      %p121 = scmp.ne.s32.totalorder %s106, %s120
      %p122 = scmp.eq.s32.totalorder %s33, 0
      %p123 = por %p121, %p122
      %s125 = sadd.s32 %s124, 1
      %p128 = scmp.eq.s32.totalorder %s27, 1
      %p129 = scmp.ne.s32.totalorder %s124, %s126
      %p130 = scmp.eq.s32.totalorder %s27, 0
      %p131 = por %p129, %p130
      %p132 = scmp.ne.s32.totalorder %s124, %s126
      %p133 = scmp.eq.s32.totalorder %s32, 1
      %p134 = por %p132, %p133
      %p135 = scmp.ne.s32.totalorder %s126, %s127
      %p136 = scmp.eq.s32.totalorder %s32, 0
      %p137 = por %p135, %p136
      %p138 = scmp.ne.s32.totalorder %s126, %s127
      %p139 = scmp.eq.s32.totalorder %s33, 1
      %p140 = por %p138, %p139
      %p142 = scmp.ne.s32.totalorder %s127, %s141
      %p143 = scmp.eq.s32.totalorder %s33, 0
      %p144 = por %p142, %p143
      %s146 = sadd.s32 %s145, 1
      %p149 = scmp.eq.s32.totalorder %s27, 1
      %p150 = scmp.ne.s32.totalorder %s145, %s147
      %p151 = scmp.eq.s32.totalorder %s27, 0
      %p152 = por %p150, %p151
      %p153 = scmp.ne.s32.totalorder %s145, %s147
      %p154 = scmp.eq.s32.totalorder %s32, 1
      %p155 = por %p153, %p154
      %p156 = scmp.ne.s32.totalorder %s147, %s148
      %p157 = scmp.eq.s32.totalorder %s32, 0
      %p158 = por %p156, %p157
      %p159 = scmp.ne.s32.totalorder %s147, %s148
      %p160 = scmp.eq.s32.totalorder %s33, 1
      %p161 = por %p159, %p160
      %p163 = scmp.ne.s32.totalorder %s148, %s162
      %p164 = scmp.eq.s32.totalorder %s33, 0
      %p165 = por %p163, %p164
      %s167 = sadd.s32 %s166, 1
      %p170 = scmp.eq.s32.totalorder %s27, 1
      %p171 = scmp.ne.s32.totalorder %s166, %s168
      %p172 = scmp.eq.s32.totalorder %s27, 0
      %p173 = por %p171, %p172
      %p174 = scmp.ne.s32.totalorder %s166, %s168
      %p175 = scmp.eq.s32.totalorder %s32, 1
      %p176 = por %p174, %p175
      %p177 = scmp.ne.s32.totalorder %s168, %s169
      %p178 = scmp.eq.s32.totalorder %s32, 0
      %p179 = por %p177, %p178
      %p180 = scmp.ne.s32.totalorder %s168, %s169
      %p181 = scmp.eq.s32.totalorder %s33, 1
      %p182 = por %p180, %p181
      %p184 = scmp.ne.s32.totalorder %s169, %s183
      %p185 = scmp.eq.s32.totalorder %s33, 0
      %p186 = por %p184, %p185
      %s188 = sadd.s32 %s187, 1
      %p191 = scmp.eq.s32.totalorder %s27, 1
      %p192 = scmp.ne.s32.totalorder %s187, %s189
      %p193 = scmp.eq.s32.totalorder %s27, 0
      %p194 = por %p192, %p193
      %p195 = scmp.ne.s32.totalorder %s187, %s189
      %p196 = scmp.eq.s32.totalorder %s32, 1
      %p197 = por %p195, %p196
      %p198 = scmp.ne.s32.totalorder %s189, %s190
      %p199 = scmp.eq.s32.totalorder %s32, 0
      %p200 = por %p198, %p199
      %p201 = scmp.ne.s32.totalorder %s189, %s190
      %p202 = scmp.eq.s32.totalorder %s33, 1
      %p203 = por %p201, %p202
      %p205 = scmp.ne.s32.totalorder %s190, %s204
      %p206 = scmp.eq.s32.totalorder %s33, 0
      %p207 = por %p205, %p206
      %s209 = sadd.s32 %s208, 1
      %p212 = scmp.eq.s32.totalorder %s27, 1
      %p213 = scmp.ne.s32.totalorder %s208, %s210
      %p214 = scmp.eq.s32.totalorder %s27, 0
      %p215 = por %p213, %p214
      %p216 = scmp.ne.s32.totalorder %s208, %s210
      %p217 = scmp.eq.s32.totalorder %s32, 1
      %p218 = por %p216, %p217
      %p219 = scmp.ne.s32.totalorder %s210, %s211
      %p220 = scmp.eq.s32.totalorder %s32, 0
      %p221 = por %p219, %p220
      %p222 = scmp.ne.s32.totalorder %s210, %s211
      %p223 = scmp.eq.s32.totalorder %s33, 1
      %p224 = por %p222, %p223
      %p226 = scmp.ne.s32.totalorder %s211, %s225
      %p227 = scmp.eq.s32.totalorder %s33, 0
      %p228 = por %p226, %p227
      %s230 = sadd.s32 %s229, 1
      %p233 = scmp.eq.s32.totalorder %s27, 1
      %p234 = scmp.ne.s32.totalorder %s229, %s231
      %p235 = scmp.eq.s32.totalorder %s27, 0
      %p236 = por %p234, %p235
      %p237 = scmp.ne.s32.totalorder %s229, %s231
      %p238 = scmp.eq.s32.totalorder %s32, 1
      %p239 = por %p237, %p238
      %p240 = scmp.ne.s32.totalorder %s231, %s232
      %p241 = scmp.eq.s32.totalorder %s32, 0
      %p242 = por %p240, %p241
      %p243 = scmp.ne.s32.totalorder %s231, %s232
      %p244 = scmp.eq.s32.totalorder %s33, 1
      %p245 = por %p243, %p244
      %p247 = scmp.ne.s32.totalorder %s232, %s246
      %p248 = scmp.eq.s32.totalorder %s33, 0
      %p249 = por %p247, %p248
      %s251 = sadd.s32 %s250, 1
      %p254 = scmp.eq.s32.totalorder %s27, 1
      %p255 = scmp.ne.s32.totalorder %s250, %s252
      %p256 = scmp.eq.s32.totalorder %s27, 0
      %p257 = por %p255, %p256
      %p258 = scmp.ne.s32.totalorder %s250, %s252
      %p259 = scmp.eq.s32.totalorder %s32, 1
      %p260 = por %p258, %p259
      %p261 = scmp.ne.s32.totalorder %s252, %s253
      %p262 = scmp.eq.s32.totalorder %s32, 0
      %p263 = por %p261, %p262
      %p264 = scmp.ne.s32.totalorder %s252, %s253
      %p265 = scmp.eq.s32.totalorder %s33, 1
      %p266 = por %p264, %p265
      %p268 = scmp.ne.s32.totalorder %s253, %s267
      %p269 = scmp.eq.s32.totalorder %s33, 0
      %p270 = por %p268, %p269
      %s272 = sadd.s32 %s271, 1
      %p275 = scmp.eq.s32.totalorder %s27, 1
      %p276 = scmp.ne.s32.totalorder %s271, %s273
      %p277 = scmp.eq.s32.totalorder %s27, 0
      %p278 = por %p276, %p277
      %p279 = scmp.ne.s32.totalorder %s271, %s273
      %p280 = scmp.eq.s32.totalorder %s32, 1
      %p281 = por %p279, %p280
      %p282 = scmp.ne.s32.totalorder %s273, %s274
      %p283 = scmp.eq.s32.totalorder %s32, 0
      %p284 = por %p282, %p283
      %p285 = scmp.ne.s32.totalorder %s273, %s274
      %p286 = scmp.eq.s32.totalorder %s33, 1
      %p287 = por %p285, %p286
      %p289 = scmp.ne.s32.totalorder %s274, %s288
      %p290 = scmp.eq.s32.totalorder %s33, 0
      %p291 = por %p289, %p290
      %s293 = sadd.s32 %s292, 1
      %p296 = scmp.eq.s32.totalorder %s27, 1
      %p297 = scmp.ne.s32.totalorder %s292, %s294
      %p298 = scmp.eq.s32.totalorder %s27, 0
      %p299 = por %p297, %p298
      %p300 = scmp.ne.s32.totalorder %s292, %s294
      %p301 = scmp.eq.s32.totalorder %s32, 1
      %p302 = por %p300, %p301
      %p303 = scmp.ne.s32.totalorder %s294, %s295
      %p304 = scmp.eq.s32.totalorder %s32, 0
      %p305 = por %p303, %p304
      %p306 = scmp.ne.s32.totalorder %s294, %s295
      %p307 = scmp.eq.s32.totalorder %s33, 1
      %p308 = por %p306, %p307
      %p310 = scmp.ne.s32.totalorder %s295, %s309
      %p311 = scmp.eq.s32.totalorder %s33, 0
      %p312 = por %p310, %p311
      %s314 = sadd.s32 %s313, 1
      %p317 = scmp.eq.s32.totalorder %s27, 1
      %p318 = scmp.ne.s32.totalorder %s313, %s315
      %p319 = scmp.eq.s32.totalorder %s27, 0
      %p320 = por %p318, %p319
      %p321 = scmp.ne.s32.totalorder %s313, %s315
      %p322 = scmp.eq.s32.totalorder %s32, 1
      %p323 = por %p321, %p322
      %p324 = scmp.ne.s32.totalorder %s315, %s316
      %p325 = scmp.eq.s32.totalorder %s32, 0
      %p326 = por %p324, %p325
      %p327 = scmp.ne.s32.totalorder %s315, %s316
      %p328 = scmp.eq.s32.totalorder %s33, 1
      %p329 = por %p327, %p328
      %p331 = scmp.ne.s32.totalorder %s316, %s330
      %p332 = scmp.eq.s32.totalorder %s33, 0
      %p333 = por %p331, %p332
      %s335 = sadd.s32 %s334, 1
      %p338 = scmp.eq.s32.totalorder %s27, 1
      %p339 = scmp.ne.s32.totalorder %s334, %s336
      %p340 = scmp.eq.s32.totalorder %s27, 0
      %p341 = por %p339, %p340
      %p342 = scmp.ne.s32.totalorder %s334, %s336
      %p343 = scmp.eq.s32.totalorder %s32, 1
      %p344 = por %p342, %p343
      %p345 = scmp.ne.s32.totalorder %s336, %s337
      %p346 = scmp.eq.s32.totalorder %s32, 0
      %p347 = por %p345, %p346
      %p348 = scmp.ne.s32.totalorder %s336, %s337
      %p349 = scmp.eq.s32.totalorder %s33, 1
      %p350 = por %p348, %p349
      %p352 = scmp.ne.s32.totalorder %s337, %s351
      %p353 = scmp.eq.s32.totalorder %s33, 0
      %p354 = por %p352, %p353
      %s355 = ssub.s32 %s27, %s34
      %p356 = scmp.eq.s32.totalorder %s355, 0
      %s358 = sadd.s32 %s357, 1
      %s359 = scalar_select %p356, %s357, %s358
      %p362 = pneg %p356
      %p363 = scmp.eq.s32.totalorder %s27, 1
      %p364 = por %p362, %p363
      %p365 = scmp.ne.s32.totalorder %s357, %s360
      %p366 = scmp.eq.s32.totalorder %s27, 0
      %p367 = por %p365, %p366
      %p368 = scmp.ne.s32.totalorder %s357, %s360
      %p369 = scmp.eq.s32.totalorder %s32, 1
      %p370 = por %p368, %p369
      %p371 = scmp.ne.s32.totalorder %s360, %s361
      %p372 = scmp.eq.s32.totalorder %s32, 0
      %p373 = por %p371, %p372
      %p374 = scmp.ne.s32.totalorder %s360, %s361
      %p375 = scmp.eq.s32.totalorder %s33, 1
      %p376 = por %p374, %p375
      %p378 = scmp.ne.s32.totalorder %s361, %s377
      %p379 = scmp.eq.s32.totalorder %s33, 0
      %p380 = por %p378, %p379
      %p381 = scmp.le.s32.totalorder 1, %s27
      %p382 = scmp.lt.s32.totalorder %s27, 3
      %p383 = pnand %p381, %p382
      %p384 = pneg %p383
      // Predicated region
      $region9: #{convnet_forward.1} parent=5 // pred_check
        _
      $region10: #{convnet_forward.1} parent=5 // pred_check_branch
        %386 = sbr.rel (%p383) target = $region12
      $region11: #{convnet_forward.1} parent=5 // pred_region
        %s387 = ssub.s32 %s27, 1
        // Predicated region
        $region13: #{convnet_forward.1} parent=11 // pred_check
          %p388 = pneg %p74
        $region14: #{convnet_forward.1} parent=11 // pred_check_branch
          %390 = sbr.rel (%p388) target = $region16
        $region15: #{convnet_forward.1} parent=11 // pred_region
          _
        $region16: #{convnet_forward.1} parent=11 // pred_fallthru
          _
        // Predicated region
        $region17: #{convnet_forward.1} parent=11 // pred_check
          %p391 = pneg %p95
        $region18: #{convnet_forward.1} parent=11 // pred_check_branch
          %393 = sbr.rel (%p391) target = $region20
        $region19: #{convnet_forward.1} parent=11 // pred_region
          _
        $region20: #{convnet_forward.1} parent=11 // pred_fallthru
          _
        // Predicated region
        $region21: #{convnet_forward.1} parent=11 // pred_check
          %p394 = pneg %p116
        $region22: #{convnet_forward.1} parent=11 // pred_check_branch
          %396 = sbr.rel (%p394) target = $region24
        $region23: #{convnet_forward.1} parent=11 // pred_region
          _
        $region24: #{convnet_forward.1} parent=11 // pred_fallthru
          _
        // Predicated region
        $region25: #{convnet_forward.1} parent=11 // pred_check
          %p397 = pneg %p137
        $region26: #{convnet_forward.1} parent=11 // pred_check_branch
          %399 = sbr.rel (%p397) target = $region28
        $region27: #{convnet_forward.1} parent=11 // pred_region
          _
        $region28: #{convnet_forward.1} parent=11 // pred_fallthru
          _
        // Predicated region
        $region29: #{convnet_forward.1} parent=11 // pred_check
          %p400 = pneg %p158
        $region30: #{convnet_forward.1} parent=11 // pred_check_branch
          %402 = sbr.rel (%p400) target = $region32
        $region31: #{convnet_forward.1} parent=11 // pred_region
          _
        $region32: #{convnet_forward.1} parent=11 // pred_fallthru
          _
        // Predicated region
        $region33: #{convnet_forward.1} parent=11 // pred_check
          %p403 = pneg %p179
        $region34: #{convnet_forward.1} parent=11 // pred_check_branch
          %405 = sbr.rel (%p403) target = $region36
        $region35: #{convnet_forward.1} parent=11 // pred_region
          _
        $region36: #{convnet_forward.1} parent=11 // pred_fallthru
          _
        // Predicated region
        $region37: #{convnet_forward.1} parent=11 // pred_check
          %p406 = pneg %p200
        $region38: #{convnet_forward.1} parent=11 // pred_check_branch
          %408 = sbr.rel (%p406) target = $region40
        $region39: #{convnet_forward.1} parent=11 // pred_region
          _
        $region40: #{convnet_forward.1} parent=11 // pred_fallthru
          _
        // Predicated region
        $region41: #{convnet_forward.1} parent=11 // pred_check
          %p409 = pneg %p221
        $region42: #{convnet_forward.1} parent=11 // pred_check_branch
          %411 = sbr.rel (%p409) target = $region44
        $region43: #{convnet_forward.1} parent=11 // pred_region
          _
        $region44: #{convnet_forward.1} parent=11 // pred_fallthru
          _
        // Predicated region
        $region45: #{convnet_forward.1} parent=11 // pred_check
          %p412 = pneg %p242
        $region46: #{convnet_forward.1} parent=11 // pred_check_branch
          %414 = sbr.rel (%p412) target = $region48
        $region47: #{convnet_forward.1} parent=11 // pred_region
          _
        $region48: #{convnet_forward.1} parent=11 // pred_fallthru
          _
        // Predicated region
        $region49: #{convnet_forward.1} parent=11 // pred_check
          %p415 = pneg %p263
        $region50: #{convnet_forward.1} parent=11 // pred_check_branch
          %417 = sbr.rel (%p415) target = $region52
        $region51: #{convnet_forward.1} parent=11 // pred_region
          _
        $region52: #{convnet_forward.1} parent=11 // pred_fallthru
          _
        // Predicated region
        $region53: #{convnet_forward.1} parent=11 // pred_check
          %p418 = pneg %p284
        $region54: #{convnet_forward.1} parent=11 // pred_check_branch
          %420 = sbr.rel (%p418) target = $region56
        $region55: #{convnet_forward.1} parent=11 // pred_region
          _
        $region56: #{convnet_forward.1} parent=11 // pred_fallthru
          _
        // Predicated region
        $region57: #{convnet_forward.1} parent=11 // pred_check
          %p421 = pneg %p305
        $region58: #{convnet_forward.1} parent=11 // pred_check_branch
          %423 = sbr.rel (%p421) target = $region60
        $region59: #{convnet_forward.1} parent=11 // pred_region
          _
        $region60: #{convnet_forward.1} parent=11 // pred_fallthru
          _
        // Predicated region
        $region61: #{convnet_forward.1} parent=11 // pred_check
          %p424 = pneg %p326
        $region62: #{convnet_forward.1} parent=11 // pred_check_branch
          %426 = sbr.rel (%p424) target = $region64
        $region63: #{convnet_forward.1} parent=11 // pred_region
          _
        $region64: #{convnet_forward.1} parent=11 // pred_fallthru
          _
        // Predicated region
        $region65: #{convnet_forward.1} parent=11 // pred_check
          %p427 = pneg %p347
        $region66: #{convnet_forward.1} parent=11 // pred_check_branch
          %429 = sbr.rel (%p427) target = $region68
        $region67: #{convnet_forward.1} parent=11 // pred_region
          _
        $region68: #{convnet_forward.1} parent=11 // pred_fallthru
          _
      $region12: #{convnet_forward.1} parent=5 // pred_fallthru
        _
      %p430 = scmp.lt.s32.totalorder %s27, 2
      // Predicated region
      $region69: #{convnet_forward.1} parent=5 // pred_check
        %p431 = pneg %p430
      $region70: #{convnet_forward.1} parent=5 // pred_check_branch
        %433 = sbr.rel (%p431) target = $region72
      $region71: #{convnet_forward.1} parent=5 // pred_region
        // Predicated region
        $region73: #{convnet_forward.1} parent=71 // pred_check
          %p434 = pneg %p47
        $region74: #{convnet_forward.1} parent=71 // pred_check_branch
          %436 = sbr.rel (%p434) target = $region76
        $region75: #{convnet_forward.1} parent=71 // pred_region
          %s437 = sand.u32 %s37, 1
          %s438 = scalar_lea.sflag [#allocation5], %s437
          %s439 = sand.u32 %s37, 1
          %s440 = smul.addr %s439, 96
          %s441 = scalar_lea.vmem [#allocation4], %s440
          %s443 = ssub.s32 1536, 1536
          %444 = vsyncadd %s438, %s443
          %s445 = smul.addr %s27, 12
          %s446 = smul.addr %s445, 128
          %s447 = scalar_lea.hbm %s0, %s446
          %s448 = sshll.u32 %s441, 4
          %s449 = int_to_ptr.vmem [resolvable:$true] %s448
          %454 = dma.hbm_to_vmem [thread:$0]  %s447, 1536, %s449, %s438, 128, 128, 8
        $region76: #{convnet_forward.1} parent=71 // pred_fallthru
          _
      $region72: #{convnet_forward.1} parent=5 // pred_fallthru
        _
      %p455 = scmp.le.s32.totalorder 1, %s27
      %p456 = scmp.lt.s32.totalorder %s27, 3
      %p457 = pnand %p455, %p456
      %p458 = pneg %p457
      // Predicated region
      $region77: #{convnet_forward.1} parent=5 // pred_check
        _
      $region78: #{convnet_forward.1} parent=5 // pred_check_branch
        %460 = sbr.rel (%p457) target = $region80
      $region79: #{convnet_forward.1} parent=5 // pred_region
        %s461 = ssub.s32 %s27, 1
        %s462 = sand.u32 %s40, 1
        %s463 = scalar_lea.sflag [#allocation5], %s462
        %s464 = sand.u32 %s40, 1
        %s465 = smul.addr %s464, 96
        %s466 = scalar_lea.vmem [#allocation4], %s465
        // Predicated region
        $region81: #{convnet_forward.1} parent=79 // pred_check
          %p467 = pneg %p53
        $region82: #{convnet_forward.1} parent=79 // pred_check_branch
          %469 = sbr.rel (%p467) target = $region84
        $region83: #{convnet_forward.1} parent=79 // pred_region
          %470 = dma.done %s463, 1536
        $region84: #{convnet_forward.1} parent=79 // pred_fallthru
          _
        %s471 = sand.u32 %s40, 1
        %s472 = scalar_lea.sflag [#allocation5], %s471
        %s473 = sand.u32 %s40, 1
        %s474 = smul.addr %s473, 96
        %s475 = scalar_lea.vmem [#allocation4], %s474
        %p476 = pneg %p53
        %p477 = pneg %p50
        %p478 = pneg %p74
        %p479 = pneg %p71
        %p480 = pneg %p95
        %p481 = pneg %p92
        %p482 = pneg %p116
        %p483 = pneg %p113
        %p484 = pneg %p137
        %p485 = pneg %p134
        %p486 = pneg %p158
        %p487 = pneg %p155
        %p488 = pneg %p179
        %p489 = pneg %p176
        %p490 = pneg %p200
        %p491 = pneg %p197
        %p492 = pneg %p221
        %p493 = pneg %p218
        %p494 = pneg %p242
        %p495 = pneg %p239
        %p496 = pneg %p263
        %p497 = pneg %p260
        %p498 = pneg %p284
        %p499 = pneg %p281
        %p500 = pneg %p305
        %p501 = pneg %p302
        %p502 = pneg %p326
        %p503 = pneg %p323
        %p504 = pneg %p347
        %p505 = pneg %p344
        %p506 = pneg %p373
        %p507 = pneg %p370
        %s508 = sand.u32 %s360, 1
        %s509 = scalar_lea.sflag [#allocation6], %s508
        %s510 = sand.u32 %s360, 1
        %s511 = scalar_lea.vmem [#allocation7], %s510
        %v512 = vld [vmem:[%s466] sm:$0xff]
        %v513 = vld [vmem:[%s466 + $0x8] sm:$0xff]
        %v514 = vld [vmem:[%s466 + $0x10] sm:$0xff]
        %v515 = vld [vmem:[%s466 + $0x18] sm:$0xf]
        %v516 = vld [vmem:[%s1] sm:$0xff]
        %v517 = vld [vmem:[%s1 + $0x8] sm:$0xff]
        %v518 = vld [vmem:[%s1 + $0x10] sm:$0xff]
        %v519 = vld [vmem:[%s1 + $0x18] sm:$0xff]
        %v520 = vld [vmem:[%s1 + $0x20] sm:$0xff]
        %v521 = vld [vmem:[%s1 + $0x28] sm:$0xff]
        %v522 = vld [vmem:[%s1 + $0x30] sm:$0xff]
        %v523 = vld [vmem:[%s1 + $0x38] sm:$0xff]
        %v524 = vld [vmem:[%s466 + $0x1] sm:$0xff]
        %v525 = vld [vmem:[%s466 + $0x9] sm:$0xff]
        %v526 = vld [vmem:[%s466 + $0x11] sm:$0xff]
        %v527 = vld [vmem:[%s466 + $0x19] sm:$0xf]
        %s528 = scalar_lea.vmem %s1, 64
        %v529 = vld [vmem:[%s528] sm:$0xff]
        %v530 = vld [vmem:[%s528 + $0x8] sm:$0xff]
        %v531 = vld [vmem:[%s528 + $0x10] sm:$0xff]
        %v532 = vld [vmem:[%s528 + $0x18] sm:$0xff]
        %v533 = vld [vmem:[%s528 + $0x20] sm:$0xff]
        %v534 = vld [vmem:[%s528 + $0x28] sm:$0xff]
        %v535 = vld [vmem:[%s528 + $0x30] sm:$0xff]
        %v536 = vld [vmem:[%s528 + $0x38] sm:$0xff]
        %vm537 = vcmask 261120
        %v539 = vsel %vm537, %v524, 0
        %v542 = vsel %vm537, %v525, 0
        %v545 = vsel %vm537, %v526, 0
        %v548 = vsel %vm537, %v527, 0
        %550 = vmatprep.subr.mxu0 0.0
        %551 = vmatpush1.msra.mxu0 0.0
        %552 = vmatprep.subr.mxu0 0.0
        %553 = vmatpush1.msra.mxu0 0.0
        %554 = vmatprep.subr.mxu0 0.0
        %555 = vmatpush1.msra.mxu0 0.0
        %556 = vmatprep.subr.mxu0 0.0
        %557 = vmatpush1.msra.mxu0 0.0
        %558 = vmatprep.subr.mxu0 0.0
        %559 = vmatpush1.msra.mxu0 0.0
        %560 = vmatprep.subr.mxu0 0.0
        %561 = vmatpush1.msra.mxu0 0.0
        %562 = vmatprep.subr.mxu0 0.0
        %563 = vmatpush1.msra.mxu0 0.0
        %564 = vmatprep.subr.mxu0 0.0
        %565 = vmatpush1.msra.mxu0 0.0
        %566 = vmatprep.subr.mxu0 0.0
        %567 = vmatpush1.msra.mxu0 0.0
        %568 = vmatprep.subr.mxu0 0.0
        %569 = vmatpush1.msra.mxu0 0.0
        %570 = vmatprep.subr.mxu0 0.0
        %571 = vmatpush1.msra.mxu0 0.0
        %572 = vmatprep.subr.mxu0 0.0
        %573 = vmatpush1.msra.mxu0 0.0
        %574 = vmatprep.subr.mxu0 %v536
        %575 = vmatpush1.msra.mxu0 %v535
        %576 = vmatprep.subr.mxu0 %v534
        %577 = vmatpush1.msra.mxu0 %v533
        %578 = vmatprep.subr.mxu0 %v532
        %579 = vmatpush1.msra.mxu0 %v531
        %580 = vmatprep.subr.mxu0 %v530
        %581 = vmatpush1.msra.mxu0 %v529
        %582 = vmatprep.subr.mxu0 0.0
        %583 = vmatpush2.msra.mxu0 0.0
        %584 = vmatprep.subr.mxu0 0.0
        %585 = vmatpush2.msra.mxu0 0.0
        %586 = vmatprep.subr.mxu0 0.0
        %587 = vmatpush2.msra.mxu0 0.0
        %588 = vmatprep.subr.mxu0 0.0
        %589 = vmatpush2.msra.mxu0 0.0
        %590 = vmatprep.subr.mxu0 0.0
        %591 = vmatpush2.msra.mxu0 0.0
        %592 = vmatprep.subr.mxu0 0.0
        %593 = vmatpush2.msra.mxu0 0.0
        %594 = vmatprep.subr.mxu0 0.0
        %595 = vmatpush2.msra.mxu0 0.0
        %596 = vmatprep.subr.mxu0 0.0
        %597 = vmatpush2.msra.mxu0 0.0
        %598 = vmatprep.subr.mxu0 0.0
        %599 = vmatpush2.msra.mxu0 0.0
        %600 = vmatprep.subr.mxu0 0.0
        %601 = vmatpush2.msra.mxu0 0.0
        %602 = vmatprep.subr.mxu0 0.0
        %603 = vmatpush2.msra.mxu0 0.0
        %604 = vmatprep.subr.mxu0 0.0
        %605 = vmatpush2.msra.mxu0 0.0
        %606 = vmatprep.subr.mxu0 0.0
        %607 = vmatpush2.msra.mxu0 0.0
        %608 = vmatprep.subr.mxu0 0.0
        %609 = vmatpush2.msra.mxu0 0.0
        %610 = vmatprep.subr.mxu0 0.0
        %611 = vmatpush2.msra.mxu0 0.0
        %612 = vmatprep.subr.mxu0 0.0
        %613 = vmatpush2.msra.mxu0 0.0
        %614 = vmatprep.mubr.f32.mxu0 0.0
        %615 = vmatmul.mubr.f32.gmra.mxu0 %v539
        %v616 = vpop.f32.mrf.mxu0
        %v617 = vadd.f32 0.0, %v616
        %v618 = vpop.f32.mrf.mxu0
        %v619 = vadd.f32 0.0, %v618
        %620 = vmatprep.mubr.f32.mxu0 0.0
        %621 = vmatmul.mubr.f32.gmra.mxu0 %v542
        %v622 = vpop.f32.mrf.mxu0
        %v623 = vadd.f32 0.0, %v622
        %v624 = vpop.f32.mrf.mxu0
        %v625 = vadd.f32 0.0, %v624
        %626 = vmatprep.mubr.f32.mxu0 0.0
        %627 = vmatmul.mubr.f32.gmra.mxu0 %v545
        %v628 = vpop.f32.mrf.mxu0
        %v629 = vadd.f32 0.0, %v628
        %v630 = vpop.f32.mrf.mxu0
        %v631 = vadd.f32 0.0, %v630
        %632 = vmatprep.mubr.f32.mxu0 0.0
        %633 = vmatmul.mubr.f32.gmra.mxu0 %v548
        %v634 = vpop.f32.mrf.mxu0
        %v635 = vadd.f32 0.0, %v634
        %v636 = vpop.f32.mrf.mxu0
        %v637 = vadd.f32 0.0, %v636
        %638 = vdwg.mxu0
        %v640 = vsel %vm537, %v512, 0
        %v643 = vsel %vm537, %v513, 0
        %v646 = vsel %vm537, %v514, 0
        %v649 = vsel %vm537, %v515, 0
        %651 = vmatprep.subr.mxu0 0.0
        %652 = vmatpush1.msra.mxu0 0.0
        %653 = vmatprep.subr.mxu0 0.0
        %654 = vmatpush1.msra.mxu0 0.0
        %655 = vmatprep.subr.mxu0 0.0
        %656 = vmatpush1.msra.mxu0 0.0
        %657 = vmatprep.subr.mxu0 0.0
        %658 = vmatpush1.msra.mxu0 0.0
        %659 = vmatprep.subr.mxu0 0.0
        %660 = vmatpush1.msra.mxu0 0.0
        %661 = vmatprep.subr.mxu0 0.0
        %662 = vmatpush1.msra.mxu0 0.0
        %663 = vmatprep.subr.mxu0 0.0
        %664 = vmatpush1.msra.mxu0 0.0
        %665 = vmatprep.subr.mxu0 0.0
        %666 = vmatpush1.msra.mxu0 0.0
        %667 = vmatprep.subr.mxu0 0.0
        %668 = vmatpush1.msra.mxu0 0.0
        %669 = vmatprep.subr.mxu0 0.0
        %670 = vmatpush1.msra.mxu0 0.0
        %671 = vmatprep.subr.mxu0 0.0
        %672 = vmatpush1.msra.mxu0 0.0
        %673 = vmatprep.subr.mxu0 0.0
        %674 = vmatpush1.msra.mxu0 0.0
        %675 = vmatprep.subr.mxu0 %v523
        %676 = vmatpush1.msra.mxu0 %v522
        %677 = vmatprep.subr.mxu0 %v521
        %678 = vmatpush1.msra.mxu0 %v520
        %679 = vmatprep.subr.mxu0 %v519
        %680 = vmatpush1.msra.mxu0 %v518
        %681 = vmatprep.subr.mxu0 %v517
        %682 = vmatpush1.msra.mxu0 %v516
        %683 = vmatprep.subr.mxu0 0.0
        %684 = vmatpush2.msra.mxu0 0.0
        %685 = vmatprep.subr.mxu0 0.0
        %686 = vmatpush2.msra.mxu0 0.0
        %687 = vmatprep.subr.mxu0 0.0
        %688 = vmatpush2.msra.mxu0 0.0
        %689 = vmatprep.subr.mxu0 0.0
        %690 = vmatpush2.msra.mxu0 0.0
        %691 = vmatprep.subr.mxu0 0.0
        %692 = vmatpush2.msra.mxu0 0.0
        %693 = vmatprep.subr.mxu0 0.0
        %694 = vmatpush2.msra.mxu0 0.0
        %695 = vmatprep.subr.mxu0 0.0
        %696 = vmatpush2.msra.mxu0 0.0
        %697 = vmatprep.subr.mxu0 0.0
        %698 = vmatpush2.msra.mxu0 0.0
        %699 = vmatprep.subr.mxu0 0.0
        %700 = vmatpush2.msra.mxu0 0.0
        %701 = vmatprep.subr.mxu0 0.0
        %702 = vmatpush2.msra.mxu0 0.0
        %703 = vmatprep.subr.mxu0 0.0
        %704 = vmatpush2.msra.mxu0 0.0
        %705 = vmatprep.subr.mxu0 0.0
        %706 = vmatpush2.msra.mxu0 0.0
        %707 = vmatprep.subr.mxu0 0.0
        %708 = vmatpush2.msra.mxu0 0.0
        %709 = vmatprep.subr.mxu0 0.0
        %710 = vmatpush2.msra.mxu0 0.0
        %711 = vmatprep.subr.mxu0 0.0
        %712 = vmatpush2.msra.mxu0 0.0
        %713 = vmatprep.subr.mxu0 0.0
        %714 = vmatpush2.msra.mxu0 0.0
        %715 = vmatprep.mubr.f32.mxu0 0.0
        %716 = vmatmul.mubr.f32.gmra.mxu0 %v640
        %v717 = vpop.f32.mrf.mxu0
        %v718 = vadd.f32 %v617, %v717
        %v719 = vpop.f32.mrf.mxu0
        %v720 = vadd.f32 %v619, %v719
        %721 = vmatprep.mubr.f32.mxu0 0.0
        %722 = vmatmul.mubr.f32.gmra.mxu0 %v643
        %v723 = vpop.f32.mrf.mxu0
        %v724 = vadd.f32 %v623, %v723
        %v725 = vpop.f32.mrf.mxu0
        %v726 = vadd.f32 %v625, %v725
        %727 = vmatprep.mubr.f32.mxu0 0.0
        %728 = vmatmul.mubr.f32.gmra.mxu0 %v646
        %v729 = vpop.f32.mrf.mxu0
        %v730 = vadd.f32 %v629, %v729
        %v731 = vpop.f32.mrf.mxu0
        %v732 = vadd.f32 %v631, %v731
        %733 = vmatprep.mubr.f32.mxu0 0.0
        %734 = vmatmul.mubr.f32.gmra.mxu0 %v649
        %v735 = vpop.f32.mrf.mxu0
        %v736 = vadd.f32 %v635, %v735
        %v737 = vpop.f32.mrf.mxu0
        %v738 = vadd.f32 %v637, %v737
        %739 = vdwg.mxu0
        %v740 = vld [vmem:[%s466 + $0x2] sm:$0xff]
        %v741 = vld [vmem:[%s466 + $0xa] sm:$0xff]
        %v742 = vld [vmem:[%s466 + $0x12] sm:$0xff]
        %v743 = vld [vmem:[%s466 + $0x1a] sm:$0xf]
        %s744 = scalar_lea.vmem %s1, 128
        %v745 = vld [vmem:[%s744] sm:$0xff]
        %v746 = vld [vmem:[%s744 + $0x8] sm:$0xff]
        %v747 = vld [vmem:[%s744 + $0x10] sm:$0xff]
        %v748 = vld [vmem:[%s744 + $0x18] sm:$0xff]
        %v749 = vld [vmem:[%s744 + $0x20] sm:$0xff]
        %v750 = vld [vmem:[%s744 + $0x28] sm:$0xff]
        %v751 = vld [vmem:[%s744 + $0x30] sm:$0xff]
        %v752 = vld [vmem:[%s744 + $0x38] sm:$0xff]
        %v754 = vsel %vm537, %v740, 0
        %v757 = vsel %vm537, %v741, 0
        %v760 = vsel %vm537, %v742, 0
        %v763 = vsel %vm537, %v743, 0
        %765 = vmatprep.subr.mxu0 0.0
        %766 = vmatpush1.msra.mxu0 0.0
        %767 = vmatprep.subr.mxu0 0.0
        %768 = vmatpush1.msra.mxu0 0.0
        %769 = vmatprep.subr.mxu0 0.0
        %770 = vmatpush1.msra.mxu0 0.0
        %771 = vmatprep.subr.mxu0 0.0
        %772 = vmatpush1.msra.mxu0 0.0
        %773 = vmatprep.subr.mxu0 0.0
        %774 = vmatpush1.msra.mxu0 0.0
        %775 = vmatprep.subr.mxu0 0.0
        %776 = vmatpush1.msra.mxu0 0.0
        %777 = vmatprep.subr.mxu0 0.0
        %778 = vmatpush1.msra.mxu0 0.0
        %779 = vmatprep.subr.mxu0 0.0
        %780 = vmatpush1.msra.mxu0 0.0
        %781 = vmatprep.subr.mxu0 0.0
        %782 = vmatpush1.msra.mxu0 0.0
        %783 = vmatprep.subr.mxu0 0.0
        %784 = vmatpush1.msra.mxu0 0.0
        %785 = vmatprep.subr.mxu0 0.0
        %786 = vmatpush1.msra.mxu0 0.0
        %787 = vmatprep.subr.mxu0 0.0
        %788 = vmatpush1.msra.mxu0 0.0
        %789 = vmatprep.subr.mxu0 %v752
        %790 = vmatpush1.msra.mxu0 %v751
        %791 = vmatprep.subr.mxu0 %v750
        %792 = vmatpush1.msra.mxu0 %v749
        %793 = vmatprep.subr.mxu0 %v748
        %794 = vmatpush1.msra.mxu0 %v747
        %795 = vmatprep.subr.mxu0 %v746
        %796 = vmatpush1.msra.mxu0 %v745
        %797 = vmatprep.subr.mxu0 0.0
        %798 = vmatpush2.msra.mxu0 0.0
        %799 = vmatprep.subr.mxu0 0.0
        %800 = vmatpush2.msra.mxu0 0.0
        %801 = vmatprep.subr.mxu0 0.0
        %802 = vmatpush2.msra.mxu0 0.0
        %803 = vmatprep.subr.mxu0 0.0
        %804 = vmatpush2.msra.mxu0 0.0
        %805 = vmatprep.subr.mxu0 0.0
        %806 = vmatpush2.msra.mxu0 0.0
        %807 = vmatprep.subr.mxu0 0.0
        %808 = vmatpush2.msra.mxu0 0.0
        %809 = vmatprep.subr.mxu0 0.0
        %810 = vmatpush2.msra.mxu0 0.0
        %811 = vmatprep.subr.mxu0 0.0
        %812 = vmatpush2.msra.mxu0 0.0
        %813 = vmatprep.subr.mxu0 0.0
        %814 = vmatpush2.msra.mxu0 0.0
        %815 = vmatprep.subr.mxu0 0.0
        %816 = vmatpush2.msra.mxu0 0.0
        %817 = vmatprep.subr.mxu0 0.0
        %818 = vmatpush2.msra.mxu0 0.0
        %819 = vmatprep.subr.mxu0 0.0
        %820 = vmatpush2.msra.mxu0 0.0
        %821 = vmatprep.subr.mxu0 0.0
        %822 = vmatpush2.msra.mxu0 0.0
        %823 = vmatprep.subr.mxu0 0.0
        %824 = vmatpush2.msra.mxu0 0.0
        %825 = vmatprep.subr.mxu0 0.0
        %826 = vmatpush2.msra.mxu0 0.0
        %827 = vmatprep.subr.mxu0 0.0
        %828 = vmatpush2.msra.mxu0 0.0
        %829 = vmatprep.mubr.f32.mxu0 0.0
        %830 = vmatmul.mubr.f32.gmra.mxu0 %v754
        %v831 = vpop.f32.mrf.mxu0
        %v832 = vadd.f32 0.0, %v831
        %v833 = vpop.f32.mrf.mxu0
        %v834 = vadd.f32 0.0, %v833
        %835 = vmatprep.mubr.f32.mxu0 0.0
        %836 = vmatmul.mubr.f32.gmra.mxu0 %v757
        %v837 = vpop.f32.mrf.mxu0
        %v838 = vadd.f32 0.0, %v837
        %v839 = vpop.f32.mrf.mxu0
        %v840 = vadd.f32 0.0, %v839
        %841 = vmatprep.mubr.f32.mxu0 0.0
        %842 = vmatmul.mubr.f32.gmra.mxu0 %v760
        %v843 = vpop.f32.mrf.mxu0
        %v844 = vadd.f32 0.0, %v843
        %v845 = vpop.f32.mrf.mxu0
        %v846 = vadd.f32 0.0, %v845
        %847 = vmatprep.mubr.f32.mxu0 0.0
        %848 = vmatmul.mubr.f32.gmra.mxu0 %v763
        %v849 = vpop.f32.mrf.mxu0
        %v850 = vadd.f32 0.0, %v849
        %v851 = vpop.f32.mrf.mxu0
        %v852 = vadd.f32 0.0, %v851
        %853 = vdwg.mxu0
        %v854 = vadd.f32 %v718, %v832
        %v855 = vadd.f32 %v720, %v834
        %v856 = vadd.f32 %v724, %v838
        %v857 = vadd.f32 %v726, %v840
        %v858 = vadd.f32 %v730, %v844
        %v859 = vadd.f32 %v732, %v846
        %v860 = vadd.f32 %v736, %v850
        %v861 = vadd.f32 %v738, %v852
        %v862 = vld [vmem:[%s466 + $0x3] sm:$0xff]
        %v863 = vld [vmem:[%s466 + $0xb] sm:$0xff]
        %v864 = vld [vmem:[%s466 + $0x13] sm:$0xff]
        %v865 = vld [vmem:[%s466 + $0x1b] sm:$0xf]
        %s866 = scalar_lea.vmem %s1, 192
        %v867 = vld [vmem:[%s866] sm:$0xff]
        %v868 = vld [vmem:[%s866 + $0x8] sm:$0xff]
        %v869 = vld [vmem:[%s866 + $0x10] sm:$0xff]
        %v870 = vld [vmem:[%s866 + $0x18] sm:$0xff]
        %v871 = vld [vmem:[%s866 + $0x20] sm:$0xff]
        %v872 = vld [vmem:[%s866 + $0x28] sm:$0xff]
        %v873 = vld [vmem:[%s866 + $0x30] sm:$0xff]
        %v874 = vld [vmem:[%s866 + $0x38] sm:$0xff]
        %v876 = vsel %vm537, %v862, 0
        %v879 = vsel %vm537, %v863, 0
        %v882 = vsel %vm537, %v864, 0
        %v885 = vsel %vm537, %v865, 0
        %887 = vmatprep.subr.mxu0 0.0
        %888 = vmatpush1.msra.mxu0 0.0
        %889 = vmatprep.subr.mxu0 0.0
        %890 = vmatpush1.msra.mxu0 0.0
        %891 = vmatprep.subr.mxu0 0.0
        %892 = vmatpush1.msra.mxu0 0.0
        %893 = vmatprep.subr.mxu0 0.0
        %894 = vmatpush1.msra.mxu0 0.0
        %895 = vmatprep.subr.mxu0 0.0
        %896 = vmatpush1.msra.mxu0 0.0
        %897 = vmatprep.subr.mxu0 0.0
        %898 = vmatpush1.msra.mxu0 0.0
        %899 = vmatprep.subr.mxu0 0.0
        %900 = vmatpush1.msra.mxu0 0.0
        %901 = vmatprep.subr.mxu0 0.0
        %902 = vmatpush1.msra.mxu0 0.0
        %903 = vmatprep.subr.mxu0 0.0
        %904 = vmatpush1.msra.mxu0 0.0
        %905 = vmatprep.subr.mxu0 0.0
        %906 = vmatpush1.msra.mxu0 0.0
        %907 = vmatprep.subr.mxu0 0.0
        %908 = vmatpush1.msra.mxu0 0.0
        %909 = vmatprep.subr.mxu0 0.0
        %910 = vmatpush1.msra.mxu0 0.0
        %911 = vmatprep.subr.mxu0 %v874
        %912 = vmatpush1.msra.mxu0 %v873
        %913 = vmatprep.subr.mxu0 %v872
        %914 = vmatpush1.msra.mxu0 %v871
        %915 = vmatprep.subr.mxu0 %v870
        %916 = vmatpush1.msra.mxu0 %v869
        %917 = vmatprep.subr.mxu0 %v868
        %918 = vmatpush1.msra.mxu0 %v867
        %919 = vmatprep.subr.mxu0 0.0
        %920 = vmatpush2.msra.mxu0 0.0
        %921 = vmatprep.subr.mxu0 0.0
        %922 = vmatpush2.msra.mxu0 0.0
        %923 = vmatprep.subr.mxu0 0.0
        %924 = vmatpush2.msra.mxu0 0.0
        %925 = vmatprep.subr.mxu0 0.0
        %926 = vmatpush2.msra.mxu0 0.0
        %927 = vmatprep.subr.mxu0 0.0
        %928 = vmatpush2.msra.mxu0 0.0
        %929 = vmatprep.subr.mxu0 0.0
        %930 = vmatpush2.msra.mxu0 0.0
        %931 = vmatprep.subr.mxu0 0.0
        %932 = vmatpush2.msra.mxu0 0.0
        %933 = vmatprep.subr.mxu0 0.0
        %934 = vmatpush2.msra.mxu0 0.0
        %935 = vmatprep.subr.mxu0 0.0
        %936 = vmatpush2.msra.mxu0 0.0
        %937 = vmatprep.subr.mxu0 0.0
        %938 = vmatpush2.msra.mxu0 0.0
        %939 = vmatprep.subr.mxu0 0.0
        %940 = vmatpush2.msra.mxu0 0.0
        %941 = vmatprep.subr.mxu0 0.0
        %942 = vmatpush2.msra.mxu0 0.0
        %943 = vmatprep.subr.mxu0 0.0
        %944 = vmatpush2.msra.mxu0 0.0
        %945 = vmatprep.subr.mxu0 0.0
        %946 = vmatpush2.msra.mxu0 0.0
        %947 = vmatprep.subr.mxu0 0.0
        %948 = vmatpush2.msra.mxu0 0.0
        %949 = vmatprep.subr.mxu0 0.0
        %950 = vmatpush2.msra.mxu0 0.0
        %951 = vmatprep.mubr.f32.mxu0 0.0
        %952 = vmatmul.mubr.f32.gmra.mxu0 %v876
        %v953 = vpop.f32.mrf.mxu0
        %v954 = vadd.f32 0.0, %v953
        %v955 = vpop.f32.mrf.mxu0
        %v956 = vadd.f32 0.0, %v955
        %957 = vmatprep.mubr.f32.mxu0 0.0
        %958 = vmatmul.mubr.f32.gmra.mxu0 %v879
        %v959 = vpop.f32.mrf.mxu0
        %v960 = vadd.f32 0.0, %v959
        %v961 = vpop.f32.mrf.mxu0
        %v962 = vadd.f32 0.0, %v961
        %963 = vmatprep.mubr.f32.mxu0 0.0
        %964 = vmatmul.mubr.f32.gmra.mxu0 %v882
        %v965 = vpop.f32.mrf.mxu0
        %v966 = vadd.f32 0.0, %v965
        %v967 = vpop.f32.mrf.mxu0
        %v968 = vadd.f32 0.0, %v967
        %969 = vmatprep.mubr.f32.mxu0 0.0
        %970 = vmatmul.mubr.f32.gmra.mxu0 %v885
        %v971 = vpop.f32.mrf.mxu0
        %v972 = vadd.f32 0.0, %v971
        %v973 = vpop.f32.mrf.mxu0
        %v974 = vadd.f32 0.0, %v973
        %975 = vdwg.mxu0
        %v976 = vadd.f32 %v854, %v954
        %v977 = vadd.f32 %v855, %v956
        %v978 = vadd.f32 %v856, %v960
        %v979 = vadd.f32 %v857, %v962
        %v980 = vadd.f32 %v858, %v966
        %v981 = vadd.f32 %v859, %v968
        %v982 = vadd.f32 %v860, %v972
        %v983 = vadd.f32 %v861, %v974
        %v984 = vld [vmem:[%s466 + $0x4] sm:$0xff]
        %v985 = vld [vmem:[%s466 + $0xc] sm:$0xff]
        %v986 = vld [vmem:[%s466 + $0x14] sm:$0xff]
        %v987 = vld [vmem:[%s466 + $0x1c] sm:$0xf]
        %s988 = scalar_lea.vmem %s1, 256
        %v989 = vld [vmem:[%s988] sm:$0xff]
        %v990 = vld [vmem:[%s988 + $0x8] sm:$0xff]
        %v991 = vld [vmem:[%s988 + $0x10] sm:$0xff]
        %v992 = vld [vmem:[%s988 + $0x18] sm:$0xff]
        %v993 = vld [vmem:[%s988 + $0x20] sm:$0xff]
        %v994 = vld [vmem:[%s988 + $0x28] sm:$0xff]
        %v995 = vld [vmem:[%s988 + $0x30] sm:$0xff]
        %v996 = vld [vmem:[%s988 + $0x38] sm:$0xff]
        %v998 = vsel %vm537, %v984, 0
        %v1001 = vsel %vm537, %v985, 0
        %v1004 = vsel %vm537, %v986, 0
        %v1007 = vsel %vm537, %v987, 0
        %1009 = vmatprep.subr.mxu0 0.0
        %1010 = vmatpush1.msra.mxu0 0.0
        %1011 = vmatprep.subr.mxu0 0.0
        %1012 = vmatpush1.msra.mxu0 0.0
        %1013 = vmatprep.subr.mxu0 0.0
        %1014 = vmatpush1.msra.mxu0 0.0
        %1015 = vmatprep.subr.mxu0 0.0
        %1016 = vmatpush1.msra.mxu0 0.0
        %1017 = vmatprep.subr.mxu0 0.0
        %1018 = vmatpush1.msra.mxu0 0.0
        %1019 = vmatprep.subr.mxu0 0.0
        %1020 = vmatpush1.msra.mxu0 0.0
        %1021 = vmatprep.subr.mxu0 0.0
        %1022 = vmatpush1.msra.mxu0 0.0
        %1023 = vmatprep.subr.mxu0 0.0
        %1024 = vmatpush1.msra.mxu0 0.0
        %1025 = vmatprep.subr.mxu0 0.0
        %1026 = vmatpush1.msra.mxu0 0.0
        %1027 = vmatprep.subr.mxu0 0.0
        %1028 = vmatpush1.msra.mxu0 0.0
        %1029 = vmatprep.subr.mxu0 0.0
        %1030 = vmatpush1.msra.mxu0 0.0
        %1031 = vmatprep.subr.mxu0 0.0
        %1032 = vmatpush1.msra.mxu0 0.0
        %1033 = vmatprep.subr.mxu0 %v996
        %1034 = vmatpush1.msra.mxu0 %v995
        %1035 = vmatprep.subr.mxu0 %v994
        %1036 = vmatpush1.msra.mxu0 %v993
        %1037 = vmatprep.subr.mxu0 %v992
        %1038 = vmatpush1.msra.mxu0 %v991
        %1039 = vmatprep.subr.mxu0 %v990
        %1040 = vmatpush1.msra.mxu0 %v989
        %1041 = vmatprep.subr.mxu0 0.0
        %1042 = vmatpush2.msra.mxu0 0.0
        %1043 = vmatprep.subr.mxu0 0.0
        %1044 = vmatpush2.msra.mxu0 0.0
        %1045 = vmatprep.subr.mxu0 0.0
        %1046 = vmatpush2.msra.mxu0 0.0
        %1047 = vmatprep.subr.mxu0 0.0
        %1048 = vmatpush2.msra.mxu0 0.0
        %1049 = vmatprep.subr.mxu0 0.0
        %1050 = vmatpush2.msra.mxu0 0.0
        %1051 = vmatprep.subr.mxu0 0.0
        %1052 = vmatpush2.msra.mxu0 0.0
        %1053 = vmatprep.subr.mxu0 0.0
        %1054 = vmatpush2.msra.mxu0 0.0
        %1055 = vmatprep.subr.mxu0 0.0
        %1056 = vmatpush2.msra.mxu0 0.0
        %1057 = vmatprep.subr.mxu0 0.0
        %1058 = vmatpush2.msra.mxu0 0.0
        %1059 = vmatprep.subr.mxu0 0.0
        %1060 = vmatpush2.msra.mxu0 0.0
        %1061 = vmatprep.subr.mxu0 0.0
        %1062 = vmatpush2.msra.mxu0 0.0
        %1063 = vmatprep.subr.mxu0 0.0
        %1064 = vmatpush2.msra.mxu0 0.0
        %1065 = vmatprep.subr.mxu0 0.0
        %1066 = vmatpush2.msra.mxu0 0.0
        %1067 = vmatprep.subr.mxu0 0.0
        %1068 = vmatpush2.msra.mxu0 0.0
        %1069 = vmatprep.subr.mxu0 0.0
        %1070 = vmatpush2.msra.mxu0 0.0
        %1071 = vmatprep.subr.mxu0 0.0
        %1072 = vmatpush2.msra.mxu0 0.0
        %1073 = vmatprep.mubr.f32.mxu0 0.0
        %1074 = vmatmul.mubr.f32.gmra.mxu0 %v998
        %v1075 = vpop.f32.mrf.mxu0
        %v1076 = vadd.f32 0.0, %v1075
        %v1077 = vpop.f32.mrf.mxu0
        %v1078 = vadd.f32 0.0, %v1077
        %1079 = vmatprep.mubr.f32.mxu0 0.0
        %1080 = vmatmul.mubr.f32.gmra.mxu0 %v1001
        %v1081 = vpop.f32.mrf.mxu0
        %v1082 = vadd.f32 0.0, %v1081
        %v1083 = vpop.f32.mrf.mxu0
        %v1084 = vadd.f32 0.0, %v1083
        %1085 = vmatprep.mubr.f32.mxu0 0.0
        %1086 = vmatmul.mubr.f32.gmra.mxu0 %v1004
        %v1087 = vpop.f32.mrf.mxu0
        %v1088 = vadd.f32 0.0, %v1087
        %v1089 = vpop.f32.mrf.mxu0
        %v1090 = vadd.f32 0.0, %v1089
        %1091 = vmatprep.mubr.f32.mxu0 0.0
        %1092 = vmatmul.mubr.f32.gmra.mxu0 %v1007
        %v1093 = vpop.f32.mrf.mxu0
        %v1094 = vadd.f32 0.0, %v1093
        %v1095 = vpop.f32.mrf.mxu0
        %v1096 = vadd.f32 0.0, %v1095
        %1097 = vdwg.mxu0
        %v1098 = vadd.f32 %v976, %v1076
        %v1099 = vadd.f32 %v977, %v1078
        %v1100 = vadd.f32 %v978, %v1082
        %v1101 = vadd.f32 %v979, %v1084
        %v1102 = vadd.f32 %v980, %v1088
        %v1103 = vadd.f32 %v981, %v1090
        %v1104 = vadd.f32 %v982, %v1094
        %v1105 = vadd.f32 %v983, %v1096
        %s1106 = scalar_lea.vmem %s466, 32 [#allocation4]
        %v1107 = vld [vmem:[%s1106] sm:$0xff]
        %v1108 = vld [vmem:[%s1106 + $0x8] sm:$0xff]
        %v1109 = vld [vmem:[%s1106 + $0x10] sm:$0xff]
        %v1110 = vld [vmem:[%s1106 + $0x18] sm:$0xf]
        %s1111 = scalar_lea.vmem %s1, 320
        %v1112 = vld [vmem:[%s1111] sm:$0xff]
        %v1113 = vld [vmem:[%s1111 + $0x8] sm:$0xff]
        %v1114 = vld [vmem:[%s1111 + $0x10] sm:$0xff]
        %v1115 = vld [vmem:[%s1111 + $0x18] sm:$0xff]
        %v1116 = vld [vmem:[%s1111 + $0x20] sm:$0xff]
        %v1117 = vld [vmem:[%s1111 + $0x28] sm:$0xff]
        %v1118 = vld [vmem:[%s1111 + $0x30] sm:$0xff]
        %v1119 = vld [vmem:[%s1111 + $0x38] sm:$0xff]
        %v1121 = vsel %vm537, %v1107, 0
        %v1124 = vsel %vm537, %v1108, 0
        %v1127 = vsel %vm537, %v1109, 0
        %v1130 = vsel %vm537, %v1110, 0
        %1132 = vmatprep.subr.mxu0 0.0
        %1133 = vmatpush1.msra.mxu0 0.0
        %1134 = vmatprep.subr.mxu0 0.0
        %1135 = vmatpush1.msra.mxu0 0.0
        %1136 = vmatprep.subr.mxu0 0.0
        %1137 = vmatpush1.msra.mxu0 0.0
        %1138 = vmatprep.subr.mxu0 0.0
        %1139 = vmatpush1.msra.mxu0 0.0
        %1140 = vmatprep.subr.mxu0 0.0
        %1141 = vmatpush1.msra.mxu0 0.0
        %1142 = vmatprep.subr.mxu0 0.0
        %1143 = vmatpush1.msra.mxu0 0.0
        %1144 = vmatprep.subr.mxu0 0.0
        %1145 = vmatpush1.msra.mxu0 0.0
        %1146 = vmatprep.subr.mxu0 0.0
        %1147 = vmatpush1.msra.mxu0 0.0
        %1148 = vmatprep.subr.mxu0 0.0
        %1149 = vmatpush1.msra.mxu0 0.0
        %1150 = vmatprep.subr.mxu0 0.0
        %1151 = vmatpush1.msra.mxu0 0.0
        %1152 = vmatprep.subr.mxu0 0.0
        %1153 = vmatpush1.msra.mxu0 0.0
        %1154 = vmatprep.subr.mxu0 0.0
        %1155 = vmatpush1.msra.mxu0 0.0
        %1156 = vmatprep.subr.mxu0 %v1119
        %1157 = vmatpush1.msra.mxu0 %v1118
        %1158 = vmatprep.subr.mxu0 %v1117
        %1159 = vmatpush1.msra.mxu0 %v1116
        %1160 = vmatprep.subr.mxu0 %v1115
        %1161 = vmatpush1.msra.mxu0 %v1114
        %1162 = vmatprep.subr.mxu0 %v1113
        %1163 = vmatpush1.msra.mxu0 %v1112
        %1164 = vmatprep.subr.mxu0 0.0
        %1165 = vmatpush2.msra.mxu0 0.0
        %1166 = vmatprep.subr.mxu0 0.0
        %1167 = vmatpush2.msra.mxu0 0.0
        %1168 = vmatprep.subr.mxu0 0.0
        %1169 = vmatpush2.msra.mxu0 0.0
        %1170 = vmatprep.subr.mxu0 0.0
        %1171 = vmatpush2.msra.mxu0 0.0
        %1172 = vmatprep.subr.mxu0 0.0
        %1173 = vmatpush2.msra.mxu0 0.0
        %1174 = vmatprep.subr.mxu0 0.0
        %1175 = vmatpush2.msra.mxu0 0.0
        %1176 = vmatprep.subr.mxu0 0.0
        %1177 = vmatpush2.msra.mxu0 0.0
        %1178 = vmatprep.subr.mxu0 0.0
        %1179 = vmatpush2.msra.mxu0 0.0
        %1180 = vmatprep.subr.mxu0 0.0
        %1181 = vmatpush2.msra.mxu0 0.0
        %1182 = vmatprep.subr.mxu0 0.0
        %1183 = vmatpush2.msra.mxu0 0.0
        %1184 = vmatprep.subr.mxu0 0.0
        %1185 = vmatpush2.msra.mxu0 0.0
        %1186 = vmatprep.subr.mxu0 0.0
        %1187 = vmatpush2.msra.mxu0 0.0
        %1188 = vmatprep.subr.mxu0 0.0
        %1189 = vmatpush2.msra.mxu0 0.0
        %1190 = vmatprep.subr.mxu0 0.0
        %1191 = vmatpush2.msra.mxu0 0.0
        %1192 = vmatprep.subr.mxu0 0.0
        %1193 = vmatpush2.msra.mxu0 0.0
        %1194 = vmatprep.subr.mxu0 0.0
        %1195 = vmatpush2.msra.mxu0 0.0
        %1196 = vmatprep.mubr.f32.mxu0 0.0
        %1197 = vmatmul.mubr.f32.gmra.mxu0 %v1121
        %v1198 = vpop.f32.mrf.mxu0
        %v1199 = vadd.f32 0.0, %v1198
        %v1200 = vpop.f32.mrf.mxu0
        %v1201 = vadd.f32 0.0, %v1200
        %1202 = vmatprep.mubr.f32.mxu0 0.0
        %1203 = vmatmul.mubr.f32.gmra.mxu0 %v1124
        %v1204 = vpop.f32.mrf.mxu0
        %v1205 = vadd.f32 0.0, %v1204
        %v1206 = vpop.f32.mrf.mxu0
        %v1207 = vadd.f32 0.0, %v1206
        %1208 = vmatprep.mubr.f32.mxu0 0.0
        %1209 = vmatmul.mubr.f32.gmra.mxu0 %v1127
        %v1210 = vpop.f32.mrf.mxu0
        %v1211 = vadd.f32 0.0, %v1210
        %v1212 = vpop.f32.mrf.mxu0
        %v1213 = vadd.f32 0.0, %v1212
        %1214 = vmatprep.mubr.f32.mxu0 0.0
        %1215 = vmatmul.mubr.f32.gmra.mxu0 %v1130
        %v1216 = vpop.f32.mrf.mxu0
        %v1217 = vadd.f32 0.0, %v1216
        %v1218 = vpop.f32.mrf.mxu0
        %v1219 = vadd.f32 0.0, %v1218
        %1220 = vdwg.mxu0
        %v1221 = vadd.f32 %v1098, %v1199
        %v1222 = vadd.f32 %v1099, %v1201
        %v1223 = vadd.f32 %v1100, %v1205
        %v1224 = vadd.f32 %v1101, %v1207
        %v1225 = vadd.f32 %v1102, %v1211
        %v1226 = vadd.f32 %v1103, %v1213
        %v1227 = vadd.f32 %v1104, %v1217
        %v1228 = vadd.f32 %v1105, %v1219
        %v1229 = vld [vmem:[%s1106 + $0x1] sm:$0xff]
        %v1230 = vld [vmem:[%s1106 + $0x9] sm:$0xff]
        %v1231 = vld [vmem:[%s1106 + $0x11] sm:$0xff]
        %v1232 = vld [vmem:[%s1106 + $0x19] sm:$0xf]
        %s1233 = scalar_lea.vmem %s1, 384
        %v1234 = vld [vmem:[%s1233] sm:$0xff]
        %v1235 = vld [vmem:[%s1233 + $0x8] sm:$0xff]
        %v1236 = vld [vmem:[%s1233 + $0x10] sm:$0xff]
        %v1237 = vld [vmem:[%s1233 + $0x18] sm:$0xff]
        %v1238 = vld [vmem:[%s1233 + $0x20] sm:$0xff]
        %v1239 = vld [vmem:[%s1233 + $0x28] sm:$0xff]
        %v1240 = vld [vmem:[%s1233 + $0x30] sm:$0xff]
        %v1241 = vld [vmem:[%s1233 + $0x38] sm:$0xff]
        %v1243 = vsel %vm537, %v1229, 0
        %v1246 = vsel %vm537, %v1230, 0
        %v1249 = vsel %vm537, %v1231, 0
        %v1252 = vsel %vm537, %v1232, 0
        %1254 = vmatprep.subr.mxu0 0.0
        %1255 = vmatpush1.msra.mxu0 0.0
        %1256 = vmatprep.subr.mxu0 0.0
        %1257 = vmatpush1.msra.mxu0 0.0
        %1258 = vmatprep.subr.mxu0 0.0
        %1259 = vmatpush1.msra.mxu0 0.0
        %1260 = vmatprep.subr.mxu0 0.0
        %1261 = vmatpush1.msra.mxu0 0.0
        %1262 = vmatprep.subr.mxu0 0.0
        %1263 = vmatpush1.msra.mxu0 0.0
        %1264 = vmatprep.subr.mxu0 0.0
        %1265 = vmatpush1.msra.mxu0 0.0
        %1266 = vmatprep.subr.mxu0 0.0
        %1267 = vmatpush1.msra.mxu0 0.0
        %1268 = vmatprep.subr.mxu0 0.0
        %1269 = vmatpush1.msra.mxu0 0.0
        %1270 = vmatprep.subr.mxu0 0.0
        %1271 = vmatpush1.msra.mxu0 0.0
        %1272 = vmatprep.subr.mxu0 0.0
        %1273 = vmatpush1.msra.mxu0 0.0
        %1274 = vmatprep.subr.mxu0 0.0
        %1275 = vmatpush1.msra.mxu0 0.0
        %1276 = vmatprep.subr.mxu0 0.0
        %1277 = vmatpush1.msra.mxu0 0.0
        %1278 = vmatprep.subr.mxu0 %v1241
        %1279 = vmatpush1.msra.mxu0 %v1240
        %1280 = vmatprep.subr.mxu0 %v1239
        %1281 = vmatpush1.msra.mxu0 %v1238
        %1282 = vmatprep.subr.mxu0 %v1237
        %1283 = vmatpush1.msra.mxu0 %v1236
        %1284 = vmatprep.subr.mxu0 %v1235
        %1285 = vmatpush1.msra.mxu0 %v1234
        %1286 = vmatprep.subr.mxu0 0.0
        %1287 = vmatpush2.msra.mxu0 0.0
        %1288 = vmatprep.subr.mxu0 0.0
        %1289 = vmatpush2.msra.mxu0 0.0
        %1290 = vmatprep.subr.mxu0 0.0
        %1291 = vmatpush2.msra.mxu0 0.0
        %1292 = vmatprep.subr.mxu0 0.0
        %1293 = vmatpush2.msra.mxu0 0.0
        %1294 = vmatprep.subr.mxu0 0.0
        %1295 = vmatpush2.msra.mxu0 0.0
        %1296 = vmatprep.subr.mxu0 0.0
        %1297 = vmatpush2.msra.mxu0 0.0
        %1298 = vmatprep.subr.mxu0 0.0
        %1299 = vmatpush2.msra.mxu0 0.0
        %1300 = vmatprep.subr.mxu0 0.0
        %1301 = vmatpush2.msra.mxu0 0.0
        %1302 = vmatprep.subr.mxu0 0.0
        %1303 = vmatpush2.msra.mxu0 0.0
        %1304 = vmatprep.subr.mxu0 0.0
        %1305 = vmatpush2.msra.mxu0 0.0
        %1306 = vmatprep.subr.mxu0 0.0
        %1307 = vmatpush2.msra.mxu0 0.0
        %1308 = vmatprep.subr.mxu0 0.0
        %1309 = vmatpush2.msra.mxu0 0.0
        %1310 = vmatprep.subr.mxu0 0.0
        %1311 = vmatpush2.msra.mxu0 0.0
        %1312 = vmatprep.subr.mxu0 0.0
        %1313 = vmatpush2.msra.mxu0 0.0
        %1314 = vmatprep.subr.mxu0 0.0
        %1315 = vmatpush2.msra.mxu0 0.0
        %1316 = vmatprep.subr.mxu0 0.0
        %1317 = vmatpush2.msra.mxu0 0.0
        %1318 = vmatprep.mubr.f32.mxu0 0.0
        %1319 = vmatmul.mubr.f32.gmra.mxu0 %v1243
        %v1320 = vpop.f32.mrf.mxu0
        %v1321 = vadd.f32 0.0, %v1320
        %v1322 = vpop.f32.mrf.mxu0
        %v1323 = vadd.f32 0.0, %v1322
        %1324 = vmatprep.mubr.f32.mxu0 0.0
        %1325 = vmatmul.mubr.f32.gmra.mxu0 %v1246
        %v1326 = vpop.f32.mrf.mxu0
        %v1327 = vadd.f32 0.0, %v1326
        %v1328 = vpop.f32.mrf.mxu0
        %v1329 = vadd.f32 0.0, %v1328
        %1330 = vmatprep.mubr.f32.mxu0 0.0
        %1331 = vmatmul.mubr.f32.gmra.mxu0 %v1249
        %v1332 = vpop.f32.mrf.mxu0
        %v1333 = vadd.f32 0.0, %v1332
        %v1334 = vpop.f32.mrf.mxu0
        %v1335 = vadd.f32 0.0, %v1334
        %1336 = vmatprep.mubr.f32.mxu0 0.0
        %1337 = vmatmul.mubr.f32.gmra.mxu0 %v1252
        %v1338 = vpop.f32.mrf.mxu0
        %v1339 = vadd.f32 0.0, %v1338
        %v1340 = vpop.f32.mrf.mxu0
        %v1341 = vadd.f32 0.0, %v1340
        %1342 = vdwg.mxu0
        %v1343 = vadd.f32 %v1221, %v1321
        %v1344 = vadd.f32 %v1222, %v1323
        %v1345 = vadd.f32 %v1223, %v1327
        %v1346 = vadd.f32 %v1224, %v1329
        %v1347 = vadd.f32 %v1225, %v1333
        %v1348 = vadd.f32 %v1226, %v1335
        %v1349 = vadd.f32 %v1227, %v1339
        %v1350 = vadd.f32 %v1228, %v1341
        %v1351 = vld [vmem:[%s1106 + $0x2] sm:$0xff]
        %v1352 = vld [vmem:[%s1106 + $0xa] sm:$0xff]
        %v1353 = vld [vmem:[%s1106 + $0x12] sm:$0xff]
        %v1354 = vld [vmem:[%s1106 + $0x1a] sm:$0xf]
        %s1355 = scalar_lea.vmem %s1, 448
        %v1356 = vld [vmem:[%s1355] sm:$0xff]
        %v1357 = vld [vmem:[%s1355 + $0x8] sm:$0xff]
        %v1358 = vld [vmem:[%s1355 + $0x10] sm:$0xff]
        %v1359 = vld [vmem:[%s1355 + $0x18] sm:$0xff]
        %v1360 = vld [vmem:[%s1355 + $0x20] sm:$0xff]
        %v1361 = vld [vmem:[%s1355 + $0x28] sm:$0xff]
        %v1362 = vld [vmem:[%s1355 + $0x30] sm:$0xff]
        %v1363 = vld [vmem:[%s1355 + $0x38] sm:$0xff]
        %v1365 = vsel %vm537, %v1351, 0
        %v1368 = vsel %vm537, %v1352, 0
        %v1371 = vsel %vm537, %v1353, 0
        %v1374 = vsel %vm537, %v1354, 0
        %1376 = vmatprep.subr.mxu0 0.0
        %1377 = vmatpush1.msra.mxu0 0.0
        %1378 = vmatprep.subr.mxu0 0.0
        %1379 = vmatpush1.msra.mxu0 0.0
        %1380 = vmatprep.subr.mxu0 0.0
        %1381 = vmatpush1.msra.mxu0 0.0
        %1382 = vmatprep.subr.mxu0 0.0
        %1383 = vmatpush1.msra.mxu0 0.0
        %1384 = vmatprep.subr.mxu0 0.0
        %1385 = vmatpush1.msra.mxu0 0.0
        %1386 = vmatprep.subr.mxu0 0.0
        %1387 = vmatpush1.msra.mxu0 0.0
        %1388 = vmatprep.subr.mxu0 0.0
        %1389 = vmatpush1.msra.mxu0 0.0
        %1390 = vmatprep.subr.mxu0 0.0
        %1391 = vmatpush1.msra.mxu0 0.0
        %1392 = vmatprep.subr.mxu0 0.0
        %1393 = vmatpush1.msra.mxu0 0.0
        %1394 = vmatprep.subr.mxu0 0.0
        %1395 = vmatpush1.msra.mxu0 0.0
        %1396 = vmatprep.subr.mxu0 0.0
        %1397 = vmatpush1.msra.mxu0 0.0
        %1398 = vmatprep.subr.mxu0 0.0
        %1399 = vmatpush1.msra.mxu0 0.0
        %1400 = vmatprep.subr.mxu0 %v1363
        %1401 = vmatpush1.msra.mxu0 %v1362
        %1402 = vmatprep.subr.mxu0 %v1361
        %1403 = vmatpush1.msra.mxu0 %v1360
        %1404 = vmatprep.subr.mxu0 %v1359
        %1405 = vmatpush1.msra.mxu0 %v1358
        %1406 = vmatprep.subr.mxu0 %v1357
        %1407 = vmatpush1.msra.mxu0 %v1356
        %1408 = vmatprep.subr.mxu0 0.0
        %1409 = vmatpush2.msra.mxu0 0.0
        %1410 = vmatprep.subr.mxu0 0.0
        %1411 = vmatpush2.msra.mxu0 0.0
        %1412 = vmatprep.subr.mxu0 0.0
        %1413 = vmatpush2.msra.mxu0 0.0
        %1414 = vmatprep.subr.mxu0 0.0
        %1415 = vmatpush2.msra.mxu0 0.0
        %1416 = vmatprep.subr.mxu0 0.0
        %1417 = vmatpush2.msra.mxu0 0.0
        %1418 = vmatprep.subr.mxu0 0.0
        %1419 = vmatpush2.msra.mxu0 0.0
        %1420 = vmatprep.subr.mxu0 0.0
        %1421 = vmatpush2.msra.mxu0 0.0
        %1422 = vmatprep.subr.mxu0 0.0
        %1423 = vmatpush2.msra.mxu0 0.0
        %1424 = vmatprep.subr.mxu0 0.0
        %1425 = vmatpush2.msra.mxu0 0.0
        %1426 = vmatprep.subr.mxu0 0.0
        %1427 = vmatpush2.msra.mxu0 0.0
        %1428 = vmatprep.subr.mxu0 0.0
        %1429 = vmatpush2.msra.mxu0 0.0
        %1430 = vmatprep.subr.mxu0 0.0
        %1431 = vmatpush2.msra.mxu0 0.0
        %1432 = vmatprep.subr.mxu0 0.0
        %1433 = vmatpush2.msra.mxu0 0.0
        %1434 = vmatprep.subr.mxu0 0.0
        %1435 = vmatpush2.msra.mxu0 0.0
        %1436 = vmatprep.subr.mxu0 0.0
        %1437 = vmatpush2.msra.mxu0 0.0
        %1438 = vmatprep.subr.mxu0 0.0
        %1439 = vmatpush2.msra.mxu0 0.0
        %1440 = vmatprep.mubr.f32.mxu0 0.0
        %1441 = vmatmul.mubr.f32.gmra.mxu0 %v1365
        %v1442 = vpop.f32.mrf.mxu0
        %v1443 = vadd.f32 0.0, %v1442
        %v1444 = vpop.f32.mrf.mxu0
        %v1445 = vadd.f32 0.0, %v1444
        %1446 = vmatprep.mubr.f32.mxu0 0.0
        %1447 = vmatmul.mubr.f32.gmra.mxu0 %v1368
        %v1448 = vpop.f32.mrf.mxu0
        %v1449 = vadd.f32 0.0, %v1448
        %v1450 = vpop.f32.mrf.mxu0
        %v1451 = vadd.f32 0.0, %v1450
        %1452 = vmatprep.mubr.f32.mxu0 0.0
        %1453 = vmatmul.mubr.f32.gmra.mxu0 %v1371
        %v1454 = vpop.f32.mrf.mxu0
        %v1455 = vadd.f32 0.0, %v1454
        %v1456 = vpop.f32.mrf.mxu0
        %v1457 = vadd.f32 0.0, %v1456
        %1458 = vmatprep.mubr.f32.mxu0 0.0
        %1459 = vmatmul.mubr.f32.gmra.mxu0 %v1374
        %v1460 = vpop.f32.mrf.mxu0
        %v1461 = vadd.f32 0.0, %v1460
        %v1462 = vpop.f32.mrf.mxu0
        %v1463 = vadd.f32 0.0, %v1462
        %1464 = vdwg.mxu0
        %v1465 = vadd.f32 %v1343, %v1443
        %v1466 = vadd.f32 %v1344, %v1445
        %v1467 = vadd.f32 %v1345, %v1449
        %v1468 = vadd.f32 %v1346, %v1451
        %v1469 = vadd.f32 %v1347, %v1455
        %v1470 = vadd.f32 %v1348, %v1457
        %v1471 = vadd.f32 %v1349, %v1461
        %v1472 = vadd.f32 %v1350, %v1463
        %v1473 = vld [vmem:[%s1106 + $0x3] sm:$0xff]
        %v1474 = vld [vmem:[%s1106 + $0xb] sm:$0xff]
        %v1475 = vld [vmem:[%s1106 + $0x13] sm:$0xff]
        %v1476 = vld [vmem:[%s1106 + $0x1b] sm:$0xf]
        %s1477 = scalar_lea.vmem %s1, 512
        %v1478 = vld [vmem:[%s1477] sm:$0xff]
        %v1479 = vld [vmem:[%s1477 + $0x8] sm:$0xff]
        %v1480 = vld [vmem:[%s1477 + $0x10] sm:$0xff]
        %v1481 = vld [vmem:[%s1477 + $0x18] sm:$0xff]
        %v1482 = vld [vmem:[%s1477 + $0x20] sm:$0xff]
        %v1483 = vld [vmem:[%s1477 + $0x28] sm:$0xff]
        %v1484 = vld [vmem:[%s1477 + $0x30] sm:$0xff]
        %v1485 = vld [vmem:[%s1477 + $0x38] sm:$0xff]
        %v1487 = vsel %vm537, %v1473, 0
        %v1490 = vsel %vm537, %v1474, 0
        %v1493 = vsel %vm537, %v1475, 0
        %v1496 = vsel %vm537, %v1476, 0
        %1498 = vmatprep.subr.mxu0 0.0
        %1499 = vmatpush1.msra.mxu0 0.0
        %1500 = vmatprep.subr.mxu0 0.0
        %1501 = vmatpush1.msra.mxu0 0.0
        %1502 = vmatprep.subr.mxu0 0.0
        %1503 = vmatpush1.msra.mxu0 0.0
        %1504 = vmatprep.subr.mxu0 0.0
        %1505 = vmatpush1.msra.mxu0 0.0
        %1506 = vmatprep.subr.mxu0 0.0
        %1507 = vmatpush1.msra.mxu0 0.0
        %1508 = vmatprep.subr.mxu0 0.0
        %1509 = vmatpush1.msra.mxu0 0.0
        %1510 = vmatprep.subr.mxu0 0.0
        %1511 = vmatpush1.msra.mxu0 0.0
        %1512 = vmatprep.subr.mxu0 0.0
        %1513 = vmatpush1.msra.mxu0 0.0
        %1514 = vmatprep.subr.mxu0 0.0
        %1515 = vmatpush1.msra.mxu0 0.0
        %1516 = vmatprep.subr.mxu0 0.0
        %1517 = vmatpush1.msra.mxu0 0.0
        %1518 = vmatprep.subr.mxu0 0.0
        %1519 = vmatpush1.msra.mxu0 0.0
        %1520 = vmatprep.subr.mxu0 0.0
        %1521 = vmatpush1.msra.mxu0 0.0
        %1522 = vmatprep.subr.mxu0 %v1485
        %1523 = vmatpush1.msra.mxu0 %v1484
        %1524 = vmatprep.subr.mxu0 %v1483
        %1525 = vmatpush1.msra.mxu0 %v1482
        %1526 = vmatprep.subr.mxu0 %v1481
        %1527 = vmatpush1.msra.mxu0 %v1480
        %1528 = vmatprep.subr.mxu0 %v1479
        %1529 = vmatpush1.msra.mxu0 %v1478
        %1530 = vmatprep.subr.mxu0 0.0
        %1531 = vmatpush2.msra.mxu0 0.0
        %1532 = vmatprep.subr.mxu0 0.0
        %1533 = vmatpush2.msra.mxu0 0.0
        %1534 = vmatprep.subr.mxu0 0.0
        %1535 = vmatpush2.msra.mxu0 0.0
        %1536 = vmatprep.subr.mxu0 0.0
        %1537 = vmatpush2.msra.mxu0 0.0
        %1538 = vmatprep.subr.mxu0 0.0
        %1539 = vmatpush2.msra.mxu0 0.0
        %1540 = vmatprep.subr.mxu0 0.0
        %1541 = vmatpush2.msra.mxu0 0.0
        %1542 = vmatprep.subr.mxu0 0.0
        %1543 = vmatpush2.msra.mxu0 0.0
        %1544 = vmatprep.subr.mxu0 0.0
        %1545 = vmatpush2.msra.mxu0 0.0
        %1546 = vmatprep.subr.mxu0 0.0
        %1547 = vmatpush2.msra.mxu0 0.0
        %1548 = vmatprep.subr.mxu0 0.0
        %1549 = vmatpush2.msra.mxu0 0.0
        %1550 = vmatprep.subr.mxu0 0.0
        %1551 = vmatpush2.msra.mxu0 0.0
        %1552 = vmatprep.subr.mxu0 0.0
        %1553 = vmatpush2.msra.mxu0 0.0
        %1554 = vmatprep.subr.mxu0 0.0
        %1555 = vmatpush2.msra.mxu0 0.0
        %1556 = vmatprep.subr.mxu0 0.0
        %1557 = vmatpush2.msra.mxu0 0.0
        %1558 = vmatprep.subr.mxu0 0.0
        %1559 = vmatpush2.msra.mxu0 0.0
        %1560 = vmatprep.subr.mxu0 0.0
        %1561 = vmatpush2.msra.mxu0 0.0
        %1562 = vmatprep.mubr.f32.mxu0 0.0
        %1563 = vmatmul.mubr.f32.gmra.mxu0 %v1487
        %v1564 = vpop.f32.mrf.mxu0
        %v1565 = vadd.f32 0.0, %v1564
        %v1566 = vpop.f32.mrf.mxu0
        %v1567 = vadd.f32 0.0, %v1566
        %1568 = vmatprep.mubr.f32.mxu0 0.0
        %1569 = vmatmul.mubr.f32.gmra.mxu0 %v1490
        %v1570 = vpop.f32.mrf.mxu0
        %v1571 = vadd.f32 0.0, %v1570
        %v1572 = vpop.f32.mrf.mxu0
        %v1573 = vadd.f32 0.0, %v1572
        %1574 = vmatprep.mubr.f32.mxu0 0.0
        %1575 = vmatmul.mubr.f32.gmra.mxu0 %v1493
        %v1576 = vpop.f32.mrf.mxu0
        %v1577 = vadd.f32 0.0, %v1576
        %v1578 = vpop.f32.mrf.mxu0
        %v1579 = vadd.f32 0.0, %v1578
        %1580 = vmatprep.mubr.f32.mxu0 0.0
        %1581 = vmatmul.mubr.f32.gmra.mxu0 %v1496
        %v1582 = vpop.f32.mrf.mxu0
        %v1583 = vadd.f32 0.0, %v1582
        %v1584 = vpop.f32.mrf.mxu0
        %v1585 = vadd.f32 0.0, %v1584
        %1586 = vdwg.mxu0
        %v1587 = vadd.f32 %v1465, %v1565
        %v1588 = vadd.f32 %v1466, %v1567
        %v1589 = vadd.f32 %v1467, %v1571
        %v1590 = vadd.f32 %v1468, %v1573
        %v1591 = vadd.f32 %v1469, %v1577
        %v1592 = vadd.f32 %v1470, %v1579
        %v1593 = vadd.f32 %v1471, %v1583
        %v1594 = vadd.f32 %v1472, %v1585
        %v1595 = vld [vmem:[%s1106 + $0x4] sm:$0xff]
        %v1596 = vld [vmem:[%s1106 + $0xc] sm:$0xff]
        %v1597 = vld [vmem:[%s1106 + $0x14] sm:$0xff]
        %v1598 = vld [vmem:[%s1106 + $0x1c] sm:$0xf]
        %s1599 = scalar_lea.vmem %s1, 576
        %v1600 = vld [vmem:[%s1599] sm:$0xff]
        %v1601 = vld [vmem:[%s1599 + $0x8] sm:$0xff]
        %v1602 = vld [vmem:[%s1599 + $0x10] sm:$0xff]
        %v1603 = vld [vmem:[%s1599 + $0x18] sm:$0xff]
        %v1604 = vld [vmem:[%s1599 + $0x20] sm:$0xff]
        %v1605 = vld [vmem:[%s1599 + $0x28] sm:$0xff]
        %v1606 = vld [vmem:[%s1599 + $0x30] sm:$0xff]
        %v1607 = vld [vmem:[%s1599 + $0x38] sm:$0xff]
        %v1609 = vsel %vm537, %v1595, 0
        %v1612 = vsel %vm537, %v1596, 0
        %v1615 = vsel %vm537, %v1597, 0
        %v1618 = vsel %vm537, %v1598, 0
        %1620 = vmatprep.subr.mxu0 0.0
        %1621 = vmatpush1.msra.mxu0 0.0
        %1622 = vmatprep.subr.mxu0 0.0
        %1623 = vmatpush1.msra.mxu0 0.0
        %1624 = vmatprep.subr.mxu0 0.0
        %1625 = vmatpush1.msra.mxu0 0.0
        %1626 = vmatprep.subr.mxu0 0.0
        %1627 = vmatpush1.msra.mxu0 0.0
        %1628 = vmatprep.subr.mxu0 0.0
        %1629 = vmatpush1.msra.mxu0 0.0
        %1630 = vmatprep.subr.mxu0 0.0
        %1631 = vmatpush1.msra.mxu0 0.0
        %1632 = vmatprep.subr.mxu0 0.0
        %1633 = vmatpush1.msra.mxu0 0.0
        %1634 = vmatprep.subr.mxu0 0.0
        %1635 = vmatpush1.msra.mxu0 0.0
        %1636 = vmatprep.subr.mxu0 0.0
        %1637 = vmatpush1.msra.mxu0 0.0
        %1638 = vmatprep.subr.mxu0 0.0
        %1639 = vmatpush1.msra.mxu0 0.0
        %1640 = vmatprep.subr.mxu0 0.0
        %1641 = vmatpush1.msra.mxu0 0.0
        %1642 = vmatprep.subr.mxu0 0.0
        %1643 = vmatpush1.msra.mxu0 0.0
        %1644 = vmatprep.subr.mxu0 %v1607
        %1645 = vmatpush1.msra.mxu0 %v1606
        %1646 = vmatprep.subr.mxu0 %v1605
        %1647 = vmatpush1.msra.mxu0 %v1604
        %1648 = vmatprep.subr.mxu0 %v1603
        %1649 = vmatpush1.msra.mxu0 %v1602
        %1650 = vmatprep.subr.mxu0 %v1601
        %1651 = vmatpush1.msra.mxu0 %v1600
        %1652 = vmatprep.subr.mxu0 0.0
        %1653 = vmatpush2.msra.mxu0 0.0
        %1654 = vmatprep.subr.mxu0 0.0
        %1655 = vmatpush2.msra.mxu0 0.0
        %1656 = vmatprep.subr.mxu0 0.0
        %1657 = vmatpush2.msra.mxu0 0.0
        %1658 = vmatprep.subr.mxu0 0.0
        %1659 = vmatpush2.msra.mxu0 0.0
        %1660 = vmatprep.subr.mxu0 0.0
        %1661 = vmatpush2.msra.mxu0 0.0
        %1662 = vmatprep.subr.mxu0 0.0
        %1663 = vmatpush2.msra.mxu0 0.0
        %1664 = vmatprep.subr.mxu0 0.0
        %1665 = vmatpush2.msra.mxu0 0.0
        %1666 = vmatprep.subr.mxu0 0.0
        %1667 = vmatpush2.msra.mxu0 0.0
        %1668 = vmatprep.subr.mxu0 0.0
        %1669 = vmatpush2.msra.mxu0 0.0
        %1670 = vmatprep.subr.mxu0 0.0
        %1671 = vmatpush2.msra.mxu0 0.0
        %1672 = vmatprep.subr.mxu0 0.0
        %1673 = vmatpush2.msra.mxu0 0.0
        %1674 = vmatprep.subr.mxu0 0.0
        %1675 = vmatpush2.msra.mxu0 0.0
        %1676 = vmatprep.subr.mxu0 0.0
        %1677 = vmatpush2.msra.mxu0 0.0
        %1678 = vmatprep.subr.mxu0 0.0
        %1679 = vmatpush2.msra.mxu0 0.0
        %1680 = vmatprep.subr.mxu0 0.0
        %1681 = vmatpush2.msra.mxu0 0.0
        %1682 = vmatprep.subr.mxu0 0.0
        %1683 = vmatpush2.msra.mxu0 0.0
        %1684 = vmatprep.mubr.f32.mxu0 0.0
        %1685 = vmatmul.mubr.f32.gmra.mxu0 %v1609
        %v1686 = vpop.f32.mrf.mxu0
        %v1687 = vadd.f32 0.0, %v1686
        %v1688 = vpop.f32.mrf.mxu0
        %v1689 = vadd.f32 0.0, %v1688
        %1690 = vmatprep.mubr.f32.mxu0 0.0
        %1691 = vmatmul.mubr.f32.gmra.mxu0 %v1612
        %v1692 = vpop.f32.mrf.mxu0
        %v1693 = vadd.f32 0.0, %v1692
        %v1694 = vpop.f32.mrf.mxu0
        %v1695 = vadd.f32 0.0, %v1694
        %1696 = vmatprep.mubr.f32.mxu0 0.0
        %1697 = vmatmul.mubr.f32.gmra.mxu0 %v1615
        %v1698 = vpop.f32.mrf.mxu0
        %v1699 = vadd.f32 0.0, %v1698
        %v1700 = vpop.f32.mrf.mxu0
        %v1701 = vadd.f32 0.0, %v1700
        %1702 = vmatprep.mubr.f32.mxu0 0.0
        %1703 = vmatmul.mubr.f32.gmra.mxu0 %v1618
        %v1704 = vpop.f32.mrf.mxu0
        %v1705 = vadd.f32 0.0, %v1704
        %v1706 = vpop.f32.mrf.mxu0
        %v1707 = vadd.f32 0.0, %v1706
        %1708 = vdwg.mxu0
        %v1709 = vadd.f32 %v1587, %v1687
        %v1710 = vadd.f32 %v1588, %v1689
        %v1711 = vadd.f32 %v1589, %v1693
        %v1712 = vadd.f32 %v1590, %v1695
        %v1713 = vadd.f32 %v1591, %v1699
        %v1714 = vadd.f32 %v1592, %v1701
        %v1715 = vadd.f32 %v1593, %v1705
        %v1716 = vadd.f32 %v1594, %v1707
        %s1717 = scalar_lea.vmem %s466, 64 [#allocation4]
        %v1718 = vld [vmem:[%s1717] sm:$0xff]
        %v1719 = vld [vmem:[%s1717 + $0x8] sm:$0xff]
        %v1720 = vld [vmem:[%s1717 + $0x10] sm:$0xff]
        %v1721 = vld [vmem:[%s1717 + $0x18] sm:$0xf]
        %s1722 = scalar_lea.vmem %s1, 640
        %v1723 = vld [vmem:[%s1722] sm:$0xff]
        %v1724 = vld [vmem:[%s1722 + $0x8] sm:$0xff]
        %v1725 = vld [vmem:[%s1722 + $0x10] sm:$0xff]
        %v1726 = vld [vmem:[%s1722 + $0x18] sm:$0xff]
        %v1727 = vld [vmem:[%s1722 + $0x20] sm:$0xff]
        %v1728 = vld [vmem:[%s1722 + $0x28] sm:$0xff]
        %v1729 = vld [vmem:[%s1722 + $0x30] sm:$0xff]
        %v1730 = vld [vmem:[%s1722 + $0x38] sm:$0xff]
        %v1732 = vsel %vm537, %v1718, 0
        %v1735 = vsel %vm537, %v1719, 0
        %v1738 = vsel %vm537, %v1720, 0
        %v1741 = vsel %vm537, %v1721, 0
        %1743 = vmatprep.subr.mxu0 0.0
        %1744 = vmatpush1.msra.mxu0 0.0
        %1745 = vmatprep.subr.mxu0 0.0
        %1746 = vmatpush1.msra.mxu0 0.0
        %1747 = vmatprep.subr.mxu0 0.0
        %1748 = vmatpush1.msra.mxu0 0.0
        %1749 = vmatprep.subr.mxu0 0.0
        %1750 = vmatpush1.msra.mxu0 0.0
        %1751 = vmatprep.subr.mxu0 0.0
        %1752 = vmatpush1.msra.mxu0 0.0
        %1753 = vmatprep.subr.mxu0 0.0
        %1754 = vmatpush1.msra.mxu0 0.0
        %1755 = vmatprep.subr.mxu0 0.0
        %1756 = vmatpush1.msra.mxu0 0.0
        %1757 = vmatprep.subr.mxu0 0.0
        %1758 = vmatpush1.msra.mxu0 0.0
        %1759 = vmatprep.subr.mxu0 0.0
        %1760 = vmatpush1.msra.mxu0 0.0
        %1761 = vmatprep.subr.mxu0 0.0
        %1762 = vmatpush1.msra.mxu0 0.0
        %1763 = vmatprep.subr.mxu0 0.0
        %1764 = vmatpush1.msra.mxu0 0.0
        %1765 = vmatprep.subr.mxu0 0.0
        %1766 = vmatpush1.msra.mxu0 0.0
        %1767 = vmatprep.subr.mxu0 %v1730
        %1768 = vmatpush1.msra.mxu0 %v1729
        %1769 = vmatprep.subr.mxu0 %v1728
        %1770 = vmatpush1.msra.mxu0 %v1727
        %1771 = vmatprep.subr.mxu0 %v1726
        %1772 = vmatpush1.msra.mxu0 %v1725
        %1773 = vmatprep.subr.mxu0 %v1724
        %1774 = vmatpush1.msra.mxu0 %v1723
        %1775 = vmatprep.subr.mxu0 0.0
        %1776 = vmatpush2.msra.mxu0 0.0
        %1777 = vmatprep.subr.mxu0 0.0
        %1778 = vmatpush2.msra.mxu0 0.0
        %1779 = vmatprep.subr.mxu0 0.0
        %1780 = vmatpush2.msra.mxu0 0.0
        %1781 = vmatprep.subr.mxu0 0.0
        %1782 = vmatpush2.msra.mxu0 0.0
        %1783 = vmatprep.subr.mxu0 0.0
        %1784 = vmatpush2.msra.mxu0 0.0
        %1785 = vmatprep.subr.mxu0 0.0
        %1786 = vmatpush2.msra.mxu0 0.0
        %1787 = vmatprep.subr.mxu0 0.0
        %1788 = vmatpush2.msra.mxu0 0.0
        %1789 = vmatprep.subr.mxu0 0.0
        %1790 = vmatpush2.msra.mxu0 0.0
        %1791 = vmatprep.subr.mxu0 0.0
        %1792 = vmatpush2.msra.mxu0 0.0
        %1793 = vmatprep.subr.mxu0 0.0
        %1794 = vmatpush2.msra.mxu0 0.0
        %1795 = vmatprep.subr.mxu0 0.0
        %1796 = vmatpush2.msra.mxu0 0.0
        %1797 = vmatprep.subr.mxu0 0.0
        %1798 = vmatpush2.msra.mxu0 0.0
        %1799 = vmatprep.subr.mxu0 0.0
        %1800 = vmatpush2.msra.mxu0 0.0
        %1801 = vmatprep.subr.mxu0 0.0
        %1802 = vmatpush2.msra.mxu0 0.0
        %1803 = vmatprep.subr.mxu0 0.0
        %1804 = vmatpush2.msra.mxu0 0.0
        %1805 = vmatprep.subr.mxu0 0.0
        %1806 = vmatpush2.msra.mxu0 0.0
        %1807 = vmatprep.mubr.f32.mxu0 0.0
        %1808 = vmatmul.mubr.f32.gmra.mxu0 %v1732
        %v1809 = vpop.f32.mrf.mxu0
        %v1810 = vadd.f32 0.0, %v1809
        %v1811 = vpop.f32.mrf.mxu0
        %v1812 = vadd.f32 0.0, %v1811
        %1813 = vmatprep.mubr.f32.mxu0 0.0
        %1814 = vmatmul.mubr.f32.gmra.mxu0 %v1735
        %v1815 = vpop.f32.mrf.mxu0
        %v1816 = vadd.f32 0.0, %v1815
        %v1817 = vpop.f32.mrf.mxu0
        %v1818 = vadd.f32 0.0, %v1817
        %1819 = vmatprep.mubr.f32.mxu0 0.0
        %1820 = vmatmul.mubr.f32.gmra.mxu0 %v1738
        %v1821 = vpop.f32.mrf.mxu0
        %v1822 = vadd.f32 0.0, %v1821
        %v1823 = vpop.f32.mrf.mxu0
        %v1824 = vadd.f32 0.0, %v1823
        %1825 = vmatprep.mubr.f32.mxu0 0.0
        %1826 = vmatmul.mubr.f32.gmra.mxu0 %v1741
        %v1827 = vpop.f32.mrf.mxu0
        %v1828 = vadd.f32 0.0, %v1827
        %v1829 = vpop.f32.mrf.mxu0
        %v1830 = vadd.f32 0.0, %v1829
        %1831 = vdwg.mxu0
        %v1832 = vadd.f32 %v1709, %v1810
        %v1833 = vadd.f32 %v1710, %v1812
        %v1834 = vadd.f32 %v1711, %v1816
        %v1835 = vadd.f32 %v1712, %v1818
        %v1836 = vadd.f32 %v1713, %v1822
        %v1837 = vadd.f32 %v1714, %v1824
        %v1838 = vadd.f32 %v1715, %v1828
        %v1839 = vadd.f32 %v1716, %v1830
        %v1840 = vld [vmem:[%s1717 + $0x1] sm:$0xff]
        %v1841 = vld [vmem:[%s1717 + $0x9] sm:$0xff]
        %v1842 = vld [vmem:[%s1717 + $0x11] sm:$0xff]
        %v1843 = vld [vmem:[%s1717 + $0x19] sm:$0xf]
        %s1844 = scalar_lea.vmem %s1, 704
        %v1845 = vld [vmem:[%s1844] sm:$0xff]
        %v1846 = vld [vmem:[%s1844 + $0x8] sm:$0xff]
        %v1847 = vld [vmem:[%s1844 + $0x10] sm:$0xff]
        %v1848 = vld [vmem:[%s1844 + $0x18] sm:$0xff]
        %v1849 = vld [vmem:[%s1844 + $0x20] sm:$0xff]
        %v1850 = vld [vmem:[%s1844 + $0x28] sm:$0xff]
        %v1851 = vld [vmem:[%s1844 + $0x30] sm:$0xff]
        %v1852 = vld [vmem:[%s1844 + $0x38] sm:$0xff]
        %v1854 = vsel %vm537, %v1840, 0
        %v1857 = vsel %vm537, %v1841, 0
        %v1860 = vsel %vm537, %v1842, 0
        %v1863 = vsel %vm537, %v1843, 0
        %1865 = vmatprep.subr.mxu0 0.0
        %1866 = vmatpush1.msra.mxu0 0.0
        %1867 = vmatprep.subr.mxu0 0.0
        %1868 = vmatpush1.msra.mxu0 0.0
        %1869 = vmatprep.subr.mxu0 0.0
        %1870 = vmatpush1.msra.mxu0 0.0
        %1871 = vmatprep.subr.mxu0 0.0
        %1872 = vmatpush1.msra.mxu0 0.0
        %1873 = vmatprep.subr.mxu0 0.0
        %1874 = vmatpush1.msra.mxu0 0.0
        %1875 = vmatprep.subr.mxu0 0.0
        %1876 = vmatpush1.msra.mxu0 0.0
        %1877 = vmatprep.subr.mxu0 0.0
        %1878 = vmatpush1.msra.mxu0 0.0
        %1879 = vmatprep.subr.mxu0 0.0
        %1880 = vmatpush1.msra.mxu0 0.0
        %1881 = vmatprep.subr.mxu0 0.0
        %1882 = vmatpush1.msra.mxu0 0.0
        %1883 = vmatprep.subr.mxu0 0.0
        %1884 = vmatpush1.msra.mxu0 0.0
        %1885 = vmatprep.subr.mxu0 0.0
        %1886 = vmatpush1.msra.mxu0 0.0
        %1887 = vmatprep.subr.mxu0 0.0
        %1888 = vmatpush1.msra.mxu0 0.0
        %1889 = vmatprep.subr.mxu0 %v1852
        %1890 = vmatpush1.msra.mxu0 %v1851
        %1891 = vmatprep.subr.mxu0 %v1850
        %1892 = vmatpush1.msra.mxu0 %v1849
        %1893 = vmatprep.subr.mxu0 %v1848
        %1894 = vmatpush1.msra.mxu0 %v1847
        %1895 = vmatprep.subr.mxu0 %v1846
        %1896 = vmatpush1.msra.mxu0 %v1845
        %1897 = vmatprep.subr.mxu0 0.0
        %1898 = vmatpush2.msra.mxu0 0.0
        %1899 = vmatprep.subr.mxu0 0.0
        %1900 = vmatpush2.msra.mxu0 0.0
        %1901 = vmatprep.subr.mxu0 0.0
        %1902 = vmatpush2.msra.mxu0 0.0
        %1903 = vmatprep.subr.mxu0 0.0
        %1904 = vmatpush2.msra.mxu0 0.0
        %1905 = vmatprep.subr.mxu0 0.0
        %1906 = vmatpush2.msra.mxu0 0.0
        %1907 = vmatprep.subr.mxu0 0.0
        %1908 = vmatpush2.msra.mxu0 0.0
        %1909 = vmatprep.subr.mxu0 0.0
        %1910 = vmatpush2.msra.mxu0 0.0
        %1911 = vmatprep.subr.mxu0 0.0
        %1912 = vmatpush2.msra.mxu0 0.0
        %1913 = vmatprep.subr.mxu0 0.0
        %1914 = vmatpush2.msra.mxu0 0.0
        %1915 = vmatprep.subr.mxu0 0.0
        %1916 = vmatpush2.msra.mxu0 0.0
        %1917 = vmatprep.subr.mxu0 0.0
        %1918 = vmatpush2.msra.mxu0 0.0
        %1919 = vmatprep.subr.mxu0 0.0
        %1920 = vmatpush2.msra.mxu0 0.0
        %1921 = vmatprep.subr.mxu0 0.0
        %1922 = vmatpush2.msra.mxu0 0.0
        %1923 = vmatprep.subr.mxu0 0.0
        %1924 = vmatpush2.msra.mxu0 0.0
        %1925 = vmatprep.subr.mxu0 0.0
        %1926 = vmatpush2.msra.mxu0 0.0
        %1927 = vmatprep.subr.mxu0 0.0
        %1928 = vmatpush2.msra.mxu0 0.0
        %1929 = vmatprep.mubr.f32.mxu0 0.0
        %1930 = vmatmul.mubr.f32.gmra.mxu0 %v1854
        %v1931 = vpop.f32.mrf.mxu0
        %v1932 = vadd.f32 0.0, %v1931
        %v1933 = vpop.f32.mrf.mxu0
        %v1934 = vadd.f32 0.0, %v1933
        %1935 = vmatprep.mubr.f32.mxu0 0.0
        %1936 = vmatmul.mubr.f32.gmra.mxu0 %v1857
        %v1937 = vpop.f32.mrf.mxu0
        %v1938 = vadd.f32 0.0, %v1937
        %v1939 = vpop.f32.mrf.mxu0
        %v1940 = vadd.f32 0.0, %v1939
        %1941 = vmatprep.mubr.f32.mxu0 0.0
        %1942 = vmatmul.mubr.f32.gmra.mxu0 %v1860
        %v1943 = vpop.f32.mrf.mxu0
        %v1944 = vadd.f32 0.0, %v1943
        %v1945 = vpop.f32.mrf.mxu0
        %v1946 = vadd.f32 0.0, %v1945
        %1947 = vmatprep.mubr.f32.mxu0 0.0
        %1948 = vmatmul.mubr.f32.gmra.mxu0 %v1863
        %v1949 = vpop.f32.mrf.mxu0
        %v1950 = vadd.f32 0.0, %v1949
        %v1951 = vpop.f32.mrf.mxu0
        %v1952 = vadd.f32 0.0, %v1951
        %1953 = vdwg.mxu0
        %v1954 = vadd.f32 %v1832, %v1932
        %v1955 = vadd.f32 %v1833, %v1934
        %v1956 = vadd.f32 %v1834, %v1938
        %v1957 = vadd.f32 %v1835, %v1940
        %v1958 = vadd.f32 %v1836, %v1944
        %v1959 = vadd.f32 %v1837, %v1946
        %v1960 = vadd.f32 %v1838, %v1950
        %v1961 = vadd.f32 %v1839, %v1952
        %v1962 = vld [vmem:[%s1717 + $0x2] sm:$0xff]
        %v1963 = vld [vmem:[%s1717 + $0xa] sm:$0xff]
        %v1964 = vld [vmem:[%s1717 + $0x12] sm:$0xff]
        %v1965 = vld [vmem:[%s1717 + $0x1a] sm:$0xf]
        %s1966 = scalar_lea.vmem %s1, 768
        %v1967 = vld [vmem:[%s1966] sm:$0xff]
        %v1968 = vld [vmem:[%s1966 + $0x8] sm:$0xff]
        %v1969 = vld [vmem:[%s1966 + $0x10] sm:$0xff]
        %v1970 = vld [vmem:[%s1966 + $0x18] sm:$0xff]
        %v1971 = vld [vmem:[%s1966 + $0x20] sm:$0xff]
        %v1972 = vld [vmem:[%s1966 + $0x28] sm:$0xff]
        %v1973 = vld [vmem:[%s1966 + $0x30] sm:$0xff]
        %v1974 = vld [vmem:[%s1966 + $0x38] sm:$0xff]
        %v1976 = vsel %vm537, %v1962, 0
        %v1979 = vsel %vm537, %v1963, 0
        %v1982 = vsel %vm537, %v1964, 0
        %v1985 = vsel %vm537, %v1965, 0
        %1987 = vmatprep.subr.mxu0 0.0
        %1988 = vmatpush1.msra.mxu0 0.0
        %1989 = vmatprep.subr.mxu0 0.0
        %1990 = vmatpush1.msra.mxu0 0.0
        %1991 = vmatprep.subr.mxu0 0.0
        %1992 = vmatpush1.msra.mxu0 0.0
        %1993 = vmatprep.subr.mxu0 0.0
        %1994 = vmatpush1.msra.mxu0 0.0
        %1995 = vmatprep.subr.mxu0 0.0
        %1996 = vmatpush1.msra.mxu0 0.0
        %1997 = vmatprep.subr.mxu0 0.0
        %1998 = vmatpush1.msra.mxu0 0.0
        %1999 = vmatprep.subr.mxu0 0.0
        %2000 = vmatpush1.msra.mxu0 0.0
        %2001 = vmatprep.subr.mxu0 0.0
        %2002 = vmatpush1.msra.mxu0 0.0
        %2003 = vmatprep.subr.mxu0 0.0
        %2004 = vmatpush1.msra.mxu0 0.0
        %2005 = vmatprep.subr.mxu0 0.0
        %2006 = vmatpush1.msra.mxu0 0.0
        %2007 = vmatprep.subr.mxu0 0.0
        %2008 = vmatpush1.msra.mxu0 0.0
        %2009 = vmatprep.subr.mxu0 0.0
        %2010 = vmatpush1.msra.mxu0 0.0
        %2011 = vmatprep.subr.mxu0 %v1974
        %2012 = vmatpush1.msra.mxu0 %v1973
        %2013 = vmatprep.subr.mxu0 %v1972
        %2014 = vmatpush1.msra.mxu0 %v1971
        %2015 = vmatprep.subr.mxu0 %v1970
        %2016 = vmatpush1.msra.mxu0 %v1969
        %2017 = vmatprep.subr.mxu0 %v1968
        %2018 = vmatpush1.msra.mxu0 %v1967
        %2019 = vmatprep.subr.mxu0 0.0
        %2020 = vmatpush2.msra.mxu0 0.0
        %2021 = vmatprep.subr.mxu0 0.0
        %2022 = vmatpush2.msra.mxu0 0.0
        %2023 = vmatprep.subr.mxu0 0.0
        %2024 = vmatpush2.msra.mxu0 0.0
        %2025 = vmatprep.subr.mxu0 0.0
        %2026 = vmatpush2.msra.mxu0 0.0
        %2027 = vmatprep.subr.mxu0 0.0
        %2028 = vmatpush2.msra.mxu0 0.0
        %2029 = vmatprep.subr.mxu0 0.0
        %2030 = vmatpush2.msra.mxu0 0.0
        %2031 = vmatprep.subr.mxu0 0.0
        %2032 = vmatpush2.msra.mxu0 0.0
        %2033 = vmatprep.subr.mxu0 0.0
        %2034 = vmatpush2.msra.mxu0 0.0
        %2035 = vmatprep.subr.mxu0 0.0
        %2036 = vmatpush2.msra.mxu0 0.0
        %2037 = vmatprep.subr.mxu0 0.0
        %2038 = vmatpush2.msra.mxu0 0.0
        %2039 = vmatprep.subr.mxu0 0.0
        %2040 = vmatpush2.msra.mxu0 0.0
        %2041 = vmatprep.subr.mxu0 0.0
        %2042 = vmatpush2.msra.mxu0 0.0
        %2043 = vmatprep.subr.mxu0 0.0
        %2044 = vmatpush2.msra.mxu0 0.0
        %2045 = vmatprep.subr.mxu0 0.0
        %2046 = vmatpush2.msra.mxu0 0.0
        %2047 = vmatprep.subr.mxu0 0.0
        %2048 = vmatpush2.msra.mxu0 0.0
        %2049 = vmatprep.subr.mxu0 0.0
        %2050 = vmatpush2.msra.mxu0 0.0
        %2051 = vmatprep.mubr.f32.mxu0 0.0
        %2052 = vmatmul.mubr.f32.gmra.mxu0 %v1976
        %v2053 = vpop.f32.mrf.mxu0
        %v2054 = vadd.f32 0.0, %v2053
        %v2055 = vpop.f32.mrf.mxu0
        %v2056 = vadd.f32 0.0, %v2055
        %2057 = vmatprep.mubr.f32.mxu0 0.0
        %2058 = vmatmul.mubr.f32.gmra.mxu0 %v1979
        %v2059 = vpop.f32.mrf.mxu0
        %v2060 = vadd.f32 0.0, %v2059
        %v2061 = vpop.f32.mrf.mxu0
        %v2062 = vadd.f32 0.0, %v2061
        %2063 = vmatprep.mubr.f32.mxu0 0.0
        %2064 = vmatmul.mubr.f32.gmra.mxu0 %v1982
        %v2065 = vpop.f32.mrf.mxu0
        %v2066 = vadd.f32 0.0, %v2065
        %v2067 = vpop.f32.mrf.mxu0
        %v2068 = vadd.f32 0.0, %v2067
        %2069 = vmatprep.mubr.f32.mxu0 0.0
        %2070 = vmatmul.mubr.f32.gmra.mxu0 %v1985
        %v2071 = vpop.f32.mrf.mxu0
        %v2072 = vadd.f32 0.0, %v2071
        %v2073 = vpop.f32.mrf.mxu0
        %v2074 = vadd.f32 0.0, %v2073
        %2075 = vdwg.mxu0
        %v2076 = vadd.f32 %v1954, %v2054
        %v2077 = vadd.f32 %v1955, %v2056
        %v2078 = vadd.f32 %v1956, %v2060
        %v2079 = vadd.f32 %v1957, %v2062
        %v2080 = vadd.f32 %v1958, %v2066
        %v2081 = vadd.f32 %v1959, %v2068
        %v2082 = vadd.f32 %v1960, %v2072
        %v2083 = vadd.f32 %v1961, %v2074
        %v2084 = vld [vmem:[%s1717 + $0x3] sm:$0xff]
        %v2085 = vld [vmem:[%s1717 + $0xb] sm:$0xff]
        %v2086 = vld [vmem:[%s1717 + $0x13] sm:$0xff]
        %v2087 = vld [vmem:[%s1717 + $0x1b] sm:$0xf]
        %s2088 = scalar_lea.vmem %s1, 832
        %v2089 = vld [vmem:[%s2088] sm:$0xff]
        %v2090 = vld [vmem:[%s2088 + $0x8] sm:$0xff]
        %v2091 = vld [vmem:[%s2088 + $0x10] sm:$0xff]
        %v2092 = vld [vmem:[%s2088 + $0x18] sm:$0xff]
        %v2093 = vld [vmem:[%s2088 + $0x20] sm:$0xff]
        %v2094 = vld [vmem:[%s2088 + $0x28] sm:$0xff]
        %v2095 = vld [vmem:[%s2088 + $0x30] sm:$0xff]
        %v2096 = vld [vmem:[%s2088 + $0x38] sm:$0xff]
        %v2098 = vsel %vm537, %v2084, 0
        %v2101 = vsel %vm537, %v2085, 0
        %v2104 = vsel %vm537, %v2086, 0
        %v2107 = vsel %vm537, %v2087, 0
        %2109 = vmatprep.subr.mxu0 0.0
        %2110 = vmatpush1.msra.mxu0 0.0
        %2111 = vmatprep.subr.mxu0 0.0
        %2112 = vmatpush1.msra.mxu0 0.0
        %2113 = vmatprep.subr.mxu0 0.0
        %2114 = vmatpush1.msra.mxu0 0.0
        %2115 = vmatprep.subr.mxu0 0.0
        %2116 = vmatpush1.msra.mxu0 0.0
        %2117 = vmatprep.subr.mxu0 0.0
        %2118 = vmatpush1.msra.mxu0 0.0
        %2119 = vmatprep.subr.mxu0 0.0
        %2120 = vmatpush1.msra.mxu0 0.0
        %2121 = vmatprep.subr.mxu0 0.0
        %2122 = vmatpush1.msra.mxu0 0.0
        %2123 = vmatprep.subr.mxu0 0.0
        %2124 = vmatpush1.msra.mxu0 0.0
        %2125 = vmatprep.subr.mxu0 0.0
        %2126 = vmatpush1.msra.mxu0 0.0
        %2127 = vmatprep.subr.mxu0 0.0
        %2128 = vmatpush1.msra.mxu0 0.0
        %2129 = vmatprep.subr.mxu0 0.0
        %2130 = vmatpush1.msra.mxu0 0.0
        %2131 = vmatprep.subr.mxu0 0.0
        %2132 = vmatpush1.msra.mxu0 0.0
        %2133 = vmatprep.subr.mxu0 %v2096
        %2134 = vmatpush1.msra.mxu0 %v2095
        %2135 = vmatprep.subr.mxu0 %v2094
        %2136 = vmatpush1.msra.mxu0 %v2093
        %2137 = vmatprep.subr.mxu0 %v2092
        %2138 = vmatpush1.msra.mxu0 %v2091
        %2139 = vmatprep.subr.mxu0 %v2090
        %2140 = vmatpush1.msra.mxu0 %v2089
        %2141 = vmatprep.subr.mxu0 0.0
        %2142 = vmatpush2.msra.mxu0 0.0
        %2143 = vmatprep.subr.mxu0 0.0
        %2144 = vmatpush2.msra.mxu0 0.0
        %2145 = vmatprep.subr.mxu0 0.0
        %2146 = vmatpush2.msra.mxu0 0.0
        %2147 = vmatprep.subr.mxu0 0.0
        %2148 = vmatpush2.msra.mxu0 0.0
        %2149 = vmatprep.subr.mxu0 0.0
        %2150 = vmatpush2.msra.mxu0 0.0
        %2151 = vmatprep.subr.mxu0 0.0
        %2152 = vmatpush2.msra.mxu0 0.0
        %2153 = vmatprep.subr.mxu0 0.0
        %2154 = vmatpush2.msra.mxu0 0.0
        %2155 = vmatprep.subr.mxu0 0.0
        %2156 = vmatpush2.msra.mxu0 0.0
        %2157 = vmatprep.subr.mxu0 0.0
        %2158 = vmatpush2.msra.mxu0 0.0
        %2159 = vmatprep.subr.mxu0 0.0
        %2160 = vmatpush2.msra.mxu0 0.0
        %2161 = vmatprep.subr.mxu0 0.0
        %2162 = vmatpush2.msra.mxu0 0.0
        %2163 = vmatprep.subr.mxu0 0.0
        %2164 = vmatpush2.msra.mxu0 0.0
        %2165 = vmatprep.subr.mxu0 0.0
        %2166 = vmatpush2.msra.mxu0 0.0
        %2167 = vmatprep.subr.mxu0 0.0
        %2168 = vmatpush2.msra.mxu0 0.0
        %2169 = vmatprep.subr.mxu0 0.0
        %2170 = vmatpush2.msra.mxu0 0.0
        %2171 = vmatprep.subr.mxu0 0.0
        %2172 = vmatpush2.msra.mxu0 0.0
        %2173 = vmatprep.mubr.f32.mxu0 0.0
        %2174 = vmatmul.mubr.f32.gmra.mxu0 %v2098
        %v2175 = vpop.f32.mrf.mxu0
        %v2176 = vadd.f32 0.0, %v2175
        %v2177 = vpop.f32.mrf.mxu0
        %v2178 = vadd.f32 0.0, %v2177
        %2179 = vmatprep.mubr.f32.mxu0 0.0
        %2180 = vmatmul.mubr.f32.gmra.mxu0 %v2101
        %v2181 = vpop.f32.mrf.mxu0
        %v2182 = vadd.f32 0.0, %v2181
        %v2183 = vpop.f32.mrf.mxu0
        %v2184 = vadd.f32 0.0, %v2183
        %2185 = vmatprep.mubr.f32.mxu0 0.0
        %2186 = vmatmul.mubr.f32.gmra.mxu0 %v2104
        %v2187 = vpop.f32.mrf.mxu0
        %v2188 = vadd.f32 0.0, %v2187
        %v2189 = vpop.f32.mrf.mxu0
        %v2190 = vadd.f32 0.0, %v2189
        %2191 = vmatprep.mubr.f32.mxu0 0.0
        %2192 = vmatmul.mubr.f32.gmra.mxu0 %v2107
        %v2193 = vpop.f32.mrf.mxu0
        %v2194 = vadd.f32 0.0, %v2193
        %v2195 = vpop.f32.mrf.mxu0
        %v2196 = vadd.f32 0.0, %v2195
        %2197 = vdwg.mxu0
        %v2198 = vadd.f32 %v2076, %v2176
        %v2199 = vadd.f32 %v2077, %v2178
        %v2200 = vadd.f32 %v2078, %v2182
        %v2201 = vadd.f32 %v2079, %v2184
        %v2202 = vadd.f32 %v2080, %v2188
        %v2203 = vadd.f32 %v2081, %v2190
        %v2204 = vadd.f32 %v2082, %v2194
        %v2205 = vadd.f32 %v2083, %v2196
        %v2206 = vld [vmem:[%s1717 + $0x4] sm:$0xff]
        %v2207 = vld [vmem:[%s1717 + $0xc] sm:$0xff]
        %v2208 = vld [vmem:[%s1717 + $0x14] sm:$0xff]
        %v2209 = vld [vmem:[%s1717 + $0x1c] sm:$0xf]
        %s2210 = scalar_lea.vmem %s1, 896
        %v2211 = vld [vmem:[%s2210] sm:$0xff]
        %v2212 = vld [vmem:[%s2210 + $0x8] sm:$0xff]
        %v2213 = vld [vmem:[%s2210 + $0x10] sm:$0xff]
        %v2214 = vld [vmem:[%s2210 + $0x18] sm:$0xff]
        %v2215 = vld [vmem:[%s2210 + $0x20] sm:$0xff]
        %v2216 = vld [vmem:[%s2210 + $0x28] sm:$0xff]
        %v2217 = vld [vmem:[%s2210 + $0x30] sm:$0xff]
        %v2218 = vld [vmem:[%s2210 + $0x38] sm:$0xff]
        %v2220 = vsel %vm537, %v2206, 0
        %v2223 = vsel %vm537, %v2207, 0
        %v2226 = vsel %vm537, %v2208, 0
        %v2229 = vsel %vm537, %v2209, 0
        %2231 = vmatprep.subr.mxu0 0.0
        %2232 = vmatpush1.msra.mxu0 0.0
        %2233 = vmatprep.subr.mxu0 0.0
        %2234 = vmatpush1.msra.mxu0 0.0
        %2235 = vmatprep.subr.mxu0 0.0
        %2236 = vmatpush1.msra.mxu0 0.0
        %2237 = vmatprep.subr.mxu0 0.0
        %2238 = vmatpush1.msra.mxu0 0.0
        %2239 = vmatprep.subr.mxu0 0.0
        %2240 = vmatpush1.msra.mxu0 0.0
        %2241 = vmatprep.subr.mxu0 0.0
        %2242 = vmatpush1.msra.mxu0 0.0
        %2243 = vmatprep.subr.mxu0 0.0
        %2244 = vmatpush1.msra.mxu0 0.0
        %2245 = vmatprep.subr.mxu0 0.0
        %2246 = vmatpush1.msra.mxu0 0.0
        %2247 = vmatprep.subr.mxu0 0.0
        %2248 = vmatpush1.msra.mxu0 0.0
        %2249 = vmatprep.subr.mxu0 0.0
        %2250 = vmatpush1.msra.mxu0 0.0
        %2251 = vmatprep.subr.mxu0 0.0
        %2252 = vmatpush1.msra.mxu0 0.0
        %2253 = vmatprep.subr.mxu0 0.0
        %2254 = vmatpush1.msra.mxu0 0.0
        %2255 = vmatprep.subr.mxu0 %v2218
        %2256 = vmatpush1.msra.mxu0 %v2217
        %2257 = vmatprep.subr.mxu0 %v2216
        %2258 = vmatpush1.msra.mxu0 %v2215
        %2259 = vmatprep.subr.mxu0 %v2214
        %2260 = vmatpush1.msra.mxu0 %v2213
        %2261 = vmatprep.subr.mxu0 %v2212
        %2262 = vmatpush1.msra.mxu0 %v2211
        %2263 = vmatprep.subr.mxu0 0.0
        %2264 = vmatpush2.msra.mxu0 0.0
        %2265 = vmatprep.subr.mxu0 0.0
        %2266 = vmatpush2.msra.mxu0 0.0
        %2267 = vmatprep.subr.mxu0 0.0
        %2268 = vmatpush2.msra.mxu0 0.0
        %2269 = vmatprep.subr.mxu0 0.0
        %2270 = vmatpush2.msra.mxu0 0.0
        %2271 = vmatprep.subr.mxu0 0.0
        %2272 = vmatpush2.msra.mxu0 0.0
        %2273 = vmatprep.subr.mxu0 0.0
        %2274 = vmatpush2.msra.mxu0 0.0
        %2275 = vmatprep.subr.mxu0 0.0
        %2276 = vmatpush2.msra.mxu0 0.0
        %2277 = vmatprep.subr.mxu0 0.0
        %2278 = vmatpush2.msra.mxu0 0.0
        %2279 = vmatprep.subr.mxu0 0.0
        %2280 = vmatpush2.msra.mxu0 0.0
        %2281 = vmatprep.subr.mxu0 0.0
        %2282 = vmatpush2.msra.mxu0 0.0
        %2283 = vmatprep.subr.mxu0 0.0
        %2284 = vmatpush2.msra.mxu0 0.0
        %2285 = vmatprep.subr.mxu0 0.0
        %2286 = vmatpush2.msra.mxu0 0.0
        %2287 = vmatprep.subr.mxu0 0.0
        %2288 = vmatpush2.msra.mxu0 0.0
        %2289 = vmatprep.subr.mxu0 0.0
        %2290 = vmatpush2.msra.mxu0 0.0
        %2291 = vmatprep.subr.mxu0 0.0
        %2292 = vmatpush2.msra.mxu0 0.0
        %2293 = vmatprep.subr.mxu0 0.0
        %2294 = vmatpush2.msra.mxu0 0.0
        %2295 = vmatprep.mubr.f32.mxu0 0.0
        %2296 = vmatmul.mubr.f32.gmra.mxu0 %v2220
        %v2297 = vpop.f32.mrf.mxu0
        %v2298 = vadd.f32 0.0, %v2297
        %v2299 = vpop.f32.mrf.mxu0
        %v2300 = vadd.f32 0.0, %v2299
        %2301 = vmatprep.mubr.f32.mxu0 0.0
        %2302 = vmatmul.mubr.f32.gmra.mxu0 %v2223
        %v2303 = vpop.f32.mrf.mxu0
        %v2304 = vadd.f32 0.0, %v2303
        %v2305 = vpop.f32.mrf.mxu0
        %v2306 = vadd.f32 0.0, %v2305
        %2307 = vmatprep.mubr.f32.mxu0 0.0
        %2308 = vmatmul.mubr.f32.gmra.mxu0 %v2226
        %v2309 = vpop.f32.mrf.mxu0
        %v2310 = vadd.f32 0.0, %v2309
        %v2311 = vpop.f32.mrf.mxu0
        %v2312 = vadd.f32 0.0, %v2311
        %2313 = vmatprep.mubr.f32.mxu0 0.0
        %2314 = vmatmul.mubr.f32.gmra.mxu0 %v2229
        %v2315 = vpop.f32.mrf.mxu0
        %v2316 = vadd.f32 0.0, %v2315
        %v2317 = vpop.f32.mrf.mxu0
        %v2318 = vadd.f32 0.0, %v2317
        %2319 = vdwg.mxu0
        %v2320 = vadd.f32 %v2198, %v2298
        %v2321 = vadd.f32 %v2199, %v2300
        %v2322 = vadd.f32 %v2200, %v2304
        %v2323 = vadd.f32 %v2201, %v2306
        %v2324 = vadd.f32 %v2202, %v2310
        %v2325 = vadd.f32 %v2203, %v2312
        %v2326 = vadd.f32 %v2204, %v2316
        %v2327 = vadd.f32 %v2205, %v2318
        %v2328 = vld [vmem:[%s2] sm:$0x3]
        %v2330 = vlaneseq
        %v2331 = vshrl.u32 %v2330, 7
        %v2332 = vsub.s32 0, %v2331
        %v2333 = vrot.slane %v2328, %v2332
        %v2334 = vlaneseq
        %v2335 = vshrl.u32 %v2334, 7
        %v2336 = vsub.s32 1, %v2335
        %v2337 = vrot.slane %v2328, %v2336
        %v2340 = vadd.f32 %v2320, %v2333
        %v2341 = vadd.f32 %v2321, %v2337
        %v2342 = vadd.f32 %v2322, %v2333
        %v2343 = vadd.f32 %v2323, %v2337
        %v2344 = vadd.f32 %v2324, %v2333
        %v2345 = vadd.f32 %v2325, %v2337
        %v2346 = vadd.f32 %v2326, %v2333
        %v2347 = vadd.f32 %v2327, %v2337
        %v2348 = vmax.f32 %v2340, 0.0
        %v2349 = vmax.f32 %v2341, 0.0
        %v2350 = vmax.f32 %v2342, 0.0
        %v2351 = vmax.f32 %v2343, 0.0
        %v2352 = vmax.f32 %v2344, 0.0
        %v2353 = vmax.f32 %v2345, 0.0
        %v2354 = vmax.f32 %v2346, 0.0
        %v2355 = vmax.f32 %v2347, 0.0
        %v2356 = vld [vmem:[%s3] sm:$0xff]
        %v2357 = vld [vmem:[%s3 + $0x8] sm:$0x3f]
        %vm2358 = vcmask 228352
        %v2360 = vsel %vm2358, %v2356, 0
        %v2363 = vsel %vm2358, %v2357, 0
        %vm2365 = vcmask 1043456
        %v2367 = vsel %vm2365, %v2354, 0
        %v2370 = vsel %vm2365, %v2355, 0
        %2372 = vmatprep.subr.mxu0 0.0
        %2373 = vmatpush1.msra.mxu0 0.0
        %2374 = vmatprep.subr.mxu0 0.0
        %2375 = vmatpush1.msra.mxu0 0.0
        %2376 = vmatprep.subr.mxu0 0.0
        %2377 = vmatpush1.msra.mxu0 0.0
        %2378 = vmatprep.subr.mxu0 0.0
        %2379 = vmatpush1.msra.mxu0 0.0
        %2380 = vmatprep.subr.mxu0 0.0
        %2381 = vmatpush1.msra.mxu0 0.0
        %2382 = vmatprep.subr.mxu0 0.0
        %2383 = vmatpush1.msra.mxu0 0.0
        %2384 = vmatprep.subr.mxu0 0.0
        %2385 = vmatpush1.msra.mxu0 0.0
        %2386 = vmatprep.subr.mxu0 0.0
        %2387 = vmatpush1.msra.mxu0 0.0
        %2388 = vmatprep.subr.mxu0 0.0
        %2389 = vmatpush1.msra.mxu0 0.0
        %2390 = vmatprep.subr.mxu0 0.0
        %2391 = vmatpush1.msra.mxu0 0.0
        %2392 = vmatprep.subr.mxu0 0.0
        %2393 = vmatpush1.msra.mxu0 0.0
        %2394 = vmatprep.subr.mxu0 0.0
        %2395 = vmatpush1.msra.mxu0 0.0
        %2396 = vmatprep.subr.mxu0 %v2370
        %2397 = vmatpush1.msra.mxu0 %v2367
        %2398 = vmatprep.subr.mxu0 %v2353
        %2399 = vmatpush1.msra.mxu0 %v2352
        %2400 = vmatprep.subr.mxu0 %v2351
        %2401 = vmatpush1.msra.mxu0 %v2350
        %2402 = vmatprep.subr.mxu0 %v2349
        %2403 = vmatpush1.msra.mxu0 %v2348
        %2404 = vmatprep.subr.mxu0 0.0
        %2405 = vmatpush2.msra.mxu0 0.0
        %2406 = vmatprep.subr.mxu0 0.0
        %2407 = vmatpush2.msra.mxu0 0.0
        %2408 = vmatprep.subr.mxu0 0.0
        %2409 = vmatpush2.msra.mxu0 0.0
        %2410 = vmatprep.subr.mxu0 0.0
        %2411 = vmatpush2.msra.mxu0 0.0
        %2412 = vmatprep.subr.mxu0 0.0
        %2413 = vmatpush2.msra.mxu0 0.0
        %2414 = vmatprep.subr.mxu0 0.0
        %2415 = vmatpush2.msra.mxu0 0.0
        %2416 = vmatprep.subr.mxu0 0.0
        %2417 = vmatpush2.msra.mxu0 0.0
        %2418 = vmatprep.subr.mxu0 0.0
        %2419 = vmatpush2.msra.mxu0 0.0
        %2420 = vmatprep.subr.mxu0 0.0
        %2421 = vmatpush2.msra.mxu0 0.0
        %2422 = vmatprep.subr.mxu0 0.0
        %2423 = vmatpush2.msra.mxu0 0.0
        %2424 = vmatprep.subr.mxu0 0.0
        %2425 = vmatpush2.msra.mxu0 0.0
        %2426 = vmatprep.subr.mxu0 0.0
        %2427 = vmatpush2.msra.mxu0 0.0
        %2428 = vmatprep.subr.mxu0 0.0
        %2429 = vmatpush2.msra.mxu0 0.0
        %2430 = vmatprep.subr.mxu0 0.0
        %2431 = vmatpush2.msra.mxu0 0.0
        %2432 = vmatprep.subr.mxu0 0.0
        %2433 = vmatpush2.msra.mxu0 0.0
        %2434 = vmatprep.subr.mxu0 0.0
        %2435 = vmatpush2.msra.mxu0 0.0
        %2436 = vmatprep.mubr.f32.mxu0 0.0
        %2437 = vmatmul.mubr.f32.gmra.mxu0 %v2360
        %v2438 = vpop.f32.mrf.mxu0
        %v2439 = vadd.f32 0.0, %v2438
        %v2440 = vpop.f32.mrf.mxu0
        %v2441 = vadd.f32 0.0, %v2440
        %2442 = vmatprep.mubr.f32.mxu0 0.0
        %2443 = vmatmul.mubr.f32.gmra.mxu0 %v2363
        %v2444 = vpop.f32.mrf.mxu0
        %v2445 = vadd.f32 0.0, %v2444
        %v2446 = vpop.f32.mrf.mxu0
        %v2447 = vadd.f32 0.0, %v2446
        %2448 = vdwg.mxu0
        %s2449 = scalar_lea.vmem %s3, 16
        %v2450 = vld [vmem:[%s2449] sm:$0xff]
        %v2451 = vld [vmem:[%s2449 + $0x8] sm:$0x3f]
        %v2453 = vsel %vm2358, %v2450, 0
        %v2456 = vsel %vm2358, %v2451, 0
        %2458 = vmatprep.subr.mxu0 0.0
        %2459 = vmatpush1.msra.mxu0 0.0
        %2460 = vmatprep.subr.mxu0 0.0
        %2461 = vmatpush1.msra.mxu0 0.0
        %2462 = vmatprep.subr.mxu0 0.0
        %2463 = vmatpush1.msra.mxu0 0.0
        %2464 = vmatprep.subr.mxu0 0.0
        %2465 = vmatpush1.msra.mxu0 0.0
        %2466 = vmatprep.subr.mxu0 0.0
        %2467 = vmatpush1.msra.mxu0 0.0
        %2468 = vmatprep.subr.mxu0 0.0
        %2469 = vmatpush1.msra.mxu0 0.0
        %2470 = vmatprep.subr.mxu0 0.0
        %2471 = vmatpush1.msra.mxu0 0.0
        %2472 = vmatprep.subr.mxu0 0.0
        %2473 = vmatpush1.msra.mxu0 0.0
        %2474 = vmatprep.subr.mxu0 0.0
        %2475 = vmatpush1.msra.mxu0 0.0
        %2476 = vmatprep.subr.mxu0 0.0
        %2477 = vmatpush1.msra.mxu0 0.0
        %2478 = vmatprep.subr.mxu0 0.0
        %2479 = vmatpush1.msra.mxu0 0.0
        %2480 = vmatprep.subr.mxu0 0.0
        %2481 = vmatpush1.msra.mxu0 0.0
        %2482 = vmatprep.subr.mxu0 %v2370
        %2483 = vmatpush1.msra.mxu0 %v2367
        %2484 = vmatprep.subr.mxu0 %v2353
        %2485 = vmatpush1.msra.mxu0 %v2352
        %2486 = vmatprep.subr.mxu0 %v2351
        %2487 = vmatpush1.msra.mxu0 %v2350
        %2488 = vmatprep.subr.mxu0 %v2349
        %2489 = vmatpush1.msra.mxu0 %v2348
        %2490 = vmatprep.subr.mxu0 0.0
        %2491 = vmatpush2.msra.mxu0 0.0
        %2492 = vmatprep.subr.mxu0 0.0
        %2493 = vmatpush2.msra.mxu0 0.0
        %2494 = vmatprep.subr.mxu0 0.0
        %2495 = vmatpush2.msra.mxu0 0.0
        %2496 = vmatprep.subr.mxu0 0.0
        %2497 = vmatpush2.msra.mxu0 0.0
        %2498 = vmatprep.subr.mxu0 0.0
        %2499 = vmatpush2.msra.mxu0 0.0
        %2500 = vmatprep.subr.mxu0 0.0
        %2501 = vmatpush2.msra.mxu0 0.0
        %2502 = vmatprep.subr.mxu0 0.0
        %2503 = vmatpush2.msra.mxu0 0.0
        %2504 = vmatprep.subr.mxu0 0.0
        %2505 = vmatpush2.msra.mxu0 0.0
        %2506 = vmatprep.subr.mxu0 0.0
        %2507 = vmatpush2.msra.mxu0 0.0
        %2508 = vmatprep.subr.mxu0 0.0
        %2509 = vmatpush2.msra.mxu0 0.0
        %2510 = vmatprep.subr.mxu0 0.0
        %2511 = vmatpush2.msra.mxu0 0.0
        %2512 = vmatprep.subr.mxu0 0.0
        %2513 = vmatpush2.msra.mxu0 0.0
        %2514 = vmatprep.subr.mxu0 0.0
        %2515 = vmatpush2.msra.mxu0 0.0
        %2516 = vmatprep.subr.mxu0 0.0
        %2517 = vmatpush2.msra.mxu0 0.0
        %2518 = vmatprep.subr.mxu0 0.0
        %2519 = vmatpush2.msra.mxu0 0.0
        %2520 = vmatprep.subr.mxu0 0.0
        %2521 = vmatpush2.msra.mxu0 0.0
        %2522 = vmatprep.mubr.f32.mxu0 0.0
        %2523 = vmatmul.mubr.f32.gmra.mxu0 %v2453
        %v2524 = vpop.f32.mrf.mxu0
        %v2525 = vadd.f32 0.0, %v2524
        %v2526 = vpop.f32.mrf.mxu0
        %v2527 = vadd.f32 0.0, %v2526
        %2528 = vmatprep.mubr.f32.mxu0 0.0
        %2529 = vmatmul.mubr.f32.gmra.mxu0 %v2456
        %v2530 = vpop.f32.mrf.mxu0
        %v2531 = vadd.f32 0.0, %v2530
        %v2532 = vpop.f32.mrf.mxu0
        %v2533 = vadd.f32 0.0, %v2532
        %2534 = vdwg.mxu0
        %v2535 = vmax.f32 %v2439, %v2525
        %v2536 = vmax.f32 %v2441, %v2527
        %v2537 = vmax.f32 %v2445, %v2531
        %v2538 = vmax.f32 %v2447, %v2533
        %v2539 = vld [vmem:[%s4] sm:$0xff]
        %v2540 = vld [vmem:[%s4 + $0x8] sm:$0xff]
        %v2541 = vld [vmem:[%s4 + $0x10] sm:$0xff]
        %v2542 = vld [vmem:[%s4 + $0x18] sm:$0xff]
        %v2543 = vld [vmem:[%s4 + $0x20] sm:$0xff]
        %v2544 = vld [vmem:[%s4 + $0x28] sm:$0xff]
        %v2545 = vld [vmem:[%s4 + $0x30] sm:$0xff]
        %v2546 = vld [vmem:[%s4 + $0x38] sm:$0xff]
        %v2547 = vld [vmem:[%s4 + $0x40] sm:$0xff]
        %v2548 = vld [vmem:[%s4 + $0x48] sm:$0xff]
        %v2549 = vld [vmem:[%s4 + $0x50] sm:$0xff]
        %v2550 = vld [vmem:[%s4 + $0x58] sm:$0xff]
        %v2551 = vld [vmem:[%s4 + $0x60] sm:$0xff]
        %v2552 = vld [vmem:[%s4 + $0x68] sm:$0xff]
        %v2553 = vld [vmem:[%s4 + $0x70] sm:$0xff]
        %v2554 = vld [vmem:[%s4 + $0x78] sm:$0xff]
        %v2555 = vld [vmem:[%s4 + $0x80] sm:$0xff]
        %v2556 = vld [vmem:[%s4 + $0x88] sm:$0xff]
        %v2557 = vld [vmem:[%s4 + $0x90] sm:$0xff]
        %v2558 = vld [vmem:[%s4 + $0x98] sm:$0xff]
        %v2559 = vld [vmem:[%s4 + $0xa0] sm:$0xff]
        %vm2560 = vcmask 326656
        %v2562 = vsel %vm2560, %v2536, 0
        %v2565 = vsel %vm2560, %v2538, 0
        %2567 = vmatprep.subr.mxu0 0.0
        %2568 = vmatpush1.msra.mxu0 %v2554
        %2569 = vmatprep.subr.mxu0 0.0
        %2570 = vmatpush1.msra.mxu0 %v2553
        %2571 = vmatprep.subr.mxu0 0.0
        %2572 = vmatpush1.msra.mxu0 %v2552
        %2573 = vmatprep.subr.mxu0 0.0
        %2574 = vmatpush1.msra.mxu0 %v2551
        %2575 = vmatprep.subr.mxu0 0.0
        %2576 = vmatpush1.msra.mxu0 %v2550
        %2577 = vmatprep.subr.mxu0 0.0
        %2578 = vmatpush1.msra.mxu0 %v2549
        %2579 = vmatprep.subr.mxu0 0.0
        %2580 = vmatpush1.msra.mxu0 %v2548
        %2581 = vmatprep.subr.mxu0 0.0
        %2582 = vmatpush1.msra.mxu0 %v2547
        %2583 = vmatprep.subr.mxu0 0.0
        %2584 = vmatpush1.msra.mxu0 %v2546
        %2585 = vmatprep.subr.mxu0 0.0
        %2586 = vmatpush1.msra.mxu0 %v2545
        %2587 = vmatprep.subr.mxu0 0.0
        %2588 = vmatpush1.msra.mxu0 %v2544
        %2589 = vmatprep.subr.mxu0 0.0
        %2590 = vmatpush1.msra.mxu0 %v2543
        %2591 = vmatprep.subr.mxu0 0.0
        %2592 = vmatpush1.msra.mxu0 %v2542
        %2593 = vmatprep.subr.mxu0 0.0
        %2594 = vmatpush1.msra.mxu0 %v2541
        %2595 = vmatprep.subr.mxu0 0.0
        %2596 = vmatpush1.msra.mxu0 %v2540
        %2597 = vmatprep.subr.mxu0 0.0
        %2598 = vmatpush1.msra.mxu0 %v2539
        %2599 = vmatprep.subr.mxu0 0.0
        %2600 = vmatpush2.msra.mxu0 0.0
        %2601 = vmatprep.subr.mxu0 0.0
        %2602 = vmatpush2.msra.mxu0 0.0
        %2603 = vmatprep.subr.mxu0 0.0
        %2604 = vmatpush2.msra.mxu0 0.0
        %2605 = vmatprep.subr.mxu0 0.0
        %2606 = vmatpush2.msra.mxu0 0.0
        %2607 = vmatprep.subr.mxu0 0.0
        %2608 = vmatpush2.msra.mxu0 0.0
        %2609 = vmatprep.subr.mxu0 0.0
        %2610 = vmatpush2.msra.mxu0 0.0
        %2611 = vmatprep.subr.mxu0 0.0
        %2612 = vmatpush2.msra.mxu0 0.0
        %2613 = vmatprep.subr.mxu0 0.0
        %2614 = vmatpush2.msra.mxu0 0.0
        %2615 = vmatprep.subr.mxu0 0.0
        %2616 = vmatpush2.msra.mxu0 0.0
        %2617 = vmatprep.subr.mxu0 0.0
        %2618 = vmatpush2.msra.mxu0 0.0
        %2619 = vmatprep.subr.mxu0 0.0
        %2620 = vmatpush2.msra.mxu0 0.0
        %2621 = vmatprep.subr.mxu0 0.0
        %2622 = vmatpush2.msra.mxu0 %v2559
        %2623 = vmatprep.subr.mxu0 0.0
        %2624 = vmatpush2.msra.mxu0 %v2558
        %2625 = vmatprep.subr.mxu0 0.0
        %2626 = vmatpush2.msra.mxu0 %v2557
        %2627 = vmatprep.subr.mxu0 0.0
        %2628 = vmatpush2.msra.mxu0 %v2556
        %2629 = vmatprep.subr.mxu0 0.0
        %2630 = vmatpush2.msra.mxu0 %v2555
        %2631 = vmatprep.mubr.f32.mxu0 %v2562
        %2632 = vmatmul.mubr.f32.gmra.mxu0 %v2535
        %v2633 = vpop.f32.mrf.mxu0
        %v2634 = vadd.f32 0.0, %v2633
        %v2635 = vpop.f32.mrf.mxu0
        %2636 = vmatprep.mubr.f32.mxu0 %v2565
        %2637 = vmatmul.mubr.f32.gmra.mxu0 %v2537
        %v2638 = vpop.f32.mrf.mxu0
        %v2639 = vadd.f32 0.0, %v2638
        %v2640 = vpop.f32.mrf.mxu0
        %2641 = vdwg.mxu0
        %s2642 = scalar_lea.vmem %s4, 168
        %v2643 = vld [vmem:[%s2642] sm:$0xff]
        %v2644 = vld [vmem:[%s2642 + $0x8] sm:$0xff]
        %v2645 = vld [vmem:[%s2642 + $0x10] sm:$0xff]
        %v2646 = vld [vmem:[%s2642 + $0x18] sm:$0xff]
        %v2647 = vld [vmem:[%s2642 + $0x20] sm:$0xff]
        %v2648 = vld [vmem:[%s2642 + $0x28] sm:$0xff]
        %v2649 = vld [vmem:[%s2642 + $0x30] sm:$0xff]
        %v2650 = vld [vmem:[%s2642 + $0x38] sm:$0xff]
        %v2651 = vld [vmem:[%s2642 + $0x40] sm:$0xff]
        %v2652 = vld [vmem:[%s2642 + $0x48] sm:$0xff]
        %v2653 = vld [vmem:[%s2642 + $0x50] sm:$0xff]
        %v2654 = vld [vmem:[%s2642 + $0x58] sm:$0xff]
        %v2655 = vld [vmem:[%s2642 + $0x60] sm:$0xff]
        %v2656 = vld [vmem:[%s2642 + $0x68] sm:$0xff]
        %v2657 = vld [vmem:[%s2642 + $0x70] sm:$0xff]
        %v2658 = vld [vmem:[%s2642 + $0x78] sm:$0xff]
        %v2659 = vld [vmem:[%s2642 + $0x80] sm:$0xff]
        %v2660 = vld [vmem:[%s2642 + $0x88] sm:$0xff]
        %v2661 = vld [vmem:[%s2642 + $0x90] sm:$0xff]
        %v2662 = vld [vmem:[%s2642 + $0x98] sm:$0xff]
        %v2663 = vld [vmem:[%s2642 + $0xa0] sm:$0xff]
        %2664 = vmatprep.subr.mxu0 0.0
        %2665 = vmatpush1.msra.mxu0 %v2658
        %2666 = vmatprep.subr.mxu0 0.0
        %2667 = vmatpush1.msra.mxu0 %v2657
        %2668 = vmatprep.subr.mxu0 0.0
        %2669 = vmatpush1.msra.mxu0 %v2656
        %2670 = vmatprep.subr.mxu0 0.0
        %2671 = vmatpush1.msra.mxu0 %v2655
        %2672 = vmatprep.subr.mxu0 0.0
        %2673 = vmatpush1.msra.mxu0 %v2654
        %2674 = vmatprep.subr.mxu0 0.0
        %2675 = vmatpush1.msra.mxu0 %v2653
        %2676 = vmatprep.subr.mxu0 0.0
        %2677 = vmatpush1.msra.mxu0 %v2652
        %2678 = vmatprep.subr.mxu0 0.0
        %2679 = vmatpush1.msra.mxu0 %v2651
        %2680 = vmatprep.subr.mxu0 0.0
        %2681 = vmatpush1.msra.mxu0 %v2650
        %2682 = vmatprep.subr.mxu0 0.0
        %2683 = vmatpush1.msra.mxu0 %v2649
        %2684 = vmatprep.subr.mxu0 0.0
        %2685 = vmatpush1.msra.mxu0 %v2648
        %2686 = vmatprep.subr.mxu0 0.0
        %2687 = vmatpush1.msra.mxu0 %v2647
        %2688 = vmatprep.subr.mxu0 0.0
        %2689 = vmatpush1.msra.mxu0 %v2646
        %2690 = vmatprep.subr.mxu0 0.0
        %2691 = vmatpush1.msra.mxu0 %v2645
        %2692 = vmatprep.subr.mxu0 0.0
        %2693 = vmatpush1.msra.mxu0 %v2644
        %2694 = vmatprep.subr.mxu0 0.0
        %2695 = vmatpush1.msra.mxu0 %v2643
        %2696 = vmatprep.subr.mxu0 0.0
        %2697 = vmatpush2.msra.mxu0 0.0
        %2698 = vmatprep.subr.mxu0 0.0
        %2699 = vmatpush2.msra.mxu0 0.0
        %2700 = vmatprep.subr.mxu0 0.0
        %2701 = vmatpush2.msra.mxu0 0.0
        %2702 = vmatprep.subr.mxu0 0.0
        %2703 = vmatpush2.msra.mxu0 0.0
        %2704 = vmatprep.subr.mxu0 0.0
        %2705 = vmatpush2.msra.mxu0 0.0
        %2706 = vmatprep.subr.mxu0 0.0
        %2707 = vmatpush2.msra.mxu0 0.0
        %2708 = vmatprep.subr.mxu0 0.0
        %2709 = vmatpush2.msra.mxu0 0.0
        %2710 = vmatprep.subr.mxu0 0.0
        %2711 = vmatpush2.msra.mxu0 0.0
        %2712 = vmatprep.subr.mxu0 0.0
        %2713 = vmatpush2.msra.mxu0 0.0
        %2714 = vmatprep.subr.mxu0 0.0
        %2715 = vmatpush2.msra.mxu0 0.0
        %2716 = vmatprep.subr.mxu0 0.0
        %2717 = vmatpush2.msra.mxu0 0.0
        %2718 = vmatprep.subr.mxu0 0.0
        %2719 = vmatpush2.msra.mxu0 %v2663
        %2720 = vmatprep.subr.mxu0 0.0
        %2721 = vmatpush2.msra.mxu0 %v2662
        %2722 = vmatprep.subr.mxu0 0.0
        %2723 = vmatpush2.msra.mxu0 %v2661
        %2724 = vmatprep.subr.mxu0 0.0
        %2725 = vmatpush2.msra.mxu0 %v2660
        %2726 = vmatprep.subr.mxu0 0.0
        %2727 = vmatpush2.msra.mxu0 %v2659
        %2728 = vmatprep.mubr.f32.mxu0 %v2562
        %2729 = vmatmul.mubr.f32.gmra.mxu0 %v2535
        %v2730 = vpop.f32.mrf.mxu0
        %v2731 = vadd.f32 0.0, %v2730
        %v2732 = vpop.f32.mrf.mxu0
        %2733 = vmatprep.mubr.f32.mxu0 %v2565
        %2734 = vmatmul.mubr.f32.gmra.mxu0 %v2537
        %v2735 = vpop.f32.mrf.mxu0
        %v2736 = vadd.f32 0.0, %v2735
        %v2737 = vpop.f32.mrf.mxu0
        %2738 = vdwg.mxu0
        %v2739 = vmax.f32 %v2634, %v2731
        %v2740 = vmax.f32 %v2639, %v2736
        %vm2741 = vcmask 687104
        %2742 = vst.msk [vmem:[#allocation2] sm:$0xff] %vm2741, %v2739
        %vm2743 = vcmask 685056
        %2744 = vst.msk [vmem:[#allocation2 + $0x8] sm:$0x3f] %vm2743, %v2740
        %v2745 = vld [vmem:[#allocation2] sm:$0xff]
        %v2746 = vld [vmem:[#allocation2 + $0x8] sm:$0x3]
        %v2747 = vld [vmem:[%s5] sm:$0xff]
        %v2748 = vld [vmem:[%s5 + $0x8] sm:$0xff]
        %v2749 = vld [vmem:[%s5 + $0x10] sm:$0xff]
        %v2750 = vld [vmem:[%s5 + $0x18] sm:$0xff]
        %v2751 = vld [vmem:[%s5 + $0x20] sm:$0xff]
        %v2752 = vld [vmem:[%s5 + $0x28] sm:$0xff]
        %v2753 = vld [vmem:[%s5 + $0x30] sm:$0xff]
        %v2754 = vld [vmem:[%s5 + $0x38] sm:$0xff]
        %v2755 = vld [vmem:[%s5 + $0x40] sm:$0xff]
        %v2756 = vld [vmem:[%s5 + $0x48] sm:$0xff]
        %v2757 = vld [vmem:[%s5 + $0x50] sm:$0xff]
        %v2758 = vld [vmem:[%s5 + $0x58] sm:$0xff]
        %v2759 = vld [vmem:[%s5 + $0x60] sm:$0xff]
        %v2760 = vld [vmem:[%s5 + $0x68] sm:$0xff]
        %v2761 = vld [vmem:[%s5 + $0x70] sm:$0xff]
        %v2762 = vld [vmem:[%s5 + $0x78] sm:$0xff]
        %v2763 = vld [vmem:[%s5 + $0x80] sm:$0xff]
        %v2764 = vld [vmem:[%s5 + $0x88] sm:$0xff]
        %v2765 = vld [vmem:[%s5 + $0x90] sm:$0xff]
        %v2766 = vld [vmem:[%s5 + $0x98] sm:$0xff]
        %v2767 = vld [vmem:[%s5 + $0xa0] sm:$0xf]
        %v2768 = vld [vmem:[%s5 + $0xa8] sm:$0xf]
        %v2769 = vld [vmem:[#allocation2 + $0x1] sm:$0xff]
        %v2770 = vld [vmem:[#allocation2 + $0x9] sm:$0x3]
        %s2771 = scalar_lea.vmem %s5, 176
        %v2772 = vld [vmem:[%s2771] sm:$0xff]
        %v2773 = vld [vmem:[%s2771 + $0x8] sm:$0xff]
        %v2774 = vld [vmem:[%s2771 + $0x10] sm:$0xff]
        %v2775 = vld [vmem:[%s2771 + $0x18] sm:$0xff]
        %v2776 = vld [vmem:[%s2771 + $0x20] sm:$0xff]
        %v2777 = vld [vmem:[%s2771 + $0x28] sm:$0xff]
        %v2778 = vld [vmem:[%s2771 + $0x30] sm:$0xff]
        %v2779 = vld [vmem:[%s2771 + $0x38] sm:$0xff]
        %v2780 = vld [vmem:[%s2771 + $0x40] sm:$0xff]
        %v2781 = vld [vmem:[%s2771 + $0x48] sm:$0xff]
        %v2782 = vld [vmem:[%s2771 + $0x50] sm:$0xff]
        %v2783 = vld [vmem:[%s2771 + $0x58] sm:$0xff]
        %v2784 = vld [vmem:[%s2771 + $0x60] sm:$0xff]
        %v2785 = vld [vmem:[%s2771 + $0x68] sm:$0xff]
        %v2786 = vld [vmem:[%s2771 + $0x70] sm:$0xff]
        %v2787 = vld [vmem:[%s2771 + $0x78] sm:$0xff]
        %v2788 = vld [vmem:[%s2771 + $0x80] sm:$0xff]
        %v2789 = vld [vmem:[%s2771 + $0x88] sm:$0xff]
        %v2790 = vld [vmem:[%s2771 + $0x90] sm:$0xff]
        %v2791 = vld [vmem:[%s2771 + $0x98] sm:$0xff]
        %v2792 = vld [vmem:[%s2771 + $0xa0] sm:$0xf]
        %v2793 = vld [vmem:[%s2771 + $0xa8] sm:$0xf]
        %v2795 = vsel %vm2741, %v2769, 0
        %v2798 = vsel %vm2741, %v2770, 0
        %v2801 = vsel %vm2365, %v2792, 0
        %v2804 = vsel %vm2365, %v2793, 0
        %2806 = vmatprep.subr.mxu0 0.0
        %2807 = vmatpush1.msra.mxu0 0.0
        %2808 = vmatprep.subr.mxu0 0.0
        %2809 = vmatpush1.msra.mxu0 0.0
        %2810 = vmatprep.subr.mxu0 0.0
        %2811 = vmatpush1.msra.mxu0 0.0
        %2812 = vmatprep.subr.mxu0 0.0
        %2813 = vmatpush1.msra.mxu0 0.0
        %2814 = vmatprep.subr.mxu0 0.0
        %2815 = vmatpush1.msra.mxu0 0.0
        %2816 = vmatprep.subr.mxu0 %v2804
        %2817 = vmatpush1.msra.mxu0 %v2801
        %2818 = vmatprep.subr.mxu0 %v2791
        %2819 = vmatpush1.msra.mxu0 %v2790
        %2820 = vmatprep.subr.mxu0 %v2789
        %2821 = vmatpush1.msra.mxu0 %v2788
        %2822 = vmatprep.subr.mxu0 %v2787
        %2823 = vmatpush1.msra.mxu0 %v2786
        %2824 = vmatprep.subr.mxu0 %v2785
        %2825 = vmatpush1.msra.mxu0 %v2784
        %2826 = vmatprep.subr.mxu0 %v2783
        %2827 = vmatpush1.msra.mxu0 %v2782
        %2828 = vmatprep.subr.mxu0 %v2781
        %2829 = vmatpush1.msra.mxu0 %v2780
        %2830 = vmatprep.subr.mxu0 %v2779
        %2831 = vmatpush1.msra.mxu0 %v2778
        %2832 = vmatprep.subr.mxu0 %v2777
        %2833 = vmatpush1.msra.mxu0 %v2776
        %2834 = vmatprep.subr.mxu0 %v2775
        %2835 = vmatpush1.msra.mxu0 %v2774
        %2836 = vmatprep.subr.mxu0 %v2773
        %2837 = vmatpush1.msra.mxu0 %v2772
        %2838 = vmatprep.subr.mxu0 0.0
        %2839 = vmatpush2.msra.mxu0 0.0
        %2840 = vmatprep.subr.mxu0 0.0
        %2841 = vmatpush2.msra.mxu0 0.0
        %2842 = vmatprep.subr.mxu0 0.0
        %2843 = vmatpush2.msra.mxu0 0.0
        %2844 = vmatprep.subr.mxu0 0.0
        %2845 = vmatpush2.msra.mxu0 0.0
        %2846 = vmatprep.subr.mxu0 0.0
        %2847 = vmatpush2.msra.mxu0 0.0
        %2848 = vmatprep.subr.mxu0 0.0
        %2849 = vmatpush2.msra.mxu0 0.0
        %2850 = vmatprep.subr.mxu0 0.0
        %2851 = vmatpush2.msra.mxu0 0.0
        %2852 = vmatprep.subr.mxu0 0.0
        %2853 = vmatpush2.msra.mxu0 0.0
        %2854 = vmatprep.subr.mxu0 0.0
        %2855 = vmatpush2.msra.mxu0 0.0
        %2856 = vmatprep.subr.mxu0 0.0
        %2857 = vmatpush2.msra.mxu0 0.0
        %2858 = vmatprep.subr.mxu0 0.0
        %2859 = vmatpush2.msra.mxu0 0.0
        %2860 = vmatprep.subr.mxu0 0.0
        %2861 = vmatpush2.msra.mxu0 0.0
        %2862 = vmatprep.subr.mxu0 0.0
        %2863 = vmatpush2.msra.mxu0 0.0
        %2864 = vmatprep.subr.mxu0 0.0
        %2865 = vmatpush2.msra.mxu0 0.0
        %2866 = vmatprep.subr.mxu0 0.0
        %2867 = vmatpush2.msra.mxu0 0.0
        %2868 = vmatprep.subr.mxu0 0.0
        %2869 = vmatpush2.msra.mxu0 0.0
        %2870 = vmatprep.mubr.f32.mxu0 0.0
        %2871 = vmatmul.mubr.f32.gmra.mxu0 %v2795
        %v2872 = vpop.f32.mrf.mxu0
        %v2873 = vadd.f32 0.0, %v2872
        %v2874 = vpop.f32.mrf.mxu0
        %v2875 = vadd.f32 0.0, %v2874
        %2876 = vmatprep.mubr.f32.mxu0 0.0
        %2877 = vmatmul.mubr.f32.gmra.mxu0 %v2798
        %v2878 = vpop.f32.mrf.mxu0
        %v2879 = vadd.f32 0.0, %v2878
        %v2880 = vpop.f32.mrf.mxu0
        %v2881 = vadd.f32 0.0, %v2880
        %2882 = vdwg.mxu0
        %v2884 = vsel %vm2741, %v2745, 0
        %v2887 = vsel %vm2741, %v2746, 0
        %v2890 = vsel %vm2365, %v2767, 0
        %v2893 = vsel %vm2365, %v2768, 0
        %2895 = vmatprep.subr.mxu0 0.0
        %2896 = vmatpush1.msra.mxu0 0.0
        %2897 = vmatprep.subr.mxu0 0.0
        %2898 = vmatpush1.msra.mxu0 0.0
        %2899 = vmatprep.subr.mxu0 0.0
        %2900 = vmatpush1.msra.mxu0 0.0
        %2901 = vmatprep.subr.mxu0 0.0
        %2902 = vmatpush1.msra.mxu0 0.0
        %2903 = vmatprep.subr.mxu0 0.0
        %2904 = vmatpush1.msra.mxu0 0.0
        %2905 = vmatprep.subr.mxu0 %v2893
        %2906 = vmatpush1.msra.mxu0 %v2890
        %2907 = vmatprep.subr.mxu0 %v2766
        %2908 = vmatpush1.msra.mxu0 %v2765
        %2909 = vmatprep.subr.mxu0 %v2764
        %2910 = vmatpush1.msra.mxu0 %v2763
        %2911 = vmatprep.subr.mxu0 %v2762
        %2912 = vmatpush1.msra.mxu0 %v2761
        %2913 = vmatprep.subr.mxu0 %v2760
        %2914 = vmatpush1.msra.mxu0 %v2759
        %2915 = vmatprep.subr.mxu0 %v2758
        %2916 = vmatpush1.msra.mxu0 %v2757
        %2917 = vmatprep.subr.mxu0 %v2756
        %2918 = vmatpush1.msra.mxu0 %v2755
        %2919 = vmatprep.subr.mxu0 %v2754
        %2920 = vmatpush1.msra.mxu0 %v2753
        %2921 = vmatprep.subr.mxu0 %v2752
        %2922 = vmatpush1.msra.mxu0 %v2751
        %2923 = vmatprep.subr.mxu0 %v2750
        %2924 = vmatpush1.msra.mxu0 %v2749
        %2925 = vmatprep.subr.mxu0 %v2748
        %2926 = vmatpush1.msra.mxu0 %v2747
        %2927 = vmatprep.subr.mxu0 0.0
        %2928 = vmatpush2.msra.mxu0 0.0
        %2929 = vmatprep.subr.mxu0 0.0
        %2930 = vmatpush2.msra.mxu0 0.0
        %2931 = vmatprep.subr.mxu0 0.0
        %2932 = vmatpush2.msra.mxu0 0.0
        %2933 = vmatprep.subr.mxu0 0.0
        %2934 = vmatpush2.msra.mxu0 0.0
        %2935 = vmatprep.subr.mxu0 0.0
        %2936 = vmatpush2.msra.mxu0 0.0
        %2937 = vmatprep.subr.mxu0 0.0
        %2938 = vmatpush2.msra.mxu0 0.0
        %2939 = vmatprep.subr.mxu0 0.0
        %2940 = vmatpush2.msra.mxu0 0.0
        %2941 = vmatprep.subr.mxu0 0.0
        %2942 = vmatpush2.msra.mxu0 0.0
        %2943 = vmatprep.subr.mxu0 0.0
        %2944 = vmatpush2.msra.mxu0 0.0
        %2945 = vmatprep.subr.mxu0 0.0
        %2946 = vmatpush2.msra.mxu0 0.0
        %2947 = vmatprep.subr.mxu0 0.0
        %2948 = vmatpush2.msra.mxu0 0.0
        %2949 = vmatprep.subr.mxu0 0.0
        %2950 = vmatpush2.msra.mxu0 0.0
        %2951 = vmatprep.subr.mxu0 0.0
        %2952 = vmatpush2.msra.mxu0 0.0
        %2953 = vmatprep.subr.mxu0 0.0
        %2954 = vmatpush2.msra.mxu0 0.0
        %2955 = vmatprep.subr.mxu0 0.0
        %2956 = vmatpush2.msra.mxu0 0.0
        %2957 = vmatprep.subr.mxu0 0.0
        %2958 = vmatpush2.msra.mxu0 0.0
        %2959 = vmatprep.mubr.f32.mxu0 0.0
        %2960 = vmatmul.mubr.f32.gmra.mxu0 %v2884
        %v2961 = vpop.f32.mrf.mxu0
        %v2962 = vadd.f32 %v2873, %v2961
        %v2963 = vpop.f32.mrf.mxu0
        %v2964 = vadd.f32 %v2875, %v2963
        %2965 = vmatprep.mubr.f32.mxu0 0.0
        %2966 = vmatmul.mubr.f32.gmra.mxu0 %v2887
        %v2967 = vpop.f32.mrf.mxu0
        %v2968 = vadd.f32 %v2879, %v2967
        %v2969 = vpop.f32.mrf.mxu0
        %v2970 = vadd.f32 %v2881, %v2969
        %2971 = vdwg.mxu0
        %v2972 = vld [vmem:[#allocation2 + $0x2] sm:$0xff]
        %v2973 = vld [vmem:[#allocation2 + $0xa] sm:$0x3]
        %s2974 = scalar_lea.vmem %s5, 352
        %v2975 = vld [vmem:[%s2974] sm:$0xff]
        %v2976 = vld [vmem:[%s2974 + $0x8] sm:$0xff]
        %v2977 = vld [vmem:[%s2974 + $0x10] sm:$0xff]
        %v2978 = vld [vmem:[%s2974 + $0x18] sm:$0xff]
        %v2979 = vld [vmem:[%s2974 + $0x20] sm:$0xff]
        %v2980 = vld [vmem:[%s2974 + $0x28] sm:$0xff]
        %v2981 = vld [vmem:[%s2974 + $0x30] sm:$0xff]
        %v2982 = vld [vmem:[%s2974 + $0x38] sm:$0xff]
        %v2983 = vld [vmem:[%s2974 + $0x40] sm:$0xff]
        %v2984 = vld [vmem:[%s2974 + $0x48] sm:$0xff]
        %v2985 = vld [vmem:[%s2974 + $0x50] sm:$0xff]
        %v2986 = vld [vmem:[%s2974 + $0x58] sm:$0xff]
        %v2987 = vld [vmem:[%s2974 + $0x60] sm:$0xff]
        %v2988 = vld [vmem:[%s2974 + $0x68] sm:$0xff]
        %v2989 = vld [vmem:[%s2974 + $0x70] sm:$0xff]
        %v2990 = vld [vmem:[%s2974 + $0x78] sm:$0xff]
        %v2991 = vld [vmem:[%s2974 + $0x80] sm:$0xff]
        %v2992 = vld [vmem:[%s2974 + $0x88] sm:$0xff]
        %v2993 = vld [vmem:[%s2974 + $0x90] sm:$0xff]
        %v2994 = vld [vmem:[%s2974 + $0x98] sm:$0xff]
        %v2995 = vld [vmem:[%s2974 + $0xa0] sm:$0xf]
        %v2996 = vld [vmem:[%s2974 + $0xa8] sm:$0xf]
        %v2998 = vsel %vm2741, %v2972, 0
        %v3001 = vsel %vm2741, %v2973, 0
        %v3004 = vsel %vm2365, %v2995, 0
        %v3007 = vsel %vm2365, %v2996, 0
        %3009 = vmatprep.subr.mxu0 0.0
        %3010 = vmatpush1.msra.mxu0 0.0
        %3011 = vmatprep.subr.mxu0 0.0
        %3012 = vmatpush1.msra.mxu0 0.0
        %3013 = vmatprep.subr.mxu0 0.0
        %3014 = vmatpush1.msra.mxu0 0.0
        %3015 = vmatprep.subr.mxu0 0.0
        %3016 = vmatpush1.msra.mxu0 0.0
        %3017 = vmatprep.subr.mxu0 0.0
        %3018 = vmatpush1.msra.mxu0 0.0
        %3019 = vmatprep.subr.mxu0 %v3007
        %3020 = vmatpush1.msra.mxu0 %v3004
        %3021 = vmatprep.subr.mxu0 %v2994
        %3022 = vmatpush1.msra.mxu0 %v2993
        %3023 = vmatprep.subr.mxu0 %v2992
        %3024 = vmatpush1.msra.mxu0 %v2991
        %3025 = vmatprep.subr.mxu0 %v2990
        %3026 = vmatpush1.msra.mxu0 %v2989
        %3027 = vmatprep.subr.mxu0 %v2988
        %3028 = vmatpush1.msra.mxu0 %v2987
        %3029 = vmatprep.subr.mxu0 %v2986
        %3030 = vmatpush1.msra.mxu0 %v2985
        %3031 = vmatprep.subr.mxu0 %v2984
        %3032 = vmatpush1.msra.mxu0 %v2983
        %3033 = vmatprep.subr.mxu0 %v2982
        %3034 = vmatpush1.msra.mxu0 %v2981
        %3035 = vmatprep.subr.mxu0 %v2980
        %3036 = vmatpush1.msra.mxu0 %v2979
        %3037 = vmatprep.subr.mxu0 %v2978
        %3038 = vmatpush1.msra.mxu0 %v2977
        %3039 = vmatprep.subr.mxu0 %v2976
        %3040 = vmatpush1.msra.mxu0 %v2975
        %3041 = vmatprep.subr.mxu0 0.0
        %3042 = vmatpush2.msra.mxu0 0.0
        %3043 = vmatprep.subr.mxu0 0.0
        %3044 = vmatpush2.msra.mxu0 0.0
        %3045 = vmatprep.subr.mxu0 0.0
        %3046 = vmatpush2.msra.mxu0 0.0
        %3047 = vmatprep.subr.mxu0 0.0
        %3048 = vmatpush2.msra.mxu0 0.0
        %3049 = vmatprep.subr.mxu0 0.0
        %3050 = vmatpush2.msra.mxu0 0.0
        %3051 = vmatprep.subr.mxu0 0.0
        %3052 = vmatpush2.msra.mxu0 0.0
        %3053 = vmatprep.subr.mxu0 0.0
        %3054 = vmatpush2.msra.mxu0 0.0
        %3055 = vmatprep.subr.mxu0 0.0
        %3056 = vmatpush2.msra.mxu0 0.0
        %3057 = vmatprep.subr.mxu0 0.0
        %3058 = vmatpush2.msra.mxu0 0.0
        %3059 = vmatprep.subr.mxu0 0.0
        %3060 = vmatpush2.msra.mxu0 0.0
        %3061 = vmatprep.subr.mxu0 0.0
        %3062 = vmatpush2.msra.mxu0 0.0
        %3063 = vmatprep.subr.mxu0 0.0
        %3064 = vmatpush2.msra.mxu0 0.0
        %3065 = vmatprep.subr.mxu0 0.0
        %3066 = vmatpush2.msra.mxu0 0.0
        %3067 = vmatprep.subr.mxu0 0.0
        %3068 = vmatpush2.msra.mxu0 0.0
        %3069 = vmatprep.subr.mxu0 0.0
        %3070 = vmatpush2.msra.mxu0 0.0
        %3071 = vmatprep.subr.mxu0 0.0
        %3072 = vmatpush2.msra.mxu0 0.0
        %3073 = vmatprep.mubr.f32.mxu0 0.0
        %3074 = vmatmul.mubr.f32.gmra.mxu0 %v2998
        %v3075 = vpop.f32.mrf.mxu0
        %v3076 = vadd.f32 0.0, %v3075
        %v3077 = vpop.f32.mrf.mxu0
        %v3078 = vadd.f32 0.0, %v3077
        %3079 = vmatprep.mubr.f32.mxu0 0.0
        %3080 = vmatmul.mubr.f32.gmra.mxu0 %v3001
        %v3081 = vpop.f32.mrf.mxu0
        %v3082 = vadd.f32 0.0, %v3081
        %v3083 = vpop.f32.mrf.mxu0
        %v3084 = vadd.f32 0.0, %v3083
        %3085 = vdwg.mxu0
        %v3086 = vadd.f32 %v2962, %v3076
        %v3087 = vadd.f32 %v2964, %v3078
        %v3088 = vadd.f32 %v2968, %v3082
        %v3089 = vadd.f32 %v2970, %v3084
        %v3090 = vld [vmem:[#allocation2 + $0x3] sm:$0xff]
        %v3091 = vld [vmem:[#allocation2 + $0xb] sm:$0x3]
        %s3092 = scalar_lea.vmem %s5, 528
        %v3093 = vld [vmem:[%s3092] sm:$0xff]
        %v3094 = vld [vmem:[%s3092 + $0x8] sm:$0xff]
        %v3095 = vld [vmem:[%s3092 + $0x10] sm:$0xff]
        %v3096 = vld [vmem:[%s3092 + $0x18] sm:$0xff]
        %v3097 = vld [vmem:[%s3092 + $0x20] sm:$0xff]
        %v3098 = vld [vmem:[%s3092 + $0x28] sm:$0xff]
        %v3099 = vld [vmem:[%s3092 + $0x30] sm:$0xff]
        %v3100 = vld [vmem:[%s3092 + $0x38] sm:$0xff]
        %v3101 = vld [vmem:[%s3092 + $0x40] sm:$0xff]
        %v3102 = vld [vmem:[%s3092 + $0x48] sm:$0xff]
        %v3103 = vld [vmem:[%s3092 + $0x50] sm:$0xff]
        %v3104 = vld [vmem:[%s3092 + $0x58] sm:$0xff]
        %v3105 = vld [vmem:[%s3092 + $0x60] sm:$0xff]
        %v3106 = vld [vmem:[%s3092 + $0x68] sm:$0xff]
        %v3107 = vld [vmem:[%s3092 + $0x70] sm:$0xff]
        %v3108 = vld [vmem:[%s3092 + $0x78] sm:$0xff]
        %v3109 = vld [vmem:[%s3092 + $0x80] sm:$0xff]
        %v3110 = vld [vmem:[%s3092 + $0x88] sm:$0xff]
        %v3111 = vld [vmem:[%s3092 + $0x90] sm:$0xff]
        %v3112 = vld [vmem:[%s3092 + $0x98] sm:$0xff]
        %v3113 = vld [vmem:[%s3092 + $0xa0] sm:$0xf]
        %v3114 = vld [vmem:[%s3092 + $0xa8] sm:$0xf]
        %v3116 = vsel %vm2741, %v3090, 0
        %v3119 = vsel %vm2741, %v3091, 0
        %v3122 = vsel %vm2365, %v3113, 0
        %v3125 = vsel %vm2365, %v3114, 0
        %3127 = vmatprep.subr.mxu0 0.0
        %3128 = vmatpush1.msra.mxu0 0.0
        %3129 = vmatprep.subr.mxu0 0.0
        %3130 = vmatpush1.msra.mxu0 0.0
        %3131 = vmatprep.subr.mxu0 0.0
        %3132 = vmatpush1.msra.mxu0 0.0
        %3133 = vmatprep.subr.mxu0 0.0
        %3134 = vmatpush1.msra.mxu0 0.0
        %3135 = vmatprep.subr.mxu0 0.0
        %3136 = vmatpush1.msra.mxu0 0.0
        %3137 = vmatprep.subr.mxu0 %v3125
        %3138 = vmatpush1.msra.mxu0 %v3122
        %3139 = vmatprep.subr.mxu0 %v3112
        %3140 = vmatpush1.msra.mxu0 %v3111
        %3141 = vmatprep.subr.mxu0 %v3110
        %3142 = vmatpush1.msra.mxu0 %v3109
        %3143 = vmatprep.subr.mxu0 %v3108
        %3144 = vmatpush1.msra.mxu0 %v3107
        %3145 = vmatprep.subr.mxu0 %v3106
        %3146 = vmatpush1.msra.mxu0 %v3105
        %3147 = vmatprep.subr.mxu0 %v3104
        %3148 = vmatpush1.msra.mxu0 %v3103
        %3149 = vmatprep.subr.mxu0 %v3102
        %3150 = vmatpush1.msra.mxu0 %v3101
        %3151 = vmatprep.subr.mxu0 %v3100
        %3152 = vmatpush1.msra.mxu0 %v3099
        %3153 = vmatprep.subr.mxu0 %v3098
        %3154 = vmatpush1.msra.mxu0 %v3097
        %3155 = vmatprep.subr.mxu0 %v3096
        %3156 = vmatpush1.msra.mxu0 %v3095
        %3157 = vmatprep.subr.mxu0 %v3094
        %3158 = vmatpush1.msra.mxu0 %v3093
        %3159 = vmatprep.subr.mxu0 0.0
        %3160 = vmatpush2.msra.mxu0 0.0
        %3161 = vmatprep.subr.mxu0 0.0
        %3162 = vmatpush2.msra.mxu0 0.0
        %3163 = vmatprep.subr.mxu0 0.0
        %3164 = vmatpush2.msra.mxu0 0.0
        %3165 = vmatprep.subr.mxu0 0.0
        %3166 = vmatpush2.msra.mxu0 0.0
        %3167 = vmatprep.subr.mxu0 0.0
        %3168 = vmatpush2.msra.mxu0 0.0
        %3169 = vmatprep.subr.mxu0 0.0
        %3170 = vmatpush2.msra.mxu0 0.0
        %3171 = vmatprep.subr.mxu0 0.0
        %3172 = vmatpush2.msra.mxu0 0.0
        %3173 = vmatprep.subr.mxu0 0.0
        %3174 = vmatpush2.msra.mxu0 0.0
        %3175 = vmatprep.subr.mxu0 0.0
        %3176 = vmatpush2.msra.mxu0 0.0
        %3177 = vmatprep.subr.mxu0 0.0
        %3178 = vmatpush2.msra.mxu0 0.0
        %3179 = vmatprep.subr.mxu0 0.0
        %3180 = vmatpush2.msra.mxu0 0.0
        %3181 = vmatprep.subr.mxu0 0.0
        %3182 = vmatpush2.msra.mxu0 0.0
        %3183 = vmatprep.subr.mxu0 0.0
        %3184 = vmatpush2.msra.mxu0 0.0
        %3185 = vmatprep.subr.mxu0 0.0
        %3186 = vmatpush2.msra.mxu0 0.0
        %3187 = vmatprep.subr.mxu0 0.0
        %3188 = vmatpush2.msra.mxu0 0.0
        %3189 = vmatprep.subr.mxu0 0.0
        %3190 = vmatpush2.msra.mxu0 0.0
        %3191 = vmatprep.mubr.f32.mxu0 0.0
        %3192 = vmatmul.mubr.f32.gmra.mxu0 %v3116
        %v3193 = vpop.f32.mrf.mxu0
        %v3194 = vadd.f32 0.0, %v3193
        %v3195 = vpop.f32.mrf.mxu0
        %v3196 = vadd.f32 0.0, %v3195
        %3197 = vmatprep.mubr.f32.mxu0 0.0
        %3198 = vmatmul.mubr.f32.gmra.mxu0 %v3119
        %v3199 = vpop.f32.mrf.mxu0
        %v3200 = vadd.f32 0.0, %v3199
        %v3201 = vpop.f32.mrf.mxu0
        %v3202 = vadd.f32 0.0, %v3201
        %3203 = vdwg.mxu0
        %v3204 = vadd.f32 %v3086, %v3194
        %v3205 = vadd.f32 %v3087, %v3196
        %v3206 = vadd.f32 %v3088, %v3200
        %v3207 = vadd.f32 %v3089, %v3202
        %v3208 = vld [vmem:[#allocation2 + $0x4] sm:$0xff]
        %v3209 = vld [vmem:[#allocation2 + $0xc] sm:$0x3]
        %s3210 = scalar_lea.vmem %s5, 704
        %v3211 = vld [vmem:[%s3210] sm:$0xff]
        %v3212 = vld [vmem:[%s3210 + $0x8] sm:$0xff]
        %v3213 = vld [vmem:[%s3210 + $0x10] sm:$0xff]
        %v3214 = vld [vmem:[%s3210 + $0x18] sm:$0xff]
        %v3215 = vld [vmem:[%s3210 + $0x20] sm:$0xff]
        %v3216 = vld [vmem:[%s3210 + $0x28] sm:$0xff]
        %v3217 = vld [vmem:[%s3210 + $0x30] sm:$0xff]
        %v3218 = vld [vmem:[%s3210 + $0x38] sm:$0xff]
        %v3219 = vld [vmem:[%s3210 + $0x40] sm:$0xff]
        %v3220 = vld [vmem:[%s3210 + $0x48] sm:$0xff]
        %v3221 = vld [vmem:[%s3210 + $0x50] sm:$0xff]
        %v3222 = vld [vmem:[%s3210 + $0x58] sm:$0xff]
        %v3223 = vld [vmem:[%s3210 + $0x60] sm:$0xff]
        %v3224 = vld [vmem:[%s3210 + $0x68] sm:$0xff]
        %v3225 = vld [vmem:[%s3210 + $0x70] sm:$0xff]
        %v3226 = vld [vmem:[%s3210 + $0x78] sm:$0xff]
        %v3227 = vld [vmem:[%s3210 + $0x80] sm:$0xff]
        %v3228 = vld [vmem:[%s3210 + $0x88] sm:$0xff]
        %v3229 = vld [vmem:[%s3210 + $0x90] sm:$0xff]
        %v3230 = vld [vmem:[%s3210 + $0x98] sm:$0xff]
        %v3231 = vld [vmem:[%s3210 + $0xa0] sm:$0xf]
        %v3232 = vld [vmem:[%s3210 + $0xa8] sm:$0xf]
        %v3234 = vsel %vm2741, %v3208, 0
        %v3237 = vsel %vm2741, %v3209, 0
        %v3240 = vsel %vm2365, %v3231, 0
        %v3243 = vsel %vm2365, %v3232, 0
        %3245 = vmatprep.subr.mxu0 0.0
        %3246 = vmatpush1.msra.mxu0 0.0
        %3247 = vmatprep.subr.mxu0 0.0
        %3248 = vmatpush1.msra.mxu0 0.0
        %3249 = vmatprep.subr.mxu0 0.0
        %3250 = vmatpush1.msra.mxu0 0.0
        %3251 = vmatprep.subr.mxu0 0.0
        %3252 = vmatpush1.msra.mxu0 0.0
        %3253 = vmatprep.subr.mxu0 0.0
        %3254 = vmatpush1.msra.mxu0 0.0
        %3255 = vmatprep.subr.mxu0 %v3243
        %3256 = vmatpush1.msra.mxu0 %v3240
        %3257 = vmatprep.subr.mxu0 %v3230
        %3258 = vmatpush1.msra.mxu0 %v3229
        %3259 = vmatprep.subr.mxu0 %v3228
        %3260 = vmatpush1.msra.mxu0 %v3227
        %3261 = vmatprep.subr.mxu0 %v3226
        %3262 = vmatpush1.msra.mxu0 %v3225
        %3263 = vmatprep.subr.mxu0 %v3224
        %3264 = vmatpush1.msra.mxu0 %v3223
        %3265 = vmatprep.subr.mxu0 %v3222
        %3266 = vmatpush1.msra.mxu0 %v3221
        %3267 = vmatprep.subr.mxu0 %v3220
        %3268 = vmatpush1.msra.mxu0 %v3219
        %3269 = vmatprep.subr.mxu0 %v3218
        %3270 = vmatpush1.msra.mxu0 %v3217
        %3271 = vmatprep.subr.mxu0 %v3216
        %3272 = vmatpush1.msra.mxu0 %v3215
        %3273 = vmatprep.subr.mxu0 %v3214
        %3274 = vmatpush1.msra.mxu0 %v3213
        %3275 = vmatprep.subr.mxu0 %v3212
        %3276 = vmatpush1.msra.mxu0 %v3211
        %3277 = vmatprep.subr.mxu0 0.0
        %3278 = vmatpush2.msra.mxu0 0.0
        %3279 = vmatprep.subr.mxu0 0.0
        %3280 = vmatpush2.msra.mxu0 0.0
        %3281 = vmatprep.subr.mxu0 0.0
        %3282 = vmatpush2.msra.mxu0 0.0
        %3283 = vmatprep.subr.mxu0 0.0
        %3284 = vmatpush2.msra.mxu0 0.0
        %3285 = vmatprep.subr.mxu0 0.0
        %3286 = vmatpush2.msra.mxu0 0.0
        %3287 = vmatprep.subr.mxu0 0.0
        %3288 = vmatpush2.msra.mxu0 0.0
        %3289 = vmatprep.subr.mxu0 0.0
        %3290 = vmatpush2.msra.mxu0 0.0
        %3291 = vmatprep.subr.mxu0 0.0
        %3292 = vmatpush2.msra.mxu0 0.0
        %3293 = vmatprep.subr.mxu0 0.0
        %3294 = vmatpush2.msra.mxu0 0.0
        %3295 = vmatprep.subr.mxu0 0.0
        %3296 = vmatpush2.msra.mxu0 0.0
        %3297 = vmatprep.subr.mxu0 0.0
        %3298 = vmatpush2.msra.mxu0 0.0
        %3299 = vmatprep.subr.mxu0 0.0
        %3300 = vmatpush2.msra.mxu0 0.0
        %3301 = vmatprep.subr.mxu0 0.0
        %3302 = vmatpush2.msra.mxu0 0.0
        %3303 = vmatprep.subr.mxu0 0.0
        %3304 = vmatpush2.msra.mxu0 0.0
        %3305 = vmatprep.subr.mxu0 0.0
        %3306 = vmatpush2.msra.mxu0 0.0
        %3307 = vmatprep.subr.mxu0 0.0
        %3308 = vmatpush2.msra.mxu0 0.0
        %3309 = vmatprep.mubr.f32.mxu0 0.0
        %3310 = vmatmul.mubr.f32.gmra.mxu0 %v3234
        %v3311 = vpop.f32.mrf.mxu0
        %v3312 = vadd.f32 0.0, %v3311
        %v3313 = vpop.f32.mrf.mxu0
        %v3314 = vadd.f32 0.0, %v3313
        %3315 = vmatprep.mubr.f32.mxu0 0.0
        %3316 = vmatmul.mubr.f32.gmra.mxu0 %v3237
        %v3317 = vpop.f32.mrf.mxu0
        %v3318 = vadd.f32 0.0, %v3317
        %v3319 = vpop.f32.mrf.mxu0
        %v3320 = vadd.f32 0.0, %v3319
        %3321 = vdwg.mxu0
        %v3322 = vadd.f32 %v3204, %v3312
        %v3323 = vadd.f32 %v3205, %v3314
        %v3324 = vadd.f32 %v3206, %v3318
        %v3325 = vadd.f32 %v3207, %v3320
        %v3326 = vld [vmem:[%s6] sm:$0x3]
        %v3328 = vlaneseq
        %v3329 = vshrl.u32 %v3328, 7
        %v3330 = vsub.s32 0, %v3329
        %v3331 = vrot.slane %v3326, %v3330
        %v3332 = vlaneseq
        %v3333 = vshrl.u32 %v3332, 7
        %v3334 = vsub.s32 1, %v3333
        %v3335 = vrot.slane %v3326, %v3334
        %v3338 = vadd.f32 %v3322, %v3331
        %v3339 = vadd.f32 %v3323, %v3335
        %v3340 = vadd.f32 %v3324, %v3331
        %v3341 = vadd.f32 %v3325, %v3335
        %v3342 = vmax.f32 %v3338, 0.0
        %v3343 = vmax.f32 %v3339, 0.0
        %v3344 = vmax.f32 %v3340, 0.0
        %v3345 = vmax.f32 %v3341, 0.0
        %v3346 = vld [vmem:[%s7] sm:$0x1f]
        %vm3347 = vcmask 80896
        %v3349 = vsel %vm3347, %v3346, 0
        %vm3351 = vcmask 1041408
        %v3353 = vsel %vm3351, %v3344, 0
        %v3356 = vsel %vm3351, %v3345, 0
        %3358 = vmatprep.subr.mxu0 0.0
        %3359 = vmatpush1.msra.mxu0 0.0
        %3360 = vmatprep.subr.mxu0 0.0
        %3361 = vmatpush1.msra.mxu0 0.0
        %3362 = vmatprep.subr.mxu0 0.0
        %3363 = vmatpush1.msra.mxu0 0.0
        %3364 = vmatprep.subr.mxu0 0.0
        %3365 = vmatpush1.msra.mxu0 0.0
        %3366 = vmatprep.subr.mxu0 0.0
        %3367 = vmatpush1.msra.mxu0 0.0
        %3368 = vmatprep.subr.mxu0 0.0
        %3369 = vmatpush1.msra.mxu0 0.0
        %3370 = vmatprep.subr.mxu0 0.0
        %3371 = vmatpush1.msra.mxu0 0.0
        %3372 = vmatprep.subr.mxu0 0.0
        %3373 = vmatpush1.msra.mxu0 0.0
        %3374 = vmatprep.subr.mxu0 0.0
        %3375 = vmatpush1.msra.mxu0 0.0
        %3376 = vmatprep.subr.mxu0 0.0
        %3377 = vmatpush1.msra.mxu0 0.0
        %3378 = vmatprep.subr.mxu0 0.0
        %3379 = vmatpush1.msra.mxu0 0.0
        %3380 = vmatprep.subr.mxu0 0.0
        %3381 = vmatpush1.msra.mxu0 0.0
        %3382 = vmatprep.subr.mxu0 0.0
        %3383 = vmatpush1.msra.mxu0 0.0
        %3384 = vmatprep.subr.mxu0 0.0
        %3385 = vmatpush1.msra.mxu0 0.0
        %3386 = vmatprep.subr.mxu0 %v3356
        %3387 = vmatpush1.msra.mxu0 %v3353
        %3388 = vmatprep.subr.mxu0 %v3343
        %3389 = vmatpush1.msra.mxu0 %v3342
        %3390 = vmatprep.subr.mxu0 0.0
        %3391 = vmatpush2.msra.mxu0 0.0
        %3392 = vmatprep.subr.mxu0 0.0
        %3393 = vmatpush2.msra.mxu0 0.0
        %3394 = vmatprep.subr.mxu0 0.0
        %3395 = vmatpush2.msra.mxu0 0.0
        %3396 = vmatprep.subr.mxu0 0.0
        %3397 = vmatpush2.msra.mxu0 0.0
        %3398 = vmatprep.subr.mxu0 0.0
        %3399 = vmatpush2.msra.mxu0 0.0
        %3400 = vmatprep.subr.mxu0 0.0
        %3401 = vmatpush2.msra.mxu0 0.0
        %3402 = vmatprep.subr.mxu0 0.0
        %3403 = vmatpush2.msra.mxu0 0.0
        %3404 = vmatprep.subr.mxu0 0.0
        %3405 = vmatpush2.msra.mxu0 0.0
        %3406 = vmatprep.subr.mxu0 0.0
        %3407 = vmatpush2.msra.mxu0 0.0
        %3408 = vmatprep.subr.mxu0 0.0
        %3409 = vmatpush2.msra.mxu0 0.0
        %3410 = vmatprep.subr.mxu0 0.0
        %3411 = vmatpush2.msra.mxu0 0.0
        %3412 = vmatprep.subr.mxu0 0.0
        %3413 = vmatpush2.msra.mxu0 0.0
        %3414 = vmatprep.subr.mxu0 0.0
        %3415 = vmatpush2.msra.mxu0 0.0
        %3416 = vmatprep.subr.mxu0 0.0
        %3417 = vmatpush2.msra.mxu0 0.0
        %3418 = vmatprep.subr.mxu0 0.0
        %3419 = vmatpush2.msra.mxu0 0.0
        %3420 = vmatprep.subr.mxu0 0.0
        %3421 = vmatpush2.msra.mxu0 0.0
        %3422 = vmatprep.mubr.f32.mxu0 0.0
        %3423 = vmatmul.mubr.f32.gmra.mxu0 %v3349
        %v3424 = vpop.f32.mrf.mxu0
        %v3425 = vadd.f32 0.0, %v3424
        %v3426 = vpop.f32.mrf.mxu0
        %v3427 = vadd.f32 0.0, %v3426
        %3428 = vdwg.mxu0
        %s3429 = scalar_lea.vmem %s7, 8
        %v3430 = vld [vmem:[%s3429] sm:$0x1f]
        %v3432 = vsel %vm3347, %v3430, 0
        %3434 = vmatprep.subr.mxu0 0.0
        %3435 = vmatpush1.msra.mxu0 0.0
        %3436 = vmatprep.subr.mxu0 0.0
        %3437 = vmatpush1.msra.mxu0 0.0
        %3438 = vmatprep.subr.mxu0 0.0
        %3439 = vmatpush1.msra.mxu0 0.0
        %3440 = vmatprep.subr.mxu0 0.0
        %3441 = vmatpush1.msra.mxu0 0.0
        %3442 = vmatprep.subr.mxu0 0.0
        %3443 = vmatpush1.msra.mxu0 0.0
        %3444 = vmatprep.subr.mxu0 0.0
        %3445 = vmatpush1.msra.mxu0 0.0
        %3446 = vmatprep.subr.mxu0 0.0
        %3447 = vmatpush1.msra.mxu0 0.0
        %3448 = vmatprep.subr.mxu0 0.0
        %3449 = vmatpush1.msra.mxu0 0.0
        %3450 = vmatprep.subr.mxu0 0.0
        %3451 = vmatpush1.msra.mxu0 0.0
        %3452 = vmatprep.subr.mxu0 0.0
        %3453 = vmatpush1.msra.mxu0 0.0
        %3454 = vmatprep.subr.mxu0 0.0
        %3455 = vmatpush1.msra.mxu0 0.0
        %3456 = vmatprep.subr.mxu0 0.0
        %3457 = vmatpush1.msra.mxu0 0.0
        %3458 = vmatprep.subr.mxu0 0.0
        %3459 = vmatpush1.msra.mxu0 0.0
        %3460 = vmatprep.subr.mxu0 0.0
        %3461 = vmatpush1.msra.mxu0 0.0
        %3462 = vmatprep.subr.mxu0 %v3356
        %3463 = vmatpush1.msra.mxu0 %v3353
        %3464 = vmatprep.subr.mxu0 %v3343
        %3465 = vmatpush1.msra.mxu0 %v3342
        %3466 = vmatprep.subr.mxu0 0.0
        %3467 = vmatpush2.msra.mxu0 0.0
        %3468 = vmatprep.subr.mxu0 0.0
        %3469 = vmatpush2.msra.mxu0 0.0
        %3470 = vmatprep.subr.mxu0 0.0
        %3471 = vmatpush2.msra.mxu0 0.0
        %3472 = vmatprep.subr.mxu0 0.0
        %3473 = vmatpush2.msra.mxu0 0.0
        %3474 = vmatprep.subr.mxu0 0.0
        %3475 = vmatpush2.msra.mxu0 0.0
        %3476 = vmatprep.subr.mxu0 0.0
        %3477 = vmatpush2.msra.mxu0 0.0
        %3478 = vmatprep.subr.mxu0 0.0
        %3479 = vmatpush2.msra.mxu0 0.0
        %3480 = vmatprep.subr.mxu0 0.0
        %3481 = vmatpush2.msra.mxu0 0.0
        %3482 = vmatprep.subr.mxu0 0.0
        %3483 = vmatpush2.msra.mxu0 0.0
        %3484 = vmatprep.subr.mxu0 0.0
        %3485 = vmatpush2.msra.mxu0 0.0
        %3486 = vmatprep.subr.mxu0 0.0
        %3487 = vmatpush2.msra.mxu0 0.0
        %3488 = vmatprep.subr.mxu0 0.0
        %3489 = vmatpush2.msra.mxu0 0.0
        %3490 = vmatprep.subr.mxu0 0.0
        %3491 = vmatpush2.msra.mxu0 0.0
        %3492 = vmatprep.subr.mxu0 0.0
        %3493 = vmatpush2.msra.mxu0 0.0
        %3494 = vmatprep.subr.mxu0 0.0
        %3495 = vmatpush2.msra.mxu0 0.0
        %3496 = vmatprep.subr.mxu0 0.0
        %3497 = vmatpush2.msra.mxu0 0.0
        %3498 = vmatprep.mubr.f32.mxu0 0.0
        %3499 = vmatmul.mubr.f32.gmra.mxu0 %v3432
        %v3500 = vpop.f32.mrf.mxu0
        %v3501 = vadd.f32 0.0, %v3500
        %v3502 = vpop.f32.mrf.mxu0
        %v3503 = vadd.f32 0.0, %v3502
        %3504 = vdwg.mxu0
        %v3505 = vmax.f32 %v3425, %v3501
        %v3506 = vmax.f32 %v3427, %v3503
        %v3507 = vld [vmem:[%s8] sm:$0xff]
        %v3508 = vld [vmem:[%s8 + $0x8] sm:$0xff]
        %v3509 = vld [vmem:[%s8 + $0x10] sm:$0xff]
        %v3510 = vld [vmem:[%s8 + $0x18] sm:$0xff]
        %v3511 = vld [vmem:[%s8 + $0x20] sm:$0xff]
        %v3512 = vld [vmem:[%s8 + $0x28] sm:$0xff]
        %v3513 = vld [vmem:[%s8 + $0x30] sm:$0xff]
        %v3514 = vld [vmem:[%s8 + $0x38] sm:$0xff]
        %v3515 = vld [vmem:[%s8 + $0x40] sm:$0xff]
        %v3516 = vld [vmem:[%s8 + $0x48] sm:$0xff]
        %v3517 = vld [vmem:[%s8 + $0x50] sm:$0xff]
        %v3518 = vld [vmem:[%s8 + $0x58] sm:$0xff]
        %v3519 = vld [vmem:[%s8 + $0x60] sm:$0xff]
        %v3520 = vld [vmem:[%s8 + $0x68] sm:$0xff]
        %v3521 = vld [vmem:[%s8 + $0x70] sm:$0xff]
        %v3522 = vld [vmem:[%s8 + $0x78] sm:$0xff]
        %v3523 = vld [vmem:[%s8 + $0x80] sm:$0xff]
        %v3524 = vld [vmem:[%s8 + $0x88] sm:$0xff]
        %v3525 = vld [vmem:[%s8 + $0x90] sm:$0xff]
        %v3526 = vld [vmem:[%s8 + $0x98] sm:$0xff]
        %v3528 = vsel %vm537, %v3506, 0
        %3530 = vmatprep.subr.mxu0 0.0
        %3531 = vmatpush1.msra.mxu0 %v3522
        %3532 = vmatprep.subr.mxu0 0.0
        %3533 = vmatpush1.msra.mxu0 %v3521
        %3534 = vmatprep.subr.mxu0 0.0
        %3535 = vmatpush1.msra.mxu0 %v3520
        %3536 = vmatprep.subr.mxu0 0.0
        %3537 = vmatpush1.msra.mxu0 %v3519
        %3538 = vmatprep.subr.mxu0 0.0
        %3539 = vmatpush1.msra.mxu0 %v3518
        %3540 = vmatprep.subr.mxu0 0.0
        %3541 = vmatpush1.msra.mxu0 %v3517
        %3542 = vmatprep.subr.mxu0 0.0
        %3543 = vmatpush1.msra.mxu0 %v3516
        %3544 = vmatprep.subr.mxu0 0.0
        %3545 = vmatpush1.msra.mxu0 %v3515
        %3546 = vmatprep.subr.mxu0 0.0
        %3547 = vmatpush1.msra.mxu0 %v3514
        %3548 = vmatprep.subr.mxu0 0.0
        %3549 = vmatpush1.msra.mxu0 %v3513
        %3550 = vmatprep.subr.mxu0 0.0
        %3551 = vmatpush1.msra.mxu0 %v3512
        %3552 = vmatprep.subr.mxu0 0.0
        %3553 = vmatpush1.msra.mxu0 %v3511
        %3554 = vmatprep.subr.mxu0 0.0
        %3555 = vmatpush1.msra.mxu0 %v3510
        %3556 = vmatprep.subr.mxu0 0.0
        %3557 = vmatpush1.msra.mxu0 %v3509
        %3558 = vmatprep.subr.mxu0 0.0
        %3559 = vmatpush1.msra.mxu0 %v3508
        %3560 = vmatprep.subr.mxu0 0.0
        %3561 = vmatpush1.msra.mxu0 %v3507
        %3562 = vmatprep.subr.mxu0 0.0
        %3563 = vmatpush2.msra.mxu0 0.0
        %3564 = vmatprep.subr.mxu0 0.0
        %3565 = vmatpush2.msra.mxu0 0.0
        %3566 = vmatprep.subr.mxu0 0.0
        %3567 = vmatpush2.msra.mxu0 0.0
        %3568 = vmatprep.subr.mxu0 0.0
        %3569 = vmatpush2.msra.mxu0 0.0
        %3570 = vmatprep.subr.mxu0 0.0
        %3571 = vmatpush2.msra.mxu0 0.0
        %3572 = vmatprep.subr.mxu0 0.0
        %3573 = vmatpush2.msra.mxu0 0.0
        %3574 = vmatprep.subr.mxu0 0.0
        %3575 = vmatpush2.msra.mxu0 0.0
        %3576 = vmatprep.subr.mxu0 0.0
        %3577 = vmatpush2.msra.mxu0 0.0
        %3578 = vmatprep.subr.mxu0 0.0
        %3579 = vmatpush2.msra.mxu0 0.0
        %3580 = vmatprep.subr.mxu0 0.0
        %3581 = vmatpush2.msra.mxu0 0.0
        %3582 = vmatprep.subr.mxu0 0.0
        %3583 = vmatpush2.msra.mxu0 0.0
        %3584 = vmatprep.subr.mxu0 0.0
        %3585 = vmatpush2.msra.mxu0 0.0
        %3586 = vmatprep.subr.mxu0 0.0
        %3587 = vmatpush2.msra.mxu0 %v3526
        %3588 = vmatprep.subr.mxu0 0.0
        %3589 = vmatpush2.msra.mxu0 %v3525
        %3590 = vmatprep.subr.mxu0 0.0
        %3591 = vmatpush2.msra.mxu0 %v3524
        %3592 = vmatprep.subr.mxu0 0.0
        %3593 = vmatpush2.msra.mxu0 %v3523
        %3594 = vmatprep.mubr.f32.mxu0 %v3528
        %3595 = vmatmul.mubr.f32.gmra.mxu0 %v3505
        %v3596 = vpop.f32.mrf.mxu0
        %v3597 = vadd.f32 0.0, %v3596
        %v3598 = vpop.f32.mrf.mxu0
        %3599 = vdwg.mxu0
        %s3600 = scalar_lea.vmem %s8, 160
        %v3601 = vld [vmem:[%s3600] sm:$0xff]
        %v3602 = vld [vmem:[%s3600 + $0x8] sm:$0xff]
        %v3603 = vld [vmem:[%s3600 + $0x10] sm:$0xff]
        %v3604 = vld [vmem:[%s3600 + $0x18] sm:$0xff]
        %v3605 = vld [vmem:[%s3600 + $0x20] sm:$0xff]
        %v3606 = vld [vmem:[%s3600 + $0x28] sm:$0xff]
        %v3607 = vld [vmem:[%s3600 + $0x30] sm:$0xff]
        %v3608 = vld [vmem:[%s3600 + $0x38] sm:$0xff]
        %v3609 = vld [vmem:[%s3600 + $0x40] sm:$0xff]
        %v3610 = vld [vmem:[%s3600 + $0x48] sm:$0xff]
        %v3611 = vld [vmem:[%s3600 + $0x50] sm:$0xff]
        %v3612 = vld [vmem:[%s3600 + $0x58] sm:$0xff]
        %v3613 = vld [vmem:[%s3600 + $0x60] sm:$0xff]
        %v3614 = vld [vmem:[%s3600 + $0x68] sm:$0xff]
        %v3615 = vld [vmem:[%s3600 + $0x70] sm:$0xff]
        %v3616 = vld [vmem:[%s3600 + $0x78] sm:$0xff]
        %v3617 = vld [vmem:[%s3600 + $0x80] sm:$0xff]
        %v3618 = vld [vmem:[%s3600 + $0x88] sm:$0xff]
        %v3619 = vld [vmem:[%s3600 + $0x90] sm:$0xff]
        %v3620 = vld [vmem:[%s3600 + $0x98] sm:$0xff]
        %3621 = vmatprep.subr.mxu0 0.0
        %3622 = vmatpush1.msra.mxu0 %v3616
        %3623 = vmatprep.subr.mxu0 0.0
        %3624 = vmatpush1.msra.mxu0 %v3615
        %3625 = vmatprep.subr.mxu0 0.0
        %3626 = vmatpush1.msra.mxu0 %v3614
        %3627 = vmatprep.subr.mxu0 0.0
        %3628 = vmatpush1.msra.mxu0 %v3613
        %3629 = vmatprep.subr.mxu0 0.0
        %3630 = vmatpush1.msra.mxu0 %v3612
        %3631 = vmatprep.subr.mxu0 0.0
        %3632 = vmatpush1.msra.mxu0 %v3611
        %3633 = vmatprep.subr.mxu0 0.0
        %3634 = vmatpush1.msra.mxu0 %v3610
        %3635 = vmatprep.subr.mxu0 0.0
        %3636 = vmatpush1.msra.mxu0 %v3609
        %3637 = vmatprep.subr.mxu0 0.0
        %3638 = vmatpush1.msra.mxu0 %v3608
        %3639 = vmatprep.subr.mxu0 0.0
        %3640 = vmatpush1.msra.mxu0 %v3607
        %3641 = vmatprep.subr.mxu0 0.0
        %3642 = vmatpush1.msra.mxu0 %v3606
        %3643 = vmatprep.subr.mxu0 0.0
        %3644 = vmatpush1.msra.mxu0 %v3605
        %3645 = vmatprep.subr.mxu0 0.0
        %3646 = vmatpush1.msra.mxu0 %v3604
        %3647 = vmatprep.subr.mxu0 0.0
        %3648 = vmatpush1.msra.mxu0 %v3603
        %3649 = vmatprep.subr.mxu0 0.0
        %3650 = vmatpush1.msra.mxu0 %v3602
        %3651 = vmatprep.subr.mxu0 0.0
        %3652 = vmatpush1.msra.mxu0 %v3601
        %3653 = vmatprep.subr.mxu0 0.0
        %3654 = vmatpush2.msra.mxu0 0.0
        %3655 = vmatprep.subr.mxu0 0.0
        %3656 = vmatpush2.msra.mxu0 0.0
        %3657 = vmatprep.subr.mxu0 0.0
        %3658 = vmatpush2.msra.mxu0 0.0
        %3659 = vmatprep.subr.mxu0 0.0
        %3660 = vmatpush2.msra.mxu0 0.0
        %3661 = vmatprep.subr.mxu0 0.0
        %3662 = vmatpush2.msra.mxu0 0.0
        %3663 = vmatprep.subr.mxu0 0.0
        %3664 = vmatpush2.msra.mxu0 0.0
        %3665 = vmatprep.subr.mxu0 0.0
        %3666 = vmatpush2.msra.mxu0 0.0
        %3667 = vmatprep.subr.mxu0 0.0
        %3668 = vmatpush2.msra.mxu0 0.0
        %3669 = vmatprep.subr.mxu0 0.0
        %3670 = vmatpush2.msra.mxu0 0.0
        %3671 = vmatprep.subr.mxu0 0.0
        %3672 = vmatpush2.msra.mxu0 0.0
        %3673 = vmatprep.subr.mxu0 0.0
        %3674 = vmatpush2.msra.mxu0 0.0
        %3675 = vmatprep.subr.mxu0 0.0
        %3676 = vmatpush2.msra.mxu0 0.0
        %3677 = vmatprep.subr.mxu0 0.0
        %3678 = vmatpush2.msra.mxu0 %v3620
        %3679 = vmatprep.subr.mxu0 0.0
        %3680 = vmatpush2.msra.mxu0 %v3619
        %3681 = vmatprep.subr.mxu0 0.0
        %3682 = vmatpush2.msra.mxu0 %v3618
        %3683 = vmatprep.subr.mxu0 0.0
        %3684 = vmatpush2.msra.mxu0 %v3617
        %3685 = vmatprep.mubr.f32.mxu0 %v3528
        %3686 = vmatmul.mubr.f32.gmra.mxu0 %v3505
        %v3687 = vpop.f32.mrf.mxu0
        %v3688 = vadd.f32 0.0, %v3687
        %v3689 = vpop.f32.mrf.mxu0
        %3690 = vdwg.mxu0
        %v3691 = vmax.f32 %v3597, %v3688
        %vm3692 = vcmask 651264
        %3693 = vst.msk [vmem:[#allocation3] sm:$0x1f] %vm3692, %v3691
        %v3694 = vld [vmem:[#allocation3] sm:$0x1]
        %v3695 = vld [vmem:[%s9] sm:$0xff]
        %v3696 = vld [vmem:[%s9 + $0x8] sm:$0xff]
        %v3697 = vld [vmem:[%s9 + $0x10] sm:$0xff]
        %v3698 = vld [vmem:[%s9 + $0x18] sm:$0xff]
        %v3699 = vld [vmem:[%s9 + $0x20] sm:$0xff]
        %v3700 = vld [vmem:[%s9 + $0x28] sm:$0xff]
        %v3701 = vld [vmem:[%s9 + $0x30] sm:$0xff]
        %v3702 = vld [vmem:[%s9 + $0x38] sm:$0xff]
        %v3703 = vld [vmem:[%s9 + $0x40] sm:$0xff]
        %v3704 = vld [vmem:[%s9 + $0x48] sm:$0xff]
        %v3705 = vld [vmem:[#allocation3 + $0x1] sm:$0x1]
        %s3706 = scalar_lea.vmem %s9, 80
        %v3707 = vld [vmem:[%s3706] sm:$0xff]
        %v3708 = vld [vmem:[%s3706 + $0x8] sm:$0xff]
        %v3709 = vld [vmem:[%s3706 + $0x10] sm:$0xff]
        %v3710 = vld [vmem:[%s3706 + $0x18] sm:$0xff]
        %v3711 = vld [vmem:[%s3706 + $0x20] sm:$0xff]
        %v3712 = vld [vmem:[%s3706 + $0x28] sm:$0xff]
        %v3713 = vld [vmem:[%s3706 + $0x30] sm:$0xff]
        %v3714 = vld [vmem:[%s3706 + $0x38] sm:$0xff]
        %v3715 = vld [vmem:[%s3706 + $0x40] sm:$0xff]
        %v3716 = vld [vmem:[%s3706 + $0x48] sm:$0xff]
        %vm3717 = vcmask 654336
        %v3719 = vsel %vm3717, %v3705, 0
        %3721 = vmatprep.subr.mxu0 0.0
        %3722 = vmatpush1.msra.mxu0 0.0
        %3723 = vmatprep.subr.mxu0 0.0
        %3724 = vmatpush1.msra.mxu0 0.0
        %3725 = vmatprep.subr.mxu0 0.0
        %3726 = vmatpush1.msra.mxu0 0.0
        %3727 = vmatprep.subr.mxu0 0.0
        %3728 = vmatpush1.msra.mxu0 0.0
        %3729 = vmatprep.subr.mxu0 0.0
        %3730 = vmatpush1.msra.mxu0 0.0
        %3731 = vmatprep.subr.mxu0 0.0
        %3732 = vmatpush1.msra.mxu0 0.0
        %3733 = vmatprep.subr.mxu0 0.0
        %3734 = vmatpush1.msra.mxu0 %v3716
        %3735 = vmatprep.subr.mxu0 0.0
        %3736 = vmatpush1.msra.mxu0 %v3715
        %3737 = vmatprep.subr.mxu0 0.0
        %3738 = vmatpush1.msra.mxu0 %v3714
        %3739 = vmatprep.subr.mxu0 0.0
        %3740 = vmatpush1.msra.mxu0 %v3713
        %3741 = vmatprep.subr.mxu0 0.0
        %3742 = vmatpush1.msra.mxu0 %v3712
        %3743 = vmatprep.subr.mxu0 0.0
        %3744 = vmatpush1.msra.mxu0 %v3711
        %3745 = vmatprep.subr.mxu0 0.0
        %3746 = vmatpush1.msra.mxu0 %v3710
        %3747 = vmatprep.subr.mxu0 0.0
        %3748 = vmatpush1.msra.mxu0 %v3709
        %3749 = vmatprep.subr.mxu0 0.0
        %3750 = vmatpush1.msra.mxu0 %v3708
        %3751 = vmatprep.subr.mxu0 0.0
        %3752 = vmatpush1.msra.mxu0 %v3707
        %3753 = vmatprep.subr.mxu0 0.0
        %3754 = vmatpush2.msra.mxu0 0.0
        %3755 = vmatprep.subr.mxu0 0.0
        %3756 = vmatpush2.msra.mxu0 0.0
        %3757 = vmatprep.subr.mxu0 0.0
        %3758 = vmatpush2.msra.mxu0 0.0
        %3759 = vmatprep.subr.mxu0 0.0
        %3760 = vmatpush2.msra.mxu0 0.0
        %3761 = vmatprep.subr.mxu0 0.0
        %3762 = vmatpush2.msra.mxu0 0.0
        %3763 = vmatprep.subr.mxu0 0.0
        %3764 = vmatpush2.msra.mxu0 0.0
        %3765 = vmatprep.subr.mxu0 0.0
        %3766 = vmatpush2.msra.mxu0 0.0
        %3767 = vmatprep.subr.mxu0 0.0
        %3768 = vmatpush2.msra.mxu0 0.0
        %3769 = vmatprep.subr.mxu0 0.0
        %3770 = vmatpush2.msra.mxu0 0.0
        %3771 = vmatprep.subr.mxu0 0.0
        %3772 = vmatpush2.msra.mxu0 0.0
        %3773 = vmatprep.subr.mxu0 0.0
        %3774 = vmatpush2.msra.mxu0 0.0
        %3775 = vmatprep.subr.mxu0 0.0
        %3776 = vmatpush2.msra.mxu0 0.0
        %3777 = vmatprep.subr.mxu0 0.0
        %3778 = vmatpush2.msra.mxu0 0.0
        %3779 = vmatprep.subr.mxu0 0.0
        %3780 = vmatpush2.msra.mxu0 0.0
        %3781 = vmatprep.subr.mxu0 0.0
        %3782 = vmatpush2.msra.mxu0 0.0
        %3783 = vmatprep.subr.mxu0 0.0
        %3784 = vmatpush2.msra.mxu0 0.0
        %3785 = vmatprep.mubr.f32.mxu0 0.0
        %3786 = vmatmul.mubr.f32.gmra.mxu0 %v3719
        %v3787 = vpop.f32.mrf.mxu0
        %v3788 = vadd.f32 0.0, %v3787
        %v3789 = vpop.f32.mrf.mxu0
        %3790 = vdwg.mxu0
        %v3792 = vsel %vm3717, %v3694, 0
        %3794 = vmatprep.subr.mxu0 0.0
        %3795 = vmatpush1.msra.mxu0 0.0
        %3796 = vmatprep.subr.mxu0 0.0
        %3797 = vmatpush1.msra.mxu0 0.0
        %3798 = vmatprep.subr.mxu0 0.0
        %3799 = vmatpush1.msra.mxu0 0.0
        %3800 = vmatprep.subr.mxu0 0.0
        %3801 = vmatpush1.msra.mxu0 0.0
        %3802 = vmatprep.subr.mxu0 0.0
        %3803 = vmatpush1.msra.mxu0 0.0
        %3804 = vmatprep.subr.mxu0 0.0
        %3805 = vmatpush1.msra.mxu0 0.0
        %3806 = vmatprep.subr.mxu0 0.0
        %3807 = vmatpush1.msra.mxu0 %v3704
        %3808 = vmatprep.subr.mxu0 0.0
        %3809 = vmatpush1.msra.mxu0 %v3703
        %3810 = vmatprep.subr.mxu0 0.0
        %3811 = vmatpush1.msra.mxu0 %v3702
        %3812 = vmatprep.subr.mxu0 0.0
        %3813 = vmatpush1.msra.mxu0 %v3701
        %3814 = vmatprep.subr.mxu0 0.0
        %3815 = vmatpush1.msra.mxu0 %v3700
        %3816 = vmatprep.subr.mxu0 0.0
        %3817 = vmatpush1.msra.mxu0 %v3699
        %3818 = vmatprep.subr.mxu0 0.0
        %3819 = vmatpush1.msra.mxu0 %v3698
        %3820 = vmatprep.subr.mxu0 0.0
        %3821 = vmatpush1.msra.mxu0 %v3697
        %3822 = vmatprep.subr.mxu0 0.0
        %3823 = vmatpush1.msra.mxu0 %v3696
        %3824 = vmatprep.subr.mxu0 0.0
        %3825 = vmatpush1.msra.mxu0 %v3695
        %3826 = vmatprep.subr.mxu0 0.0
        %3827 = vmatpush2.msra.mxu0 0.0
        %3828 = vmatprep.subr.mxu0 0.0
        %3829 = vmatpush2.msra.mxu0 0.0
        %3830 = vmatprep.subr.mxu0 0.0
        %3831 = vmatpush2.msra.mxu0 0.0
        %3832 = vmatprep.subr.mxu0 0.0
        %3833 = vmatpush2.msra.mxu0 0.0
        %3834 = vmatprep.subr.mxu0 0.0
        %3835 = vmatpush2.msra.mxu0 0.0
        %3836 = vmatprep.subr.mxu0 0.0
        %3837 = vmatpush2.msra.mxu0 0.0
        %3838 = vmatprep.subr.mxu0 0.0
        %3839 = vmatpush2.msra.mxu0 0.0
        %3840 = vmatprep.subr.mxu0 0.0
        %3841 = vmatpush2.msra.mxu0 0.0
        %3842 = vmatprep.subr.mxu0 0.0
        %3843 = vmatpush2.msra.mxu0 0.0
        %3844 = vmatprep.subr.mxu0 0.0
        %3845 = vmatpush2.msra.mxu0 0.0
        %3846 = vmatprep.subr.mxu0 0.0
        %3847 = vmatpush2.msra.mxu0 0.0
        %3848 = vmatprep.subr.mxu0 0.0
        %3849 = vmatpush2.msra.mxu0 0.0
        %3850 = vmatprep.subr.mxu0 0.0
        %3851 = vmatpush2.msra.mxu0 0.0
        %3852 = vmatprep.subr.mxu0 0.0
        %3853 = vmatpush2.msra.mxu0 0.0
        %3854 = vmatprep.subr.mxu0 0.0
        %3855 = vmatpush2.msra.mxu0 0.0
        %3856 = vmatprep.subr.mxu0 0.0
        %3857 = vmatpush2.msra.mxu0 0.0
        %3858 = vmatprep.mubr.f32.mxu0 0.0
        %3859 = vmatmul.mubr.f32.gmra.mxu0 %v3792
        %v3860 = vpop.f32.mrf.mxu0
        %v3861 = vadd.f32 %v3788, %v3860
        %v3862 = vpop.f32.mrf.mxu0
        %3863 = vdwg.mxu0
        %v3864 = vld [vmem:[#allocation3 + $0x2] sm:$0x1]
        %s3865 = scalar_lea.vmem %s9, 160
        %v3866 = vld [vmem:[%s3865] sm:$0xff]
        %v3867 = vld [vmem:[%s3865 + $0x8] sm:$0xff]
        %v3868 = vld [vmem:[%s3865 + $0x10] sm:$0xff]
        %v3869 = vld [vmem:[%s3865 + $0x18] sm:$0xff]
        %v3870 = vld [vmem:[%s3865 + $0x20] sm:$0xff]
        %v3871 = vld [vmem:[%s3865 + $0x28] sm:$0xff]
        %v3872 = vld [vmem:[%s3865 + $0x30] sm:$0xff]
        %v3873 = vld [vmem:[%s3865 + $0x38] sm:$0xff]
        %v3874 = vld [vmem:[%s3865 + $0x40] sm:$0xff]
        %v3875 = vld [vmem:[%s3865 + $0x48] sm:$0xff]
        %v3877 = vsel %vm3717, %v3864, 0
        %3879 = vmatprep.subr.mxu0 0.0
        %3880 = vmatpush1.msra.mxu0 0.0
        %3881 = vmatprep.subr.mxu0 0.0
        %3882 = vmatpush1.msra.mxu0 0.0
        %3883 = vmatprep.subr.mxu0 0.0
        %3884 = vmatpush1.msra.mxu0 0.0
        %3885 = vmatprep.subr.mxu0 0.0
        %3886 = vmatpush1.msra.mxu0 0.0
        %3887 = vmatprep.subr.mxu0 0.0
        %3888 = vmatpush1.msra.mxu0 0.0
        %3889 = vmatprep.subr.mxu0 0.0
        %3890 = vmatpush1.msra.mxu0 0.0
        %3891 = vmatprep.subr.mxu0 0.0
        %3892 = vmatpush1.msra.mxu0 %v3875
        %3893 = vmatprep.subr.mxu0 0.0
        %3894 = vmatpush1.msra.mxu0 %v3874
        %3895 = vmatprep.subr.mxu0 0.0
        %3896 = vmatpush1.msra.mxu0 %v3873
        %3897 = vmatprep.subr.mxu0 0.0
        %3898 = vmatpush1.msra.mxu0 %v3872
        %3899 = vmatprep.subr.mxu0 0.0
        %3900 = vmatpush1.msra.mxu0 %v3871
        %3901 = vmatprep.subr.mxu0 0.0
        %3902 = vmatpush1.msra.mxu0 %v3870
        %3903 = vmatprep.subr.mxu0 0.0
        %3904 = vmatpush1.msra.mxu0 %v3869
        %3905 = vmatprep.subr.mxu0 0.0
        %3906 = vmatpush1.msra.mxu0 %v3868
        %3907 = vmatprep.subr.mxu0 0.0
        %3908 = vmatpush1.msra.mxu0 %v3867
        %3909 = vmatprep.subr.mxu0 0.0
        %3910 = vmatpush1.msra.mxu0 %v3866
        %3911 = vmatprep.subr.mxu0 0.0
        %3912 = vmatpush2.msra.mxu0 0.0
        %3913 = vmatprep.subr.mxu0 0.0
        %3914 = vmatpush2.msra.mxu0 0.0
        %3915 = vmatprep.subr.mxu0 0.0
        %3916 = vmatpush2.msra.mxu0 0.0
        %3917 = vmatprep.subr.mxu0 0.0
        %3918 = vmatpush2.msra.mxu0 0.0
        %3919 = vmatprep.subr.mxu0 0.0
        %3920 = vmatpush2.msra.mxu0 0.0
        %3921 = vmatprep.subr.mxu0 0.0
        %3922 = vmatpush2.msra.mxu0 0.0
        %3923 = vmatprep.subr.mxu0 0.0
        %3924 = vmatpush2.msra.mxu0 0.0
        %3925 = vmatprep.subr.mxu0 0.0
        %3926 = vmatpush2.msra.mxu0 0.0
        %3927 = vmatprep.subr.mxu0 0.0
        %3928 = vmatpush2.msra.mxu0 0.0
        %3929 = vmatprep.subr.mxu0 0.0
        %3930 = vmatpush2.msra.mxu0 0.0
        %3931 = vmatprep.subr.mxu0 0.0
        %3932 = vmatpush2.msra.mxu0 0.0
        %3933 = vmatprep.subr.mxu0 0.0
        %3934 = vmatpush2.msra.mxu0 0.0
        %3935 = vmatprep.subr.mxu0 0.0
        %3936 = vmatpush2.msra.mxu0 0.0
        %3937 = vmatprep.subr.mxu0 0.0
        %3938 = vmatpush2.msra.mxu0 0.0
        %3939 = vmatprep.subr.mxu0 0.0
        %3940 = vmatpush2.msra.mxu0 0.0
        %3941 = vmatprep.subr.mxu0 0.0
        %3942 = vmatpush2.msra.mxu0 0.0
        %3943 = vmatprep.mubr.f32.mxu0 0.0
        %3944 = vmatmul.mubr.f32.gmra.mxu0 %v3877
        %v3945 = vpop.f32.mrf.mxu0
        %v3946 = vadd.f32 0.0, %v3945
        %v3947 = vpop.f32.mrf.mxu0
        %3948 = vdwg.mxu0
        %v3949 = vadd.f32 %v3861, %v3946
        %v3950 = vld [vmem:[#allocation3 + $0x3] sm:$0x1]
        %s3951 = scalar_lea.vmem %s9, 240
        %v3952 = vld [vmem:[%s3951] sm:$0xff]
        %v3953 = vld [vmem:[%s3951 + $0x8] sm:$0xff]
        %v3954 = vld [vmem:[%s3951 + $0x10] sm:$0xff]
        %v3955 = vld [vmem:[%s3951 + $0x18] sm:$0xff]
        %v3956 = vld [vmem:[%s3951 + $0x20] sm:$0xff]
        %v3957 = vld [vmem:[%s3951 + $0x28] sm:$0xff]
        %v3958 = vld [vmem:[%s3951 + $0x30] sm:$0xff]
        %v3959 = vld [vmem:[%s3951 + $0x38] sm:$0xff]
        %v3960 = vld [vmem:[%s3951 + $0x40] sm:$0xff]
        %v3961 = vld [vmem:[%s3951 + $0x48] sm:$0xff]
        %v3963 = vsel %vm3717, %v3950, 0
        %3965 = vmatprep.subr.mxu0 0.0
        %3966 = vmatpush1.msra.mxu0 0.0
        %3967 = vmatprep.subr.mxu0 0.0
        %3968 = vmatpush1.msra.mxu0 0.0
        %3969 = vmatprep.subr.mxu0 0.0
        %3970 = vmatpush1.msra.mxu0 0.0
        %3971 = vmatprep.subr.mxu0 0.0
        %3972 = vmatpush1.msra.mxu0 0.0
        %3973 = vmatprep.subr.mxu0 0.0
        %3974 = vmatpush1.msra.mxu0 0.0
        %3975 = vmatprep.subr.mxu0 0.0
        %3976 = vmatpush1.msra.mxu0 0.0
        %3977 = vmatprep.subr.mxu0 0.0
        %3978 = vmatpush1.msra.mxu0 %v3961
        %3979 = vmatprep.subr.mxu0 0.0
        %3980 = vmatpush1.msra.mxu0 %v3960
        %3981 = vmatprep.subr.mxu0 0.0
        %3982 = vmatpush1.msra.mxu0 %v3959
        %3983 = vmatprep.subr.mxu0 0.0
        %3984 = vmatpush1.msra.mxu0 %v3958
        %3985 = vmatprep.subr.mxu0 0.0
        %3986 = vmatpush1.msra.mxu0 %v3957
        %3987 = vmatprep.subr.mxu0 0.0
        %3988 = vmatpush1.msra.mxu0 %v3956
        %3989 = vmatprep.subr.mxu0 0.0
        %3990 = vmatpush1.msra.mxu0 %v3955
        %3991 = vmatprep.subr.mxu0 0.0
        %3992 = vmatpush1.msra.mxu0 %v3954
        %3993 = vmatprep.subr.mxu0 0.0
        %3994 = vmatpush1.msra.mxu0 %v3953
        %3995 = vmatprep.subr.mxu0 0.0
        %3996 = vmatpush1.msra.mxu0 %v3952
        %3997 = vmatprep.subr.mxu0 0.0
        %3998 = vmatpush2.msra.mxu0 0.0
        %3999 = vmatprep.subr.mxu0 0.0
        %4000 = vmatpush2.msra.mxu0 0.0
        %4001 = vmatprep.subr.mxu0 0.0
        %4002 = vmatpush2.msra.mxu0 0.0
        %4003 = vmatprep.subr.mxu0 0.0
        %4004 = vmatpush2.msra.mxu0 0.0
        %4005 = vmatprep.subr.mxu0 0.0
        %4006 = vmatpush2.msra.mxu0 0.0
        %4007 = vmatprep.subr.mxu0 0.0
        %4008 = vmatpush2.msra.mxu0 0.0
        %4009 = vmatprep.subr.mxu0 0.0
        %4010 = vmatpush2.msra.mxu0 0.0
        %4011 = vmatprep.subr.mxu0 0.0
        %4012 = vmatpush2.msra.mxu0 0.0
        %4013 = vmatprep.subr.mxu0 0.0
        %4014 = vmatpush2.msra.mxu0 0.0
        %4015 = vmatprep.subr.mxu0 0.0
        %4016 = vmatpush2.msra.mxu0 0.0
        %4017 = vmatprep.subr.mxu0 0.0
        %4018 = vmatpush2.msra.mxu0 0.0
        %4019 = vmatprep.subr.mxu0 0.0
        %4020 = vmatpush2.msra.mxu0 0.0
        %4021 = vmatprep.subr.mxu0 0.0
        %4022 = vmatpush2.msra.mxu0 0.0
        %4023 = vmatprep.subr.mxu0 0.0
        %4024 = vmatpush2.msra.mxu0 0.0
        %4025 = vmatprep.subr.mxu0 0.0
        %4026 = vmatpush2.msra.mxu0 0.0
        %4027 = vmatprep.subr.mxu0 0.0
        %4028 = vmatpush2.msra.mxu0 0.0
        %4029 = vmatprep.mubr.f32.mxu0 0.0
        %4030 = vmatmul.mubr.f32.gmra.mxu0 %v3963
        %v4031 = vpop.f32.mrf.mxu0
        %v4032 = vadd.f32 0.0, %v4031
        %v4033 = vpop.f32.mrf.mxu0
        %4034 = vdwg.mxu0
        %v4035 = vadd.f32 %v3949, %v4032
        %v4036 = vld [vmem:[#allocation3 + $0x4] sm:$0x1]
        %s4037 = scalar_lea.vmem %s9, 320
        %v4038 = vld [vmem:[%s4037] sm:$0xff]
        %v4039 = vld [vmem:[%s4037 + $0x8] sm:$0xff]
        %v4040 = vld [vmem:[%s4037 + $0x10] sm:$0xff]
        %v4041 = vld [vmem:[%s4037 + $0x18] sm:$0xff]
        %v4042 = vld [vmem:[%s4037 + $0x20] sm:$0xff]
        %v4043 = vld [vmem:[%s4037 + $0x28] sm:$0xff]
        %v4044 = vld [vmem:[%s4037 + $0x30] sm:$0xff]
        %v4045 = vld [vmem:[%s4037 + $0x38] sm:$0xff]
        %v4046 = vld [vmem:[%s4037 + $0x40] sm:$0xff]
        %v4047 = vld [vmem:[%s4037 + $0x48] sm:$0xff]
        %v4049 = vsel %vm3717, %v4036, 0
        %4051 = vmatprep.subr.mxu0 0.0
        %4052 = vmatpush1.msra.mxu0 0.0
        %4053 = vmatprep.subr.mxu0 0.0
        %4054 = vmatpush1.msra.mxu0 0.0
        %4055 = vmatprep.subr.mxu0 0.0
        %4056 = vmatpush1.msra.mxu0 0.0
        %4057 = vmatprep.subr.mxu0 0.0
        %4058 = vmatpush1.msra.mxu0 0.0
        %4059 = vmatprep.subr.mxu0 0.0
        %4060 = vmatpush1.msra.mxu0 0.0
        %4061 = vmatprep.subr.mxu0 0.0
        %4062 = vmatpush1.msra.mxu0 0.0
        %4063 = vmatprep.subr.mxu0 0.0
        %4064 = vmatpush1.msra.mxu0 %v4047
        %4065 = vmatprep.subr.mxu0 0.0
        %4066 = vmatpush1.msra.mxu0 %v4046
        %4067 = vmatprep.subr.mxu0 0.0
        %4068 = vmatpush1.msra.mxu0 %v4045
        %4069 = vmatprep.subr.mxu0 0.0
        %4070 = vmatpush1.msra.mxu0 %v4044
        %4071 = vmatprep.subr.mxu0 0.0
        %4072 = vmatpush1.msra.mxu0 %v4043
        %4073 = vmatprep.subr.mxu0 0.0
        %4074 = vmatpush1.msra.mxu0 %v4042
        %4075 = vmatprep.subr.mxu0 0.0
        %4076 = vmatpush1.msra.mxu0 %v4041
        %4077 = vmatprep.subr.mxu0 0.0
        %4078 = vmatpush1.msra.mxu0 %v4040
        %4079 = vmatprep.subr.mxu0 0.0
        %4080 = vmatpush1.msra.mxu0 %v4039
        %4081 = vmatprep.subr.mxu0 0.0
        %4082 = vmatpush1.msra.mxu0 %v4038
        %4083 = vmatprep.subr.mxu0 0.0
        %4084 = vmatpush2.msra.mxu0 0.0
        %4085 = vmatprep.subr.mxu0 0.0
        %4086 = vmatpush2.msra.mxu0 0.0
        %4087 = vmatprep.subr.mxu0 0.0
        %4088 = vmatpush2.msra.mxu0 0.0
        %4089 = vmatprep.subr.mxu0 0.0
        %4090 = vmatpush2.msra.mxu0 0.0
        %4091 = vmatprep.subr.mxu0 0.0
        %4092 = vmatpush2.msra.mxu0 0.0
        %4093 = vmatprep.subr.mxu0 0.0
        %4094 = vmatpush2.msra.mxu0 0.0
        %4095 = vmatprep.subr.mxu0 0.0
        %4096 = vmatpush2.msra.mxu0 0.0
        %4097 = vmatprep.subr.mxu0 0.0
        %4098 = vmatpush2.msra.mxu0 0.0
        %4099 = vmatprep.subr.mxu0 0.0
        %4100 = vmatpush2.msra.mxu0 0.0
        %4101 = vmatprep.subr.mxu0 0.0
        %4102 = vmatpush2.msra.mxu0 0.0
        %4103 = vmatprep.subr.mxu0 0.0
        %4104 = vmatpush2.msra.mxu0 0.0
        %4105 = vmatprep.subr.mxu0 0.0
        %4106 = vmatpush2.msra.mxu0 0.0
        %4107 = vmatprep.subr.mxu0 0.0
        %4108 = vmatpush2.msra.mxu0 0.0
        %4109 = vmatprep.subr.mxu0 0.0
        %4110 = vmatpush2.msra.mxu0 0.0
        %4111 = vmatprep.subr.mxu0 0.0
        %4112 = vmatpush2.msra.mxu0 0.0
        %4113 = vmatprep.subr.mxu0 0.0
        %4114 = vmatpush2.msra.mxu0 0.0
        %4115 = vmatprep.mubr.f32.mxu0 0.0
        %4116 = vmatmul.mubr.f32.gmra.mxu0 %v4049
        %v4117 = vpop.f32.mrf.mxu0
        %v4118 = vadd.f32 0.0, %v4117
        %v4119 = vpop.f32.mrf.mxu0
        %4120 = vdwg.mxu0
        %v4121 = vadd.f32 %v4035, %v4118
        %v4122 = vld [vmem:[%s10] sm:$0x1]
        %v4123 = vadd.f32 %v4121, %v4122
        %v4124 = vmax.f32 %v4123, 0.0
        %v4125 = vld [vmem:[%s11] sm:$0xff]
        %v4126 = vld [vmem:[%s11 + $0x8] sm:$0xff]
        %v4127 = vld [vmem:[%s11 + $0x10] sm:$0xff]
        %v4128 = vld [vmem:[%s11 + $0x18] sm:$0xff]
        %v4129 = vld [vmem:[%s11 + $0x20] sm:$0xff]
        %v4130 = vld [vmem:[%s11 + $0x28] sm:$0xff]
        %v4131 = vld [vmem:[%s11 + $0x30] sm:$0xff]
        %v4132 = vld [vmem:[%s11 + $0x38] sm:$0xff]
        %v4133 = vld [vmem:[%s11 + $0x40] sm:$0xff]
        %v4134 = vld [vmem:[%s11 + $0x48] sm:$0xff]
        %v4135 = vld [vmem:[%s11 + $0x50] sm:$0xff]
        %v4136 = vld [vmem:[%s11 + $0x58] sm:$0xff]
        %v4137 = vld [vmem:[%s11 + $0x60] sm:$0xff]
        %v4138 = vld [vmem:[%s11 + $0x68] sm:$0xff]
        %v4139 = vld [vmem:[%s11 + $0x70] sm:$0xff]
        %v4140 = vld [vmem:[%s12] sm:$0x1]
        %vm4141 = vcmask 982016
        %v4143 = vsel %vm4141, %v4124, 0
        %4145 = vmatprep.subr.mxu0 0.0
        %4146 = vmatpush1.msra.mxu0 0.0
        %4147 = vmatprep.subr.mxu0 0.0
        %4148 = vmatpush1.msra.mxu0 %v4139
        %4149 = vmatprep.subr.mxu0 0.0
        %4150 = vmatpush1.msra.mxu0 %v4138
        %4151 = vmatprep.subr.mxu0 0.0
        %4152 = vmatpush1.msra.mxu0 %v4137
        %4153 = vmatprep.subr.mxu0 0.0
        %4154 = vmatpush1.msra.mxu0 %v4136
        %4155 = vmatprep.subr.mxu0 0.0
        %4156 = vmatpush1.msra.mxu0 %v4135
        %4157 = vmatprep.subr.mxu0 0.0
        %4158 = vmatpush1.msra.mxu0 %v4134
        %4159 = vmatprep.subr.mxu0 0.0
        %4160 = vmatpush1.msra.mxu0 %v4133
        %4161 = vmatprep.subr.mxu0 0.0
        %4162 = vmatpush1.msra.mxu0 %v4132
        %4163 = vmatprep.subr.mxu0 0.0
        %4164 = vmatpush1.msra.mxu0 %v4131
        %4165 = vmatprep.subr.mxu0 0.0
        %4166 = vmatpush1.msra.mxu0 %v4130
        %4167 = vmatprep.subr.mxu0 0.0
        %4168 = vmatpush1.msra.mxu0 %v4129
        %4169 = vmatprep.subr.mxu0 0.0
        %4170 = vmatpush1.msra.mxu0 %v4128
        %4171 = vmatprep.subr.mxu0 0.0
        %4172 = vmatpush1.msra.mxu0 %v4127
        %4173 = vmatprep.subr.mxu0 0.0
        %4174 = vmatpush1.msra.mxu0 %v4126
        %4175 = vmatprep.subr.mxu0 0.0
        %4176 = vmatpush1.msra.mxu0 %v4125
        %4177 = vmatprep.subr.mxu0 0.0
        %4178 = vmatpush2.msra.mxu0 0.0
        %4179 = vmatprep.subr.mxu0 0.0
        %4180 = vmatpush2.msra.mxu0 0.0
        %4181 = vmatprep.subr.mxu0 0.0
        %4182 = vmatpush2.msra.mxu0 0.0
        %4183 = vmatprep.subr.mxu0 0.0
        %4184 = vmatpush2.msra.mxu0 0.0
        %4185 = vmatprep.subr.mxu0 0.0
        %4186 = vmatpush2.msra.mxu0 0.0
        %4187 = vmatprep.subr.mxu0 0.0
        %4188 = vmatpush2.msra.mxu0 0.0
        %4189 = vmatprep.subr.mxu0 0.0
        %4190 = vmatpush2.msra.mxu0 0.0
        %4191 = vmatprep.subr.mxu0 0.0
        %4192 = vmatpush2.msra.mxu0 0.0
        %4193 = vmatprep.subr.mxu0 0.0
        %4194 = vmatpush2.msra.mxu0 0.0
        %4195 = vmatprep.subr.mxu0 0.0
        %4196 = vmatpush2.msra.mxu0 0.0
        %4197 = vmatprep.subr.mxu0 0.0
        %4198 = vmatpush2.msra.mxu0 0.0
        %4199 = vmatprep.subr.mxu0 0.0
        %4200 = vmatpush2.msra.mxu0 0.0
        %4201 = vmatprep.subr.mxu0 0.0
        %4202 = vmatpush2.msra.mxu0 0.0
        %4203 = vmatprep.subr.mxu0 0.0
        %4204 = vmatpush2.msra.mxu0 0.0
        %4205 = vmatprep.subr.mxu0 0.0
        %4206 = vmatpush2.msra.mxu0 0.0
        %4207 = vmatprep.subr.mxu0 0.0
        %4208 = vmatpush2.msra.mxu0 0.0
        %4209 = vmatprep.mubr.f32.mxu0 0.0
        %4210 = vmatmul.mubr.f32.gmra.mxu0 %v4143
        %v4211 = vpop.f32.mrf.mxu0
        %v4212 = vadd.f32 %v4140, %v4211
        %v4213 = vpop.f32.mrf.mxu0
        %4214 = vdwg.mxu0
        %v4215 = vmax.f32 %v4212, 0.0
        %v4216 = vld [vmem:[%s13] sm:$0xff]
        %v4217 = vld [vmem:[%s13 + $0x8] sm:$0xff]
        %v4218 = vld [vmem:[%s13 + $0x10] sm:$0xff]
        %v4219 = vld [vmem:[%s13 + $0x18] sm:$0xff]
        %v4220 = vld [vmem:[%s13 + $0x20] sm:$0xff]
        %v4221 = vld [vmem:[%s13 + $0x28] sm:$0xff]
        %v4222 = vld [vmem:[%s13 + $0x30] sm:$0xff]
        %v4223 = vld [vmem:[%s13 + $0x38] sm:$0xff]
        %v4224 = vld [vmem:[%s13 + $0x40] sm:$0xff]
        %v4225 = vld [vmem:[%s13 + $0x48] sm:$0xff]
        %v4226 = vld [vmem:[%s13 + $0x50] sm:$0xf]
        %v4227 = vld [vmem:[%s14] sm:$0x1]
        %v4229 = vsel %vm2741, %v4215, 0
        %v4232 = vsel %vm2365, %v4226, 0
        %4234 = vmatprep.subr.mxu0 0.0
        %4235 = vmatpush1.msra.mxu0 0.0
        %4236 = vmatprep.subr.mxu0 0.0
        %4237 = vmatpush1.msra.mxu0 0.0
        %4238 = vmatprep.subr.mxu0 0.0
        %4239 = vmatpush1.msra.mxu0 0.0
        %4240 = vmatprep.subr.mxu0 0.0
        %4241 = vmatpush1.msra.mxu0 0.0
        %4242 = vmatprep.subr.mxu0 0.0
        %4243 = vmatpush1.msra.mxu0 0.0
        %4244 = vmatprep.subr.mxu0 0.0
        %4245 = vmatpush1.msra.mxu0 %v4232
        %4246 = vmatprep.subr.mxu0 0.0
        %4247 = vmatpush1.msra.mxu0 %v4225
        %4248 = vmatprep.subr.mxu0 0.0
        %4249 = vmatpush1.msra.mxu0 %v4224
        %4250 = vmatprep.subr.mxu0 0.0
        %4251 = vmatpush1.msra.mxu0 %v4223
        %4252 = vmatprep.subr.mxu0 0.0
        %4253 = vmatpush1.msra.mxu0 %v4222
        %4254 = vmatprep.subr.mxu0 0.0
        %4255 = vmatpush1.msra.mxu0 %v4221
        %4256 = vmatprep.subr.mxu0 0.0
        %4257 = vmatpush1.msra.mxu0 %v4220
        %4258 = vmatprep.subr.mxu0 0.0
        %4259 = vmatpush1.msra.mxu0 %v4219
        %4260 = vmatprep.subr.mxu0 0.0
        %4261 = vmatpush1.msra.mxu0 %v4218
        %4262 = vmatprep.subr.mxu0 0.0
        %4263 = vmatpush1.msra.mxu0 %v4217
        %4264 = vmatprep.subr.mxu0 0.0
        %4265 = vmatpush1.msra.mxu0 %v4216
        %4266 = vmatprep.subr.mxu0 0.0
        %4267 = vmatpush2.msra.mxu0 0.0
        %4268 = vmatprep.subr.mxu0 0.0
        %4269 = vmatpush2.msra.mxu0 0.0
        %4270 = vmatprep.subr.mxu0 0.0
        %4271 = vmatpush2.msra.mxu0 0.0
        %4272 = vmatprep.subr.mxu0 0.0
        %4273 = vmatpush2.msra.mxu0 0.0
        %4274 = vmatprep.subr.mxu0 0.0
        %4275 = vmatpush2.msra.mxu0 0.0
        %4276 = vmatprep.subr.mxu0 0.0
        %4277 = vmatpush2.msra.mxu0 0.0
        %4278 = vmatprep.subr.mxu0 0.0
        %4279 = vmatpush2.msra.mxu0 0.0
        %4280 = vmatprep.subr.mxu0 0.0
        %4281 = vmatpush2.msra.mxu0 0.0
        %4282 = vmatprep.subr.mxu0 0.0
        %4283 = vmatpush2.msra.mxu0 0.0
        %4284 = vmatprep.subr.mxu0 0.0
        %4285 = vmatpush2.msra.mxu0 0.0
        %4286 = vmatprep.subr.mxu0 0.0
        %4287 = vmatpush2.msra.mxu0 0.0
        %4288 = vmatprep.subr.mxu0 0.0
        %4289 = vmatpush2.msra.mxu0 0.0
        %4290 = vmatprep.subr.mxu0 0.0
        %4291 = vmatpush2.msra.mxu0 0.0
        %4292 = vmatprep.subr.mxu0 0.0
        %4293 = vmatpush2.msra.mxu0 0.0
        %4294 = vmatprep.subr.mxu0 0.0
        %4295 = vmatpush2.msra.mxu0 0.0
        %4296 = vmatprep.subr.mxu0 0.0
        %4297 = vmatpush2.msra.mxu0 0.0
        %4298 = vmatprep.mubr.f32.mxu0 0.0
        %4299 = vmatmul.mubr.f32.gmra.mxu0 %v4229
        %v4300 = vpop.f32.mrf.mxu0
        %v4301 = vadd.f32 %v4227, %v4300
        %v4302 = vpop.f32.mrf.mxu0
        %4303 = vdwg.mxu0
        %vm4304 = vcmask 73728
        %4305 = vst.msk [vmem:[%s511] sm:$0x1] %vm4304, %v4301
        %s4306 = sand.u32 %s360, 1
        %s4307 = scalar_lea.sflag [#allocation6], %s4306
        %s4308 = sand.u32 %s360, 1
        %s4309 = scalar_lea.vmem [#allocation7], %s4308
        // Predicated region
        $region85: #{convnet_forward.1} parent=79 // pred_check
          %p4310 = pneg %p370
        $region86: #{convnet_forward.1} parent=79 // pred_check_branch
          %4312 = sbr.rel (%p4310) target = $region88
        $region87: #{convnet_forward.1} parent=79 // pred_region
          %s4314 = ssub.s32 16, 16
          %4315 = vsyncadd %s4307, %s4314
          %s4316 = smul.addr %s32, 16
          %s4317 = scalar_lea.hbm %s15, %s4316
          %s4319 = sshll.u32 %s4309, 4
          %s4320 = int_to_ptr.vmem [resolvable:$true] %s4319
          %4322 = dma.vmem_to_hbm [thread:$0]  %s4320, 16, %s4317, %s4307
        $region88: #{convnet_forward.1} parent=79 // pred_fallthru
          _
      $region80: #{convnet_forward.1} parent=5 // pred_fallthru
        _
      %p4323 = scmp.le.s32.totalorder 2, %s27
      // Predicated region
      $region89: #{convnet_forward.1} parent=5 // pred_check
        %p4324 = pneg %p4323
      $region90: #{convnet_forward.1} parent=5 // pred_check_branch
        %4326 = sbr.rel (%p4324) target = $region92
      $region91: #{convnet_forward.1} parent=5 // pred_region
        %s4327 = ssub.s32 %s27, 2
        // Predicated region
        $region93: #{convnet_forward.1} parent=91 // pred_check
          %p4328 = pneg %p376
        $region94: #{convnet_forward.1} parent=91 // pred_check_branch
          %4330 = sbr.rel (%p4328) target = $region96
        $region95: #{convnet_forward.1} parent=91 // pred_region
          %s4331 = sand.u32 %s361, 1
          %s4332 = scalar_lea.sflag [#allocation6], %s4331
          %s4333 = sand.u32 %s361, 1
          %s4334 = scalar_lea.vmem [#allocation7], %s4333
          %4335 = dma.done %s4332, 16
        $region96: #{convnet_forward.1} parent=91 // pred_fallthru
          _
      $region92: #{convnet_forward.1} parent=5 // pred_fallthru
        _
    $region6: #{convnet_forward.1} parent=1 // loop_footer
      %s31 = sadd.s32 1, %s27
    $region7: #{convnet_forward.1} parent=1 // loop_footer_branch
      %26 = sbr.rel target = $region3
    $region8: #{convnet_forward.1} parent=1 // loop_exit
      _
    %4336 = vsyncpa [#allocation5], 1
    %s4337 = scalar_lea.sflag [#allocation5], 1
    %4338 = vsyncpa %s4337, 1
    %4339 = vsyncpa [#allocation6], 1
    %s4340 = scalar_lea.sflag [#allocation6], 1
    %4341 = vsyncpa %s4340, 1

</llo_original>
